<compile_context>
chip_gen: v7x
topology: tpu7x:2x2x1
jax: 0.10.0
libtpu: 0.0.40
codegen_flags: <defaults>
</compile_context>

<pallas_src>
import functools

import jax
import jax.numpy as jnp
from jax import lax
from jax.experimental import pallas as pl
from jax.experimental.pallas import tpu as pltpu

# ----------------------------- model hyper-params ---------------------------
VOCAB_SIZE = 128
BLOCK_SIZE = 8          # max sequence length
N_EMBD     = 32
N_HEAD     = 4
N_LAYER    = 2
HEAD_SIZE  = N_EMBD // N_HEAD
B          = 2
T          = BLOCK_SIZE
LN_EPS     = 1e-5
MASK_MIN   = -1e30      # f32-safe additive mask constant

# --------------------------- slab row-layout constants ----------------------
C   = N_EMBD
H4  = 4 * N_EMBD        # == 128 (also the lane width of slab128)

# slab32 (width C=32): [tok_emb (V) | pos (N) | per-layer block (166) x L | lnf_w | lnf_b]
PER_L32   = 6 + 5 * C           # 166 rows per layer
OFF_LN1W  = 0
OFF_LN1B  = 1
OFF_WO    = 2                   # C rows
OFF_BO    = 2 + C
OFF_LN2W  = 3 + C
OFF_LN2B  = 4 + C
OFF_W2    = 5 + C               # 4C rows
OFF_B2    = 5 + 5 * C

# slab128 (width 4C=128): [per-layer (wqkv_pad C | w1 C | b1 1) x L | wlm C | blm 1]
PER_L128  = 2 * C + 1           # 65 rows per layer


def _layernorm(x, w, b):
    # x: (N, C) f32 ; w, b: (1, C)
    mu  = jnp.mean(x, axis=-1, keepdims=True)
    var = jnp.mean((x - mu) ** 2, axis=-1, keepdims=True)
    return (x - mu) * lax.rsqrt(var + LN_EPS) * w + b


def gpt_forward_kernel(
    idx_ref,        # (N, 1) int32   token ids (N = B*T)
    slab32_ref,     # (R32, 32) f32  tok_emb | pos | per-layer {ln1,wo,bo,ln2,w2,b2} | lnf
    slab128_ref,    # (R128, 128) f32 per-layer {wqkv_pad, w1, b1} | wlm | blm
    mask_ref,       # (H, N, N) f32  additive causal + block-diag-per-batch mask
    out_ref,        # (N, V) f32     logits
    *, batch, seq,
):
    N = batch * seq
    V, Hn, hs, L = VOCAB_SIZE, N_HEAD, HEAD_SIZE, N_LAYER

    # ---- token embedding gather (one-hot matmul on the MXU) ----
    idx = idx_ref[...]                                               # (N, 1) int32
    tok_oh = (idx == lax.broadcasted_iota(jnp.int32, (N, V), 1)
              ).astype(jnp.float32)                                  # (N, V)
    x = jnp.dot(tok_oh, slab32_ref[0:V, :],
                preferred_element_type=jnp.float32)                  # (N, C)
    # pre-broadcast positional slab: just add
    x = x + slab32_ref[V:V + N, :]                                   # (N, C)

    mask = mask_ref[...]                                             # (H, N, N)
    layer_base32 = V + N

    for l in range(L):                         # static unrolled layer loop
        b32 = layer_base32 + l * PER_L32
        ln1w = slab32_ref[b32 + OFF_LN1W:b32 + OFF_LN1W + 1, :]
        ln1b = slab32_ref[b32 + OFF_LN1B:b32 + OFF_LN1B + 1, :]
        wo   = slab32_ref[b32 + OFF_WO:b32 + OFF_WO + C, :]          # (C, C) [in,out]
        bo   = slab32_ref[b32 + OFF_BO:b32 + OFF_BO + 1, :]
        ln2w = slab32_ref[b32 + OFF_LN2W:b32 + OFF_LN2W + 1, :]
        ln2b = slab32_ref[b32 + OFF_LN2B:b32 + OFF_LN2B + 1, :]
        w2   = slab32_ref[b32 + OFF_W2:b32 + OFF_W2 + 4 * C, :]      # (4C, C)
        b2   = slab32_ref[b32 + OFF_B2:b32 + OFF_B2 + 1, :]

        b128 = l * PER_L128
        wqkv = slab128_ref[b128:b128 + C, :]                         # (C, 128) [Q*s|K|V|0]
        w1   = slab128_ref[b128 + C:b128 + 2 * C, :]                 # (C, 4C)
        b1   = slab128_ref[b128 + 2 * C:b128 + 2 * C + 1, :]         # (1, 4C)

        # ---- multi-head causal self-attention (pre-LN) ----
        xl  = _layernorm(x, ln1w, ln1b)
        qkv = jnp.dot(xl, wqkv, preferred_element_type=jnp.float32)  # (N, 128)

        # head-major stacks (H, N, hs); Q already carries the 1/sqrt(hs) scale
        qh = jnp.stack([qkv[:, h * hs:(h + 1) * hs] for h in range(Hn)], axis=0)
        kh = jnp.stack([qkv[:, C + h * hs:C + (h + 1) * hs] for h in range(Hn)], axis=0)
        vh = jnp.stack([qkv[:, 2 * C + h * hs:2 * C + (h + 1) * hs] for h in range(Hn)], axis=0)

        s = jnp.einsum('hqd,hkd->hqk', qh, kh,
                       preferred_element_type=jnp.float32)           # (H, N, N)
        s = s + mask
        # batched, open-coded softmax (reciprocal on the EUP)
        m = jnp.max(s, axis=-1, keepdims=True)
        e = jnp.exp(s - m)
        p = e * pl.reciprocal(jnp.sum(e, axis=-1, keepdims=True), approx=True)

        ctx = jnp.einsum('hqk,hkd->hqd', p, vh,
                         preferred_element_type=jnp.float32)         # (H, N, hs)
        # lane-concat heads once, then a single Wo matmul
        ctx_w = jnp.concatenate([ctx[h] for h in range(Hn)], axis=-1)  # (N, C)
        x = x + jnp.dot(ctx_w, wo, preferred_element_type=jnp.float32) + bo

        # ---- feed-forward (pre-LN), ReLU ----
        xl2 = _layernorm(x, ln2w, ln2b)
        hdn = jnp.dot(xl2, w1, preferred_element_type=jnp.float32) + b1
        hdn = jnp.maximum(hdn, 0.0)
        x = x + jnp.dot(hdn, w2, preferred_element_type=jnp.float32) + b2

    # ---- final LayerNorm + lm_head (lane-dense (N, V=128) output) ----
    fin32 = layer_base32 + L * PER_L32
    lnfw = slab32_ref[fin32:fin32 + 1, :]
    lnfb = slab32_ref[fin32 + 1:fin32 + 2, :]
    lm   = L * PER_L128
    wlm  = slab128_ref[lm:lm + C, :]                                 # (C, V)
    blm  = slab128_ref[lm + C:lm + C + 1, :]                         # (1, V)

    xf = _layernorm(x, lnfw, lnfb)
    logits = jnp.dot(xf, wlm, preferred_element_type=jnp.float32) + blm
    out_ref[...] = logits.astype(out_ref.dtype)


def wml_text_one_forward(index, params):
    """Forward pass. Returns (logits[B,T,V], loss=None) as in the nn.Module."""
    Bq, Tq = index.shape
    N = Bq * Tq
    L, V, Hn = N_LAYER, VOCAB_SIZE, N_HEAD

    idx2d = index.reshape(N, 1).astype(jnp.int32)
    scale = float(HEAD_SIZE) ** -0.5

    # --- pre-transpose ([in,out]) and pack weights at trace time -------------
    woT = jnp.swapaxes(params["wo"], 1, 2)                 # (L, C, C)
    w1T = jnp.swapaxes(params["w1"], 1, 2)                 # (L, C, 4C)
    w2T = jnp.swapaxes(params["w2"], 1, 2)                 # (L, 4C, C)
    wqT = jnp.swapaxes(params["wq"], 1, 2) * scale         # fold 1/sqrt(hs) into Q
    wkT = jnp.swapaxes(params["wk"], 1, 2)
    wvT = jnp.swapaxes(params["wv"], 1, 2)
    wqkv = jnp.concatenate([wqT, wkT, wvT], axis=2)        # (L, C, 3C)
    wqkv_pad = jnp.pad(wqkv, ((0, 0), (0, 0), (0, H4 - 3 * C)))  # (L, C, 128)

    # slab32: everything with lane-width C=32, one contiguous DMA
    pieces32 = [params["tok_emb"],                         # (V, C)
                jnp.tile(params["pos_emb"][:Tq], (Bq, 1))]  # (N, C) pre-broadcast pos
    for l in range(L):
        pieces32 += [params["ln1_w"][l], params["ln1_b"][l],
                     woT[l], params["bo"][l],
                     params["ln2_w"][l], params["ln2_b"][l],
                     w2T[l], params["b2"][l]]
    pieces32 += [params["lnf_w"], params["lnf_b"]]
    slab32 = jnp.concatenate(pieces32, axis=0)             # (V + N + L*166 + 2, C)

    # slab128: everything with lane-width 4C=128, one contiguous DMA
    pieces128 = []
    for l in range(L):
        pieces128 += [wqkv_pad[l], w1T[l], params["b1"][l]]
    pieces128 += [params["wlm"].T, params["blm"]]
    slab128 = jnp.concatenate(pieces128, axis=0)           # (L*65 + C + 1, 128)

    # additive mask: same batch element AND causal, precomputed once
    r = jnp.arange(N)[:, None]
    c = jnp.arange(N)[None, :]
    allowed = (r // Tq == c // Tq) & ((c % Tq) <= (r % Tq))
    mask2d = jnp.where(allowed, 0.0, MASK_MIN).astype(jnp.float32)
    mask = jnp.broadcast_to(mask2d[None], (Hn, N, N))      # (H, N, N)

    kernel = functools.partial(gpt_forward_kernel, batch=Bq, seq=Tq)
    vmem = pl.BlockSpec(memory_space=pltpu.MemorySpace.VMEM)

    # Single invocation (grid=()): whole (B*T, C) batch processed at once,
    # 4 input DMAs total, all weights resident in VMEM.
    logits = pl.pallas_call(
        kernel,
        out_shape=jax.ShapeDtypeStruct((N, V), jnp.float32),
        in_specs=[vmem] * 4,
        out_specs=vmem,
    )(idx2d, slab32, slab128, mask)

    return logits.reshape(Bq, Tq, V), None


def init_params(key):
    """Deterministic init matching WMLTextOneModel._init_weights:
    Linear/Embedding weights ~ N(0, 0.02), Linear biases = 0,
    LayerNorm weight = 1, bias = 0.  Stored PyTorch-style [out, in]."""
    ks = jax.random.split(key, 16)
    n = lambda k, shape: (jax.random.normal(k, shape, jnp.float32) * 0.02)
    L, V = N_LAYER, VOCAB_SIZE
    return {
        "tok_emb": n(ks[0], (V, C)),
        "pos_emb": n(ks[1], (BLOCK_SIZE, C)),
        # attention (per-head key/query/value Linears concatenated into C x C)
        "wq": n(ks[2], (L, C, C)),
        "wk": n(ks[3], (L, C, C)),
        "wv": n(ks[4], (L, C, C)),
        "wo": n(ks[5], (L, C, C)),
        "bo": jnp.zeros((L, 1, C), jnp.float32),
        # layer norms
        "ln1_w": jnp.ones((L, 1, C), jnp.float32),
        "ln1_b": jnp.zeros((L, 1, C), jnp.float32),
        "ln2_w": jnp.ones((L, 1, C), jnp.float32),
        "ln2_b": jnp.zeros((L, 1, C), jnp.float32),
        # feed-forward
        "w1": n(ks[6], (L, H4, C)),
        "b1": jnp.zeros((L, 1, H4), jnp.float32),
        "w2": n(ks[7], (L, C, H4)),
        "b2": jnp.zeros((L, 1, C), jnp.float32),
        # final LN + lm_head
        "lnf_w": jnp.ones((1, C), jnp.float32),
        "lnf_b": jnp.zeros((1, C), jnp.float32),
        "wlm": n(ks[8], (V, C)),
        "blm": jnp.zeros((1, V), jnp.float32),
    }


if __name__ == "__main__":
    key = jax.random.PRNGKey(0)
    pkey, ikey = jax.random.split(key)
    params = init_params(pkey)
    index = jax.random.randint(ikey, (B, T), 0, VOCAB_SIZE, dtype=jnp.int32)

    logits, loss = jax.jit(wml_text_one_forward)(index, params)
    logits = jax.block_until_ready(logits)

    assert logits.shape == (B, T, VOCAB_SIZE), logits.shape
    assert loss is None
    assert bool(jnp.all(jnp.isfinite(logits)))
    print("KERNEL_OK")
</pallas_src>

<mosaic_0001>
module attributes {stable_mosaic.version = 11 : i64} {
  func.func @gpt_forward_kernel(%arg0: memref<16x1xi32, #tpu.memory_space<vmem>>, %arg1: memref<478x32xf32, #tpu.memory_space<vmem>>, %arg2: memref<163x128xf32, #tpu.memory_space<vmem>>, %arg3: memref<4x16x16xf32, #tpu.memory_space<vmem>>, %arg4: memref<16x128xf32, #tpu.memory_space<vmem>>) attributes {dimension_semantics = [], scalar_prefetch = 0 : i64, scratch_operands = 0 : i64, tpu.core_type = #tpu.core_type<tc>} {
    %c0 = arith.constant 0 : index
    %c0_0 = arith.constant 0 : index
    %0 = vector.load %arg0[%c0, %c0_0] : memref<16x1xi32, #tpu.memory_space<vmem>>, vector<16x1xi32>
    %1 = tpu.iota {dimensions = array<i32: 1>} : vector<16x128xi32>
    %2 = vector.broadcast %0 : vector<16x1xi32> to vector<16x128xi32>
    %3 = arith.cmpi eq, %2, %1 : vector<16x128xi32>
    %4 = arith.extui %3 : vector<16x128xi1> to vector<16x128xi32>
    %5 = arith.sitofp %4 : vector<16x128xi32> to vector<16x128xf32>
    %c0_1 = arith.constant 0 : index
    %c0_2 = arith.constant 0 : index
    %6 = vector.load %arg1[%c0_1, %c0_2] : memref<478x32xf32, #tpu.memory_space<vmem>>, vector<128x32xf32>
    %cst = arith.constant dense<0.000000e+00> : vector<16x32xf32>
    %7 = tpu.matmul %5, %6, %cst {dimension_numbers = #tpu.dot_dimension_numbers<[1], [0], [0], [1], [0, 0, 1, 1], [], []>} : vector<16x128xf32>, vector<128x32xf32>, vector<16x32xf32> -> vector<16x32xf32>
    %c128 = arith.constant 128 : index
    %c0_3 = arith.constant 0 : index
    %8 = vector.load %arg1[%c128, %c0_3] : memref<478x32xf32, #tpu.memory_space<vmem>>, vector<16x32xf32>
    %9 = arith.addf %7, %8 : vector<16x32xf32>
    %c0_4 = arith.constant 0 : index
    %c0_5 = arith.constant 0 : index
    %c0_6 = arith.constant 0 : index
    %10 = vector.load %arg3[%c0_4, %c0_5, %c0_6] : memref<4x16x16xf32, #tpu.memory_space<vmem>>, vector<4x16x16xf32>
    %c144 = arith.constant 144 : index
    %c0_7 = arith.constant 0 : index
    %11 = vector.load %arg1[%c144, %c0_7] : memref<478x32xf32, #tpu.memory_space<vmem>>, vector<1x32xf32>
    %c145 = arith.constant 145 : index
    %c0_8 = arith.constant 0 : index
    %12 = vector.load %arg1[%c145, %c0_8] : memref<478x32xf32, #tpu.memory_space<vmem>>, vector<1x32xf32>
    %c146 = arith.constant 146 : index
    %c0_9 = arith.constant 0 : index
    %13 = vector.load %arg1[%c146, %c0_9] : memref<478x32xf32, #tpu.memory_space<vmem>>, vector<32x32xf32>
    %c178 = arith.constant 178 : index
    %c0_10 = arith.constant 0 : index
    %14 = vector.load %arg1[%c178, %c0_10] : memref<478x32xf32, #tpu.memory_space<vmem>>, vector<1x32xf32>
    %c179 = arith.constant 179 : index
    %c0_11 = arith.constant 0 : index
    %15 = vector.load %arg1[%c179, %c0_11] : memref<478x32xf32, #tpu.memory_space<vmem>>, vector<1x32xf32>
    %c180 = arith.constant 180 : index
    %c0_12 = arith.constant 0 : index
    %16 = vector.load %arg1[%c180, %c0_12] : memref<478x32xf32, #tpu.memory_space<vmem>>, vector<1x32xf32>
    %c181 = arith.constant 181 : index
    %c0_13 = arith.constant 0 : index
    %17 = vector.load %arg1[%c181, %c0_13] : memref<478x32xf32, #tpu.memory_space<vmem>>, vector<128x32xf32>
    %c309 = arith.constant 309 : index
    %c0_14 = arith.constant 0 : index
    %18 = vector.load %arg1[%c309, %c0_14] : memref<478x32xf32, #tpu.memory_space<vmem>>, vector<1x32xf32>
    %c0_15 = arith.constant 0 : index
    %c0_16 = arith.constant 0 : index
    %19 = vector.load %arg2[%c0_15, %c0_16] : memref<163x128xf32, #tpu.memory_space<vmem>>, vector<32x128xf32>
    %c32 = arith.constant 32 : index
    %c0_17 = arith.constant 0 : index
    %20 = vector.load %arg2[%c32, %c0_17] : memref<163x128xf32, #tpu.memory_space<vmem>>, vector<32x128xf32>
    %c64 = arith.constant 64 : index
    %c0_18 = arith.constant 0 : index
    %21 = vector.load %arg2[%c64, %c0_18] : memref<163x128xf32, #tpu.memory_space<vmem>>, vector<1x128xf32>
    %cst_19 = arith.constant dense<0.000000e+00> : vector<16xf32>
    %22 = vector.multi_reduction <add>, %9, %cst_19 [1] : vector<16x32xf32> to vector<16xf32>
    %23 = vector.shape_cast %22 : vector<16xf32> to vector<16x1xf32>
    %cst_20 = arith.constant 3.200000e+01 : f32
    %24 = vector.broadcast %cst_20 : f32 to vector<16x1xf32>
    %25 = arith.divf %23, %24 : vector<16x1xf32>
    %26 = vector.broadcast %25 : vector<16x1xf32> to vector<16x32xf32>
    %27 = arith.subf %9, %26 : vector<16x32xf32>
    %28 = arith.mulf %27, %27 : vector<16x32xf32>
    %cst_21 = arith.constant dense<0.000000e+00> : vector<16xf32>
    %29 = vector.multi_reduction <add>, %28, %cst_21 [1] : vector<16x32xf32> to vector<16xf32>
    %30 = vector.shape_cast %29 : vector<16xf32> to vector<16x1xf32>
    %cst_22 = arith.constant 3.200000e+01 : f32
    %31 = vector.broadcast %cst_22 : f32 to vector<16x1xf32>
    %32 = arith.divf %30, %31 : vector<16x1xf32>
    %33 = vector.broadcast %25 : vector<16x1xf32> to vector<16x32xf32>
    %34 = arith.subf %9, %33 : vector<16x32xf32>
    %cst_23 = arith.constant 9.99999974E-6 : f32
    %35 = vector.broadcast %cst_23 : f32 to vector<16x1xf32>
    %36 = arith.addf %32, %35 : vector<16x1xf32>
    %37 = math.rsqrt %36 : vector<16x1xf32>
    %38 = vector.broadcast %37 : vector<16x1xf32> to vector<16x32xf32>
    %39 = arith.mulf %34, %38 : vector<16x32xf32>
    %40 = vector.broadcast %11 : vector<1x32xf32> to vector<16x32xf32>
    %41 = arith.mulf %39, %40 : vector<16x32xf32>
    %42 = vector.broadcast %12 : vector<1x32xf32> to vector<16x32xf32>
    %43 = arith.addf %41, %42 : vector<16x32xf32>
    %cst_24 = arith.constant dense<0.000000e+00> : vector<16x128xf32>
    %44 = tpu.matmul %43, %19, %cst_24 {dimension_numbers = #tpu.dot_dimension_numbers<[1], [0], [0], [1], [0, 0, 1, 1], [], []>} : vector<16x32xf32>, vector<32x128xf32>, vector<16x128xf32> -> vector<16x128xf32>
    %45 = vector.extract_strided_slice %44 {offsets = [0, 0], sizes = [16, 8], strides = [1, 1]} : vector<16x128xf32> to vector<16x8xf32>
    %46 = vector.extract_strided_slice %44 {offsets = [0, 8], sizes = [16, 8], strides = [1, 1]} : vector<16x128xf32> to vector<16x8xf32>
    %47 = vector.extract_strided_slice %44 {offsets = [0, 16], sizes = [16, 8], strides = [1, 1]} : vector<16x128xf32> to vector<16x8xf32>
    %48 = vector.extract_strided_slice %44 {offsets = [0, 24], sizes = [16, 8], strides = [1, 1]} : vector<16x128xf32> to vector<16x8xf32>
    %49 = vector.shape_cast %45 : vector<16x8xf32> to vector<1x16x8xf32>
    %50 = vector.shape_cast %46 : vector<16x8xf32> to vector<1x16x8xf32>
    %51 = vector.shape_cast %47 : vector<16x8xf32> to vector<1x16x8xf32>
    %52 = vector.shape_cast %48 : vector<16x8xf32> to vector<1x16x8xf32>
    %53 = tpu.concatenate %49, %50, %51, %52 in 0 : vector<1x16x8xf32>, vector<1x16x8xf32>, vector<1x16x8xf32>, vector<1x16x8xf32> -> vector<4x16x8xf32>
    %54 = vector.extract_strided_slice %44 {offsets = [0, 32], sizes = [16, 8], strides = [1, 1]} : vector<16x128xf32> to vector<16x8xf32>
    %55 = vector.extract_strided_slice %44 {offsets = [0, 40], sizes = [16, 8], strides = [1, 1]} : vector<16x128xf32> to vector<16x8xf32>
    %56 = vector.extract_strided_slice %44 {offsets = [0, 48], sizes = [16, 8], strides = [1, 1]} : vector<16x128xf32> to vector<16x8xf32>
    %57 = vector.extract_strided_slice %44 {offsets = [0, 56], sizes = [16, 8], strides = [1, 1]} : vector<16x128xf32> to vector<16x8xf32>
    %58 = vector.shape_cast %54 : vector<16x8xf32> to vector<1x16x8xf32>
    %59 = vector.shape_cast %55 : vector<16x8xf32> to vector<1x16x8xf32>
    %60 = vector.shape_cast %56 : vector<16x8xf32> to vector<1x16x8xf32>
    %61 = vector.shape_cast %57 : vector<16x8xf32> to vector<1x16x8xf32>
    %62 = tpu.concatenate %58, %59, %60, %61 in 0 : vector<1x16x8xf32>, vector<1x16x8xf32>, vector<1x16x8xf32>, vector<1x16x8xf32> -> vector<4x16x8xf32>
    %63 = vector.extract_strided_slice %44 {offsets = [0, 64], sizes = [16, 8], strides = [1, 1]} : vector<16x128xf32> to vector<16x8xf32>
    %64 = vector.extract_strided_slice %44 {offsets = [0, 72], sizes = [16, 8], strides = [1, 1]} : vector<16x128xf32> to vector<16x8xf32>
    %65 = vector.extract_strided_slice %44 {offsets = [0, 80], sizes = [16, 8], strides = [1, 1]} : vector<16x128xf32> to vector<16x8xf32>
    %66 = vector.extract_strided_slice %44 {offsets = [0, 88], sizes = [16, 8], strides = [1, 1]} : vector<16x128xf32> to vector<16x8xf32>
    %67 = vector.shape_cast %63 : vector<16x8xf32> to vector<1x16x8xf32>
    %68 = vector.shape_cast %64 : vector<16x8xf32> to vector<1x16x8xf32>
    %69 = vector.shape_cast %65 : vector<16x8xf32> to vector<1x16x8xf32>
    %70 = vector.shape_cast %66 : vector<16x8xf32> to vector<1x16x8xf32>
    %71 = tpu.concatenate %67, %68, %69, %70 in 0 : vector<1x16x8xf32>, vector<1x16x8xf32>, vector<1x16x8xf32>, vector<1x16x8xf32> -> vector<4x16x8xf32>
    "tpu.trace_start"() <{level = 10 : i32, message = "hqd,hkd->hqk"}> : () -> ()
    %cst_25 = arith.constant dense<0.000000e+00> : vector<4x16x16xf32>
    %72 = tpu.matmul %53, %62, %cst_25 {dimension_numbers = #tpu.dot_dimension_numbers<[2], [2], [1], [1], [0, 0, 0, 1, 1, 1], [0], [0]>} : vector<4x16x8xf32>, vector<4x16x8xf32>, vector<4x16x16xf32> -> vector<4x16x16xf32>
    "tpu.trace_stop"() : () -> ()
    %73 = arith.addf %72, %10 : vector<4x16x16xf32>
    %cst_26 = arith.constant dense<0xFF800000> : vector<4x16xf32>
    %74 = vector.multi_reduction <maximumf>, %73, %cst_26 [2] : vector<4x16x16xf32> to vector<4x16xf32>
    %75 = vector.shape_cast %74 : vector<4x16xf32> to vector<4x16x1xf32>
    %76 = vector.broadcast %75 : vector<4x16x1xf32> to vector<4x16x16xf32>
    %77 = arith.subf %73, %76 : vector<4x16x16xf32>
    %78 = math.exp %77 : vector<4x16x16xf32>
    %cst_27 = arith.constant dense<0.000000e+00> : vector<4x16xf32>
    %79 = vector.multi_reduction <add>, %78, %cst_27 [2] : vector<4x16x16xf32> to vector<4x16xf32>
    %80 = vector.shape_cast %79 : vector<4x16xf32> to vector<4x16x1xf32>
    %81 = tpu.reciprocal %80 {approx = true} : vector<4x16x1xf32> -> vector<4x16x1xf32>
    %82 = vector.broadcast %81 : vector<4x16x1xf32> to vector<4x16x16xf32>
    %83 = arith.mulf %78, %82 : vector<4x16x16xf32>
    "tpu.trace_start"() <{level = 10 : i32, message = "hqk,hkd->hqd"}> : () -> ()
    %cst_28 = arith.constant dense<0.000000e+00> : vector<4x16x8xf32>
    %84 = tpu.matmul %83, %71, %cst_28 {dimension_numbers = #tpu.dot_dimension_numbers<[2], [1], [1], [2], [0, 0, 0, 1, 1, 2], [0], [0]>} : vector<4x16x16xf32>, vector<4x16x8xf32>, vector<4x16x8xf32> -> vector<4x16x8xf32>
    "tpu.trace_stop"() : () -> ()
    %85 = vector.extract_strided_slice %84 {offsets = [0, 0, 0], sizes = [1, 16, 8], strides = [1, 1, 1]} : vector<4x16x8xf32> to vector<1x16x8xf32>
    %86 = vector.shape_cast %85 : vector<1x16x8xf32> to vector<16x8xf32>
    %87 = vector.extract_strided_slice %84 {offsets = [1, 0, 0], sizes = [1, 16, 8], strides = [1, 1, 1]} : vector<4x16x8xf32> to vector<1x16x8xf32>
    %88 = vector.shape_cast %87 : vector<1x16x8xf32> to vector<16x8xf32>
    %89 = vector.extract_strided_slice %84 {offsets = [2, 0, 0], sizes = [1, 16, 8], strides = [1, 1, 1]} : vector<4x16x8xf32> to vector<1x16x8xf32>
    %90 = vector.shape_cast %89 : vector<1x16x8xf32> to vector<16x8xf32>
    %91 = vector.extract_strided_slice %84 {offsets = [3, 0, 0], sizes = [1, 16, 8], strides = [1, 1, 1]} : vector<4x16x8xf32> to vector<1x16x8xf32>
    %92 = vector.shape_cast %91 : vector<1x16x8xf32> to vector<16x8xf32>
    %93 = tpu.concatenate %86, %88, %90, %92 in 1 : vector<16x8xf32>, vector<16x8xf32>, vector<16x8xf32>, vector<16x8xf32> -> vector<16x32xf32>
    %cst_29 = arith.constant dense<0.000000e+00> : vector<16x32xf32>
    %94 = tpu.matmul %93, %13, %cst_29 {dimension_numbers = #tpu.dot_dimension_numbers<[1], [0], [0], [1], [0, 0, 1, 1], [], []>} : vector<16x32xf32>, vector<32x32xf32>, vector<16x32xf32> -> vector<16x32xf32>
    %95 = arith.addf %9, %94 : vector<16x32xf32>
    %96 = vector.broadcast %14 : vector<1x32xf32> to vector<16x32xf32>
    %97 = arith.addf %95, %96 : vector<16x32xf32>
    %cst_30 = arith.constant dense<0.000000e+00> : vector<16xf32>
    %98 = vector.multi_reduction <add>, %97, %cst_30 [1] : vector<16x32xf32> to vector<16xf32>
    %99 = vector.shape_cast %98 : vector<16xf32> to vector<16x1xf32>
    %cst_31 = arith.constant 3.200000e+01 : f32
    %100 = vector.broadcast %cst_31 : f32 to vector<16x1xf32>
    %101 = arith.divf %99, %100 : vector<16x1xf32>
    %102 = vector.broadcast %101 : vector<16x1xf32> to vector<16x32xf32>
    %103 = arith.subf %97, %102 : vector<16x32xf32>
    %104 = arith.mulf %103, %103 : vector<16x32xf32>
    %cst_32 = arith.constant dense<0.000000e+00> : vector<16xf32>
    %105 = vector.multi_reduction <add>, %104, %cst_32 [1] : vector<16x32xf32> to vector<16xf32>
    %106 = vector.shape_cast %105 : vector<16xf32> to vector<16x1xf32>
    %cst_33 = arith.constant 3.200000e+01 : f32
    %107 = vector.broadcast %cst_33 : f32 to vector<16x1xf32>
    %108 = arith.divf %106, %107 : vector<16x1xf32>
    %109 = vector.broadcast %101 : vector<16x1xf32> to vector<16x32xf32>
    %110 = arith.subf %97, %109 : vector<16x32xf32>
    %cst_34 = arith.constant 9.99999974E-6 : f32
    %111 = vector.broadcast %cst_34 : f32 to vector<16x1xf32>
    %112 = arith.addf %108, %111 : vector<16x1xf32>
    %113 = math.rsqrt %112 : vector<16x1xf32>
    %114 = vector.broadcast %113 : vector<16x1xf32> to vector<16x32xf32>
    %115 = arith.mulf %110, %114 : vector<16x32xf32>
    %116 = vector.broadcast %15 : vector<1x32xf32> to vector<16x32xf32>
    %117 = arith.mulf %115, %116 : vector<16x32xf32>
    %118 = vector.broadcast %16 : vector<1x32xf32> to vector<16x32xf32>
    %119 = arith.addf %117, %118 : vector<16x32xf32>
    %cst_35 = arith.constant dense<0.000000e+00> : vector<16x128xf32>
    %120 = tpu.matmul %119, %20, %cst_35 {dimension_numbers = #tpu.dot_dimension_numbers<[1], [0], [0], [1], [0, 0, 1, 1], [], []>} : vector<16x32xf32>, vector<32x128xf32>, vector<16x128xf32> -> vector<16x128xf32>
    %121 = vector.broadcast %21 : vector<1x128xf32> to vector<16x128xf32>
    %122 = arith.addf %120, %121 : vector<16x128xf32>
    %cst_36 = arith.constant 0.000000e+00 : f32
    %123 = vector.broadcast %cst_36 : f32 to vector<16x128xf32>
    %124 = arith.maximumf %122, %123 : vector<16x128xf32>
    %cst_37 = arith.constant dense<0.000000e+00> : vector<16x32xf32>
    %125 = tpu.matmul %124, %17, %cst_37 {dimension_numbers = #tpu.dot_dimension_numbers<[1], [0], [0], [1], [0, 0, 1, 1], [], []>} : vector<16x128xf32>, vector<128x32xf32>, vector<16x32xf32> -> vector<16x32xf32>
    %126 = arith.addf %97, %125 : vector<16x32xf32>
    %127 = vector.broadcast %18 : vector<1x32xf32> to vector<16x32xf32>
    %128 = arith.addf %126, %127 : vector<16x32xf32>
    %c310 = arith.constant 310 : index
    %c0_38 = arith.constant 0 : index
    %129 = vector.load %arg1[%c310, %c0_38] : memref<478x32xf32, #tpu.memory_space<vmem>>, vector<1x32xf32>
    %c311 = arith.constant 311 : index
    %c0_39 = arith.constant 0 : index
    %130 = vector.load %arg1[%c311, %c0_39] : memref<478x32xf32, #tpu.memory_space<vmem>>, vector<1x32xf32>
    %c312 = arith.constant 312 : index
    %c0_40 = arith.constant 0 : index
    %131 = vector.load %arg1[%c312, %c0_40] : memref<478x32xf32, #tpu.memory_space<vmem>>, vector<32x32xf32>
    %c344 = arith.constant 344 : index
    %c0_41 = arith.constant 0 : index
    %132 = vector.load %arg1[%c344, %c0_41] : memref<478x32xf32, #tpu.memory_space<vmem>>, vector<1x32xf32>
    %c345 = arith.constant 345 : index
    %c0_42 = arith.constant 0 : index
    %133 = vector.load %arg1[%c345, %c0_42] : memref<478x32xf32, #tpu.memory_space<vmem>>, vector<1x32xf32>
    %c346 = arith.constant 346 : index
    %c0_43 = arith.constant 0 : index
    %134 = vector.load %arg1[%c346, %c0_43] : memref<478x32xf32, #tpu.memory_space<vmem>>, vector<1x32xf32>
    %c347 = arith.constant 347 : index
    %c0_44 = arith.constant 0 : index
    %135 = vector.load %arg1[%c347, %c0_44] : memref<478x32xf32, #tpu.memory_space<vmem>>, vector<128x32xf32>
    %c475 = arith.constant 475 : index
    %c0_45 = arith.constant 0 : index
    %136 = vector.load %arg1[%c475, %c0_45] : memref<478x32xf32, #tpu.memory_space<vmem>>, vector<1x32xf32>
    %c65 = arith.constant 65 : index
    %c0_46 = arith.constant 0 : index
    %137 = vector.load %arg2[%c65, %c0_46] : memref<163x128xf32, #tpu.memory_space<vmem>>, vector<32x128xf32>
    %c97 = arith.constant 97 : index
    %c0_47 = arith.constant 0 : index
    %138 = vector.load %arg2[%c97, %c0_47] : memref<163x128xf32, #tpu.memory_space<vmem>>, vector<32x128xf32>
    %c129 = arith.constant 129 : index
    %c0_48 = arith.constant 0 : index
    %139 = vector.load %arg2[%c129, %c0_48] : memref<163x128xf32, #tpu.memory_space<vmem>>, vector<1x128xf32>
    %cst_49 = arith.constant dense<0.000000e+00> : vector<16xf32>
    %140 = vector.multi_reduction <add>, %128, %cst_49 [1] : vector<16x32xf32> to vector<16xf32>
    %141 = vector.shape_cast %140 : vector<16xf32> to vector<16x1xf32>
    %cst_50 = arith.constant 3.200000e+01 : f32
    %142 = vector.broadcast %cst_50 : f32 to vector<16x1xf32>
    %143 = arith.divf %141, %142 : vector<16x1xf32>
    %144 = vector.broadcast %143 : vector<16x1xf32> to vector<16x32xf32>
    %145 = arith.subf %128, %144 : vector<16x32xf32>
    %146 = arith.mulf %145, %145 : vector<16x32xf32>
    %cst_51 = arith.constant dense<0.000000e+00> : vector<16xf32>
    %147 = vector.multi_reduction <add>, %146, %cst_51 [1] : vector<16x32xf32> to vector<16xf32>
    %148 = vector.shape_cast %147 : vector<16xf32> to vector<16x1xf32>
    %cst_52 = arith.constant 3.200000e+01 : f32
    %149 = vector.broadcast %cst_52 : f32 to vector<16x1xf32>
    %150 = arith.divf %148, %149 : vector<16x1xf32>
    %151 = vector.broadcast %143 : vector<16x1xf32> to vector<16x32xf32>
    %152 = arith.subf %128, %151 : vector<16x32xf32>
    %cst_53 = arith.constant 9.99999974E-6 : f32
    %153 = vector.broadcast %cst_53 : f32 to vector<16x1xf32>
    %154 = arith.addf %150, %153 : vector<16x1xf32>
    %155 = math.rsqrt %154 : vector<16x1xf32>
    %156 = vector.broadcast %155 : vector<16x1xf32> to vector<16x32xf32>
    %157 = arith.mulf %152, %156 : vector<16x32xf32>
    %158 = vector.broadcast %129 : vector<1x32xf32> to vector<16x32xf32>
    %159 = arith.mulf %157, %158 : vector<16x32xf32>
    %160 = vector.broadcast %130 : vector<1x32xf32> to vector<16x32xf32>
    %161 = arith.addf %159, %160 : vector<16x32xf32>
    %cst_54 = arith.constant dense<0.000000e+00> : vector<16x128xf32>
    %162 = tpu.matmul %161, %137, %cst_54 {dimension_numbers = #tpu.dot_dimension_numbers<[1], [0], [0], [1], [0, 0, 1, 1], [], []>} : vector<16x32xf32>, vector<32x128xf32>, vector<16x128xf32> -> vector<16x128xf32>
    %163 = vector.extract_strided_slice %162 {offsets = [0, 0], sizes = [16, 8], strides = [1, 1]} : vector<16x128xf32> to vector<16x8xf32>
    %164 = vector.extract_strided_slice %162 {offsets = [0, 8], sizes = [16, 8], strides = [1, 1]} : vector<16x128xf32> to vector<16x8xf32>
    %165 = vector.extract_strided_slice %162 {offsets = [0, 16], sizes = [16, 8], strides = [1, 1]} : vector<16x128xf32> to vector<16x8xf32>
    %166 = vector.extract_strided_slice %162 {offsets = [0, 24], sizes = [16, 8], strides = [1, 1]} : vector<16x128xf32> to vector<16x8xf32>
    %167 = vector.shape_cast %163 : vector<16x8xf32> to vector<1x16x8xf32>
    %168 = vector.shape_cast %164 : vector<16x8xf32> to vector<1x16x8xf32>
    %169 = vector.shape_cast %165 : vector<16x8xf32> to vector<1x16x8xf32>
    %170 = vector.shape_cast %166 : vector<16x8xf32> to vector<1x16x8xf32>
    %171 = tpu.concatenate %167, %168, %169, %170 in 0 : vector<1x16x8xf32>, vector<1x16x8xf32>, vector<1x16x8xf32>, vector<1x16x8xf32> -> vector<4x16x8xf32>
    %172 = vector.extract_strided_slice %162 {offsets = [0, 32], sizes = [16, 8], strides = [1, 1]} : vector<16x128xf32> to vector<16x8xf32>
    %173 = vector.extract_strided_slice %162 {offsets = [0, 40], sizes = [16, 8], strides = [1, 1]} : vector<16x128xf32> to vector<16x8xf32>
    %174 = vector.extract_strided_slice %162 {offsets = [0, 48], sizes = [16, 8], strides = [1, 1]} : vector<16x128xf32> to vector<16x8xf32>
    %175 = vector.extract_strided_slice %162 {offsets = [0, 56], sizes = [16, 8], strides = [1, 1]} : vector<16x128xf32> to vector<16x8xf32>
    %176 = vector.shape_cast %172 : vector<16x8xf32> to vector<1x16x8xf32>
    %177 = vector.shape_cast %173 : vector<16x8xf32> to vector<1x16x8xf32>
    %178 = vector.shape_cast %174 : vector<16x8xf32> to vector<1x16x8xf32>
    %179 = vector.shape_cast %175 : vector<16x8xf32> to vector<1x16x8xf32>
    %180 = tpu.concatenate %176, %177, %178, %179 in 0 : vector<1x16x8xf32>, vector<1x16x8xf32>, vector<1x16x8xf32>, vector<1x16x8xf32> -> vector<4x16x8xf32>
    %181 = vector.extract_strided_slice %162 {offsets = [0, 64], sizes = [16, 8], strides = [1, 1]} : vector<16x128xf32> to vector<16x8xf32>
    %182 = vector.extract_strided_slice %162 {offsets = [0, 72], sizes = [16, 8], strides = [1, 1]} : vector<16x128xf32> to vector<16x8xf32>
    %183 = vector.extract_strided_slice %162 {offsets = [0, 80], sizes = [16, 8], strides = [1, 1]} : vector<16x128xf32> to vector<16x8xf32>
    %184 = vector.extract_strided_slice %162 {offsets = [0, 88], sizes = [16, 8], strides = [1, 1]} : vector<16x128xf32> to vector<16x8xf32>
    %185 = vector.shape_cast %181 : vector<16x8xf32> to vector<1x16x8xf32>
    %186 = vector.shape_cast %182 : vector<16x8xf32> to vector<1x16x8xf32>
    %187 = vector.shape_cast %183 : vector<16x8xf32> to vector<1x16x8xf32>
    %188 = vector.shape_cast %184 : vector<16x8xf32> to vector<1x16x8xf32>
    %189 = tpu.concatenate %185, %186, %187, %188 in 0 : vector<1x16x8xf32>, vector<1x16x8xf32>, vector<1x16x8xf32>, vector<1x16x8xf32> -> vector<4x16x8xf32>
    "tpu.trace_start"() <{level = 10 : i32, message = "hqd,hkd->hqk"}> : () -> ()
    %cst_55 = arith.constant dense<0.000000e+00> : vector<4x16x16xf32>
    %190 = tpu.matmul %171, %180, %cst_55 {dimension_numbers = #tpu.dot_dimension_numbers<[2], [2], [1], [1], [0, 0, 0, 1, 1, 1], [0], [0]>} : vector<4x16x8xf32>, vector<4x16x8xf32>, vector<4x16x16xf32> -> vector<4x16x16xf32>
    "tpu.trace_stop"() : () -> ()
    %191 = arith.addf %190, %10 : vector<4x16x16xf32>
    %cst_56 = arith.constant dense<0xFF800000> : vector<4x16xf32>
    %192 = vector.multi_reduction <maximumf>, %191, %cst_56 [2] : vector<4x16x16xf32> to vector<4x16xf32>
    %193 = vector.shape_cast %192 : vector<4x16xf32> to vector<4x16x1xf32>
    %194 = vector.broadcast %193 : vector<4x16x1xf32> to vector<4x16x16xf32>
    %195 = arith.subf %191, %194 : vector<4x16x16xf32>
    %196 = math.exp %195 : vector<4x16x16xf32>
    %cst_57 = arith.constant dense<0.000000e+00> : vector<4x16xf32>
    %197 = vector.multi_reduction <add>, %196, %cst_57 [2] : vector<4x16x16xf32> to vector<4x16xf32>
    %198 = vector.shape_cast %197 : vector<4x16xf32> to vector<4x16x1xf32>
    %199 = tpu.reciprocal %198 {approx = true} : vector<4x16x1xf32> -> vector<4x16x1xf32>
    %200 = vector.broadcast %199 : vector<4x16x1xf32> to vector<4x16x16xf32>
    %201 = arith.mulf %196, %200 : vector<4x16x16xf32>
    "tpu.trace_start"() <{level = 10 : i32, message = "hqk,hkd->hqd"}> : () -> ()
    %cst_58 = arith.constant dense<0.000000e+00> : vector<4x16x8xf32>
    %202 = tpu.matmul %201, %189, %cst_58 {dimension_numbers = #tpu.dot_dimension_numbers<[2], [1], [1], [2], [0, 0, 0, 1, 1, 2], [0], [0]>} : vector<4x16x16xf32>, vector<4x16x8xf32>, vector<4x16x8xf32> -> vector<4x16x8xf32>
    "tpu.trace_stop"() : () -> ()
    %203 = vector.extract_strided_slice %202 {offsets = [0, 0, 0], sizes = [1, 16, 8], strides = [1, 1, 1]} : vector<4x16x8xf32> to vector<1x16x8xf32>
    %204 = vector.shape_cast %203 : vector<1x16x8xf32> to vector<16x8xf32>
    %205 = vector.extract_strided_slice %202 {offsets = [1, 0, 0], sizes = [1, 16, 8], strides = [1, 1, 1]} : vector<4x16x8xf32> to vector<1x16x8xf32>
    %206 = vector.shape_cast %205 : vector<1x16x8xf32> to vector<16x8xf32>
    %207 = vector.extract_strided_slice %202 {offsets = [2, 0, 0], sizes = [1, 16, 8], strides = [1, 1, 1]} : vector<4x16x8xf32> to vector<1x16x8xf32>
    %208 = vector.shape_cast %207 : vector<1x16x8xf32> to vector<16x8xf32>
    %209 = vector.extract_strided_slice %202 {offsets = [3, 0, 0], sizes = [1, 16, 8], strides = [1, 1, 1]} : vector<4x16x8xf32> to vector<1x16x8xf32>
    %210 = vector.shape_cast %209 : vector<1x16x8xf32> to vector<16x8xf32>
    %211 = tpu.concatenate %204, %206, %208, %210 in 1 : vector<16x8xf32>, vector<16x8xf32>, vector<16x8xf32>, vector<16x8xf32> -> vector<16x32xf32>
    %cst_59 = arith.constant dense<0.000000e+00> : vector<16x32xf32>
    %212 = tpu.matmul %211, %131, %cst_59 {dimension_numbers = #tpu.dot_dimension_numbers<[1], [0], [0], [1], [0, 0, 1, 1], [], []>} : vector<16x32xf32>, vector<32x32xf32>, vector<16x32xf32> -> vector<16x32xf32>
    %213 = arith.addf %128, %212 : vector<16x32xf32>
    %214 = vector.broadcast %132 : vector<1x32xf32> to vector<16x32xf32>
    %215 = arith.addf %213, %214 : vector<16x32xf32>
    %cst_60 = arith.constant dense<0.000000e+00> : vector<16xf32>
    %216 = vector.multi_reduction <add>, %215, %cst_60 [1] : vector<16x32xf32> to vector<16xf32>
    %217 = vector.shape_cast %216 : vector<16xf32> to vector<16x1xf32>
    %cst_61 = arith.constant 3.200000e+01 : f32
    %218 = vector.broadcast %cst_61 : f32 to vector<16x1xf32>
    %219 = arith.divf %217, %218 : vector<16x1xf32>
    %220 = vector.broadcast %219 : vector<16x1xf32> to vector<16x32xf32>
    %221 = arith.subf %215, %220 : vector<16x32xf32>
    %222 = arith.mulf %221, %221 : vector<16x32xf32>
    %cst_62 = arith.constant dense<0.000000e+00> : vector<16xf32>
    %223 = vector.multi_reduction <add>, %222, %cst_62 [1] : vector<16x32xf32> to vector<16xf32>
    %224 = vector.shape_cast %223 : vector<16xf32> to vector<16x1xf32>
    %cst_63 = arith.constant 3.200000e+01 : f32
    %225 = vector.broadcast %cst_63 : f32 to vector<16x1xf32>
    %226 = arith.divf %224, %225 : vector<16x1xf32>
    %227 = vector.broadcast %219 : vector<16x1xf32> to vector<16x32xf32>
    %228 = arith.subf %215, %227 : vector<16x32xf32>
    %cst_64 = arith.constant 9.99999974E-6 : f32
    %229 = vector.broadcast %cst_64 : f32 to vector<16x1xf32>
    %230 = arith.addf %226, %229 : vector<16x1xf32>
    %231 = math.rsqrt %230 : vector<16x1xf32>
    %232 = vector.broadcast %231 : vector<16x1xf32> to vector<16x32xf32>
    %233 = arith.mulf %228, %232 : vector<16x32xf32>
    %234 = vector.broadcast %133 : vector<1x32xf32> to vector<16x32xf32>
    %235 = arith.mulf %233, %234 : vector<16x32xf32>
    %236 = vector.broadcast %134 : vector<1x32xf32> to vector<16x32xf32>
    %237 = arith.addf %235, %236 : vector<16x32xf32>
    %cst_65 = arith.constant dense<0.000000e+00> : vector<16x128xf32>
    %238 = tpu.matmul %237, %138, %cst_65 {dimension_numbers = #tpu.dot_dimension_numbers<[1], [0], [0], [1], [0, 0, 1, 1], [], []>} : vector<16x32xf32>, vector<32x128xf32>, vector<16x128xf32> -> vector<16x128xf32>
    %239 = vector.broadcast %139 : vector<1x128xf32> to vector<16x128xf32>
    %240 = arith.addf %238, %239 : vector<16x128xf32>
    %cst_66 = arith.constant 0.000000e+00 : f32
    %241 = vector.broadcast %cst_66 : f32 to vector<16x128xf32>
    %242 = arith.maximumf %240, %241 : vector<16x128xf32>
    %cst_67 = arith.constant dense<0.000000e+00> : vector<16x32xf32>
    %243 = tpu.matmul %242, %135, %cst_67 {dimension_numbers = #tpu.dot_dimension_numbers<[1], [0], [0], [1], [0, 0, 1, 1], [], []>} : vector<16x128xf32>, vector<128x32xf32>, vector<16x32xf32> -> vector<16x32xf32>
    %244 = arith.addf %215, %243 : vector<16x32xf32>
    %245 = vector.broadcast %136 : vector<1x32xf32> to vector<16x32xf32>
    %246 = arith.addf %244, %245 : vector<16x32xf32>
    %c476 = arith.constant 476 : index
    %c0_68 = arith.constant 0 : index
    %247 = vector.load %arg1[%c476, %c0_68] : memref<478x32xf32, #tpu.memory_space<vmem>>, vector<1x32xf32>
    %c477 = arith.constant 477 : index
    %c0_69 = arith.constant 0 : index
    %248 = vector.load %arg1[%c477, %c0_69] : memref<478x32xf32, #tpu.memory_space<vmem>>, vector<1x32xf32>
    %c130 = arith.constant 130 : index
    %c0_70 = arith.constant 0 : index
    %249 = vector.load %arg2[%c130, %c0_70] : memref<163x128xf32, #tpu.memory_space<vmem>>, vector<32x128xf32>
    %c162 = arith.constant 162 : index
    %c0_71 = arith.constant 0 : index
    %250 = vector.load %arg2[%c162, %c0_71] : memref<163x128xf32, #tpu.memory_space<vmem>>, vector<1x128xf32>
    %cst_72 = arith.constant dense<0.000000e+00> : vector<16xf32>
    %251 = vector.multi_reduction <add>, %246, %cst_72 [1] : vector<16x32xf32> to vector<16xf32>
    %252 = vector.shape_cast %251 : vector<16xf32> to vector<16x1xf32>
    %cst_73 = arith.constant 3.200000e+01 : f32
    %253 = vector.broadcast %cst_73 : f32 to vector<16x1xf32>
    %254 = arith.divf %252, %253 : vector<16x1xf32>
    %255 = vector.broadcast %254 : vector<16x1xf32> to vector<16x32xf32>
    %256 = arith.subf %246, %255 : vector<16x32xf32>
    %257 = arith.mulf %256, %256 : vector<16x32xf32>
    %cst_74 = arith.constant dense<0.000000e+00> : vector<16xf32>
    %258 = vector.multi_reduction <add>, %257, %cst_74 [1] : vector<16x32xf32> to vector<16xf32>
    %259 = vector.shape_cast %258 : vector<16xf32> to vector<16x1xf32>
    %cst_75 = arith.constant 3.200000e+01 : f32
    %260 = vector.broadcast %cst_75 : f32 to vector<16x1xf32>
    %261 = arith.divf %259, %260 : vector<16x1xf32>
    %262 = vector.broadcast %254 : vector<16x1xf32> to vector<16x32xf32>
    %263 = arith.subf %246, %262 : vector<16x32xf32>
    %cst_76 = arith.constant 9.99999974E-6 : f32
    %264 = vector.broadcast %cst_76 : f32 to vector<16x1xf32>
    %265 = arith.addf %261, %264 : vector<16x1xf32>
    %266 = math.rsqrt %265 : vector<16x1xf32>
    %267 = vector.broadcast %266 : vector<16x1xf32> to vector<16x32xf32>
    %268 = arith.mulf %263, %267 : vector<16x32xf32>
    %269 = vector.broadcast %247 : vector<1x32xf32> to vector<16x32xf32>
    %270 = arith.mulf %268, %269 : vector<16x32xf32>
    %271 = vector.broadcast %248 : vector<1x32xf32> to vector<16x32xf32>
    %272 = arith.addf %270, %271 : vector<16x32xf32>
    %cst_77 = arith.constant dense<0.000000e+00> : vector<16x128xf32>
    %273 = tpu.matmul %272, %249, %cst_77 {dimension_numbers = #tpu.dot_dimension_numbers<[1], [0], [0], [1], [0, 0, 1, 1], [], []>} : vector<16x32xf32>, vector<32x128xf32>, vector<16x128xf32> -> vector<16x128xf32>
    %274 = vector.broadcast %250 : vector<1x128xf32> to vector<16x128xf32>
    %275 = arith.addf %273, %274 : vector<16x128xf32>
    %c0_78 = arith.constant 0 : index
    %c0_79 = arith.constant 0 : index
    %276 = vector.load %arg4[%c0_78, %c0_79] : memref<16x128xf32, #tpu.memory_space<vmem>>, vector<16x128xf32>
    tpu.vector_store %arg4[%c0_78, %c0_79], %275 {strides = array<i32>} : memref<16x128xf32, #tpu.memory_space<vmem>>, vector<16x128xf32>,
    return
  }
}

</mosaic_0001>

<llo_original>
// kernel: wml_text_one_forward.1
$region0: #{wml_text_one_forward.1}
  #allocation0 [shape = 'u32[]', space=smem, size = 0x4, offset = 0x4, fixed_abs, tag = 'smem constant byte address 0x4 - core index']
  #allocation1 [shape = 'u32[144,128]{1,0:T(1,128)}', space=vmem, size = 0x12000, scoped, tag = 'internal scratch']
  %s0 = inlined_call_operand.vmem [shape: s32[16,1], index: 0, kind: input, shape index: {}]
  %s1 = inlined_call_operand.vmem [shape: f32[478,32], index: 1, kind: input, shape index: {}]
  %s2 = inlined_call_operand.vmem [shape: f32[163,128], index: 2, kind: input, shape index: {}]
  %s3 = inlined_call_operand.vmem [shape: f32[4,16,16], index: 3, kind: input, shape index: {}]
  %s4 = inlined_call_operand.hbm [shape: f32[16,128], index: 4, kind: output, shape index: {}]
  %s5 = sld [smem:[#allocation0]]
  $region26: #{wml_text_one_forward.1} parent=0
    _
  %s7 = ssub.s32 1, %s5
  %s8 = scalar_select 0, %s7, %s5
  $region1: #{wml_text_one_forward.1} parent=0
    #allocation2 [shape = 'u8[8192]{0}', space=vmem, size = 0x2000, scoped, tag = 'output window, operand 0, single buffered']
    #allocation3 [shape = 's32[1]{0}', space=sflag, size = 0x4, scoped, tag = 'scoped memory for wml_text_one_forward.1']
    %9 = vsyncpa [#allocation3], 0
    // Predicated region
    $region2: #{wml_text_one_forward.1} parent=1 // pred_check
      _
    $region3: #{wml_text_one_forward.1} parent=1 // pred_check_branch
      %11 = sbr.rel (0) target = $region5
    $region4: #{wml_text_one_forward.1} parent=1 // pred_region
      _
    $region5: #{wml_text_one_forward.1} parent=1 // pred_fallthru
      _
    // Predicated region
    $region6: #{wml_text_one_forward.1} parent=1 // pred_check
      _
    $region7: #{wml_text_one_forward.1} parent=1 // pred_check_branch
      %13 = sbr.rel (0) target = $region9
    $region8: #{wml_text_one_forward.1} parent=1 // pred_region
      _
    $region9: #{wml_text_one_forward.1} parent=1 // pred_fallthru
      _
    // Predicated region
    $region10: #{wml_text_one_forward.1} parent=1 // pred_check
      _
    $region11: #{wml_text_one_forward.1} parent=1 // pred_check_branch
      %15 = sbr.rel (0) target = $region13
    $region12: #{wml_text_one_forward.1} parent=1 // pred_region
      _
    $region13: #{wml_text_one_forward.1} parent=1 // pred_fallthru
      _
    // Predicated region
    $region14: #{wml_text_one_forward.1} parent=1 // pred_check
      _
    $region15: #{wml_text_one_forward.1} parent=1 // pred_check_branch
      %17 = sbr.rel (0) target = $region17
    $region16: #{wml_text_one_forward.1} parent=1 // pred_region
      _
    $region17: #{wml_text_one_forward.1} parent=1 // pred_fallthru
      _
    %v18 = vld [vmem:[%s0] sm:$0xff]
    %v19 = vld [vmem:[%s0 + $0x8] sm:$0xff]
    %v20 = vlaneseq
    %v21 = vand.u32 %v20, 127
    %22 = vset.pattern.permute.xlu0 0
    %23 = vperm.xlu0 %22, %v18
    %v24 = vpop.permute.xlu0 %23
    %25 = vset.pattern.permute.xlu0 0
    %26 = vperm.xlu0 %25, %v19
    %v27 = vpop.permute.xlu0 %26
    %vm28 = vcmp.eq.s32.totalorder %v24, %v21
    %vm29 = vcmp.eq.s32.totalorder %v27, %v21
    %v30 = vsel %vm28, 1, 0
    %v31 = vsel %vm29, 1, 0
    %v32 = vcvt.s32.f32 %v30
    %v33 = vcvt.s32.f32 %v31
    %v34 = vld [vmem:[%s1] sm:$0xff]
    %v35 = vld [vmem:[%s1 + $0x8] sm:$0xff]
    %v36 = vld [vmem:[%s1 + $0x10] sm:$0xff]
    %v37 = vld [vmem:[%s1 + $0x18] sm:$0xff]
    %v38 = vld [vmem:[%s1 + $0x20] sm:$0xff]
    %v39 = vld [vmem:[%s1 + $0x28] sm:$0xff]
    %v40 = vld [vmem:[%s1 + $0x30] sm:$0xff]
    %v41 = vld [vmem:[%s1 + $0x38] sm:$0xff]
    %v42 = vld [vmem:[%s1 + $0x40] sm:$0xff]
    %v43 = vld [vmem:[%s1 + $0x48] sm:$0xff]
    %v44 = vld [vmem:[%s1 + $0x50] sm:$0xff]
    %v45 = vld [vmem:[%s1 + $0x58] sm:$0xff]
    %v46 = vld [vmem:[%s1 + $0x60] sm:$0xff]
    %v47 = vld [vmem:[%s1 + $0x68] sm:$0xff]
    %v48 = vld [vmem:[%s1 + $0x70] sm:$0xff]
    %v49 = vld [vmem:[%s1 + $0x78] sm:$0xff]
    %v50 = vld [vmem:[%s1 + $0x80] sm:$0xff]
    %v51 = vld [vmem:[%s1 + $0x88] sm:$0xff]
    %52 = vmatprep.subr.mxu0 0.0
    %53 = vmatpush1.msra.mxu0 %v34
    %54 = vmatprep.subr.mxu0 0.0
    %55 = vmatpush1.msra.mxu0 %v35
    %56 = vmatprep.subr.mxu0 0.0
    %57 = vmatpush1.msra.mxu0 %v36
    %58 = vmatprep.subr.mxu0 0.0
    %59 = vmatpush1.msra.mxu0 %v37
    %60 = vmatprep.subr.mxu0 0.0
    %61 = vmatpush1.msra.mxu0 %v38
    %62 = vmatprep.subr.mxu0 0.0
    %63 = vmatpush1.msra.mxu0 %v39
    %64 = vmatprep.subr.mxu0 0.0
    %65 = vmatpush1.msra.mxu0 %v40
    %66 = vmatprep.subr.mxu0 0.0
    %67 = vmatpush1.msra.mxu0 %v41
    %68 = vmatprep.subr.mxu0 0.0
    %69 = vmatpush1.msra.mxu0 %v42
    %70 = vmatprep.subr.mxu0 0.0
    %71 = vmatpush1.msra.mxu0 %v43
    %72 = vmatprep.subr.mxu0 0.0
    %73 = vmatpush1.msra.mxu0 %v44
    %74 = vmatprep.subr.mxu0 0.0
    %75 = vmatpush1.msra.mxu0 %v45
    %76 = vmatprep.subr.mxu0 0.0
    %77 = vmatpush1.msra.mxu0 %v46
    %78 = vmatprep.subr.mxu0 0.0
    %79 = vmatpush1.msra.mxu0 %v47
    %80 = vmatprep.subr.mxu0 0.0
    %81 = vmatpush1.msra.mxu0 %v48
    %82 = vmatprep.subr.mxu0 0.0
    %83 = vmatpush1.msra.mxu0 %v49
    %84 = vmatprep.subr.mxu0 0.0
    %85 = vmatpush1.msra.mxu0 0.0
    %86 = vmatprep.subr.mxu0 0.0
    %87 = vmatpush1.msra.mxu0 0.0
    %88 = vmatprep.subr.mxu0 0.0
    %89 = vmatpush1.msra.mxu0 0.0
    %90 = vmatprep.subr.mxu0 0.0
    %91 = vmatpush1.msra.mxu0 0.0
    %92 = vmatprep.subr.mxu0 0.0
    %93 = vmatpush1.msra.mxu0 0.0
    %94 = vmatprep.subr.mxu0 0.0
    %95 = vmatpush1.msra.mxu0 0.0
    %96 = vmatprep.subr.mxu0 0.0
    %97 = vmatpush1.msra.mxu0 0.0
    %98 = vmatprep.subr.mxu0 0.0
    %99 = vmatpush1.msra.mxu0 0.0
    %100 = vmatprep.subr.mxu0 0.0
    %101 = vmatpush1.msra.mxu0 0.0
    %102 = vmatprep.subr.mxu0 0.0
    %103 = vmatpush1.msra.mxu0 0.0
    %104 = vmatprep.subr.mxu0 0.0
    %105 = vmatpush1.msra.mxu0 0.0
    %106 = vmatprep.subr.mxu0 0.0
    %107 = vmatpush1.msra.mxu0 0.0
    %108 = vmatprep.subr.mxu0 0.0
    %109 = vmatpush1.msra.mxu0 0.0
    %110 = vmatprep.subr.mxu0 0.0
    %111 = vmatpush1.msra.mxu0 0.0
    %112 = vmatprep.subr.mxu0 0.0
    %113 = vmatpush1.msra.mxu0 0.0
    %114 = vmatprep.subr.mxu0 0.0
    %115 = vmatpush1.msra.mxu0 0.0
    %116 = vmatprep.mubr.f32.mxu0 0.0
    %117 = vmatmul.mubr.f32.gmra.mrb[0].mxu0 %v32
    %v118 = vpop.f32.mrb[0].mxu0
    %v119 = vadd.f32 %v50, %v118
    %v120 = vpop.f32.mrb[0].mxu0
    %121 = vmatprep.mubr.f32.mxu0 0.0
    %122 = vmatmul.mubr.f32.gmra.mrb[0].mxu0 %v33
    %v123 = vpop.f32.mrb[0].mxu0
    %v124 = vadd.f32 %v51, %v123
    %v125 = vpop.f32.mrb[0].mxu0
    %126 = vdwg.mxu0
    %v127 = vld [vmem:[%s3] sm:$0xff]
    %v128 = vld [vmem:[%s3 + $0x8] sm:$0xff]
    %v129 = vld [vmem:[%s3 + $0x10] sm:$0xff]
    %v130 = vld [vmem:[%s3 + $0x18] sm:$0xff]
    %v131 = vld [vmem:[%s3 + $0x20] sm:$0xff]
    %v132 = vld [vmem:[%s3 + $0x28] sm:$0xff]
    %v133 = vld [vmem:[%s3 + $0x30] sm:$0xff]
    %v134 = vld [vmem:[%s3 + $0x38] sm:$0xff]
    %v135 = vld [vmem:[%s1 + $0x90] sm:$0x1]
    %v136 = vld [vmem:[%s1 + $0x91] sm:$0x1]
    %v137 = vld [vmem:[%s1 + $0x92] sm:$0xff]
    %v138 = vld [vmem:[%s1 + $0x9a] sm:$0xff]
    %v139 = vld [vmem:[%s1 + $0xa2] sm:$0xff]
    %v140 = vld [vmem:[%s1 + $0xaa] sm:$0xff]
    %v141 = vld [vmem:[%s1 + $0xb2] sm:$0x1]
    %v142 = vld [vmem:[%s1 + $0xb3] sm:$0x1]
    %v143 = vld [vmem:[%s1 + $0xb4] sm:$0x1]
    %v144 = vld [vmem:[%s1 + $0xb5] sm:$0xff]
    %v145 = vld [vmem:[%s1 + $0xbd] sm:$0xff]
    %v146 = vld [vmem:[%s1 + $0xc5] sm:$0xff]
    %v147 = vld [vmem:[%s1 + $0xcd] sm:$0xff]
    %v148 = vld [vmem:[%s1 + $0xd5] sm:$0xff]
    %v149 = vld [vmem:[%s1 + $0xdd] sm:$0xff]
    %v150 = vld [vmem:[%s1 + $0xe5] sm:$0xff]
    %v151 = vld [vmem:[%s1 + $0xed] sm:$0xff]
    %v152 = vld [vmem:[%s1 + $0xf5] sm:$0xff]
    %v153 = vld [vmem:[%s1 + $0xfd] sm:$0xff]
    %v154 = vld [vmem:[%s1 + $0x105] sm:$0xff]
    %v155 = vld [vmem:[%s1 + $0x10d] sm:$0xff]
    %v156 = vld [vmem:[%s1 + $0x115] sm:$0xff]
    %v157 = vld [vmem:[%s1 + $0x11d] sm:$0xff]
    %v158 = vld [vmem:[%s1 + $0x125] sm:$0xff]
    %v159 = vld [vmem:[%s1 + $0x12d] sm:$0xff]
    %v160 = vld [vmem:[%s1 + $0x135] sm:$0x1]
    %v161 = vld [vmem:[%s2] sm:$0xff]
    %v162 = vld [vmem:[%s2 + $0x8] sm:$0xff]
    %v163 = vld [vmem:[%s2 + $0x10] sm:$0xff]
    %v164 = vld [vmem:[%s2 + $0x18] sm:$0xff]
    %v165 = vld [vmem:[%s2 + $0x20] sm:$0xff]
    %v166 = vld [vmem:[%s2 + $0x28] sm:$0xff]
    %v167 = vld [vmem:[%s2 + $0x30] sm:$0xff]
    %v168 = vld [vmem:[%s2 + $0x38] sm:$0xff]
    %v169 = vld [vmem:[%s2 + $0x40] sm:$0x1]
    %vm170 = vcmask 261120
    %v171 = vsel %vm170, %v119, 0.0
    %172 = vadd.xlane.f32.xlu0 %v171
    %v173 = vpop.xlane.xlu0 %172
    %v174 = vsel %vm170, %v124, 0.0
    %175 = vadd.xlane.f32.xlu0 %v174
    %v176 = vpop.xlane.xlu0 %175
    %v177 = vrcp.pop 32.0
    %v178 = vmul.f32 %v173, %v177
    %v179 = vmul.f32 %v176, %v177
    %v180 = vsub.f32 %v119, %v178
    %v181 = vsub.f32 %v124, %v179
    %v182 = vmul.f32 %v180, %v180
    %v183 = vmul.f32 %v181, %v181
    %v184 = vsel %vm170, %v182, 0.0
    %185 = vadd.xlane.f32.xlu0 %v184
    %v186 = vpop.xlane.xlu0 %185
    %v187 = vsel %vm170, %v183, 0.0
    %188 = vadd.xlane.f32.xlu0 %v187
    %v189 = vpop.xlane.xlu0 %188
    %v190 = vmul.f32 %v186, %v177
    %v191 = vmul.f32 %v189, %v177
    %v192 = vadd.f32 %v190, 1e-05
    %v193 = vadd.f32 %v191, 1e-05
    %v194 = vrsqrt.pop %v192
    %v195 = vrsqrt.pop %v193
    %v196 = vmul.f32 %v180, %v194
    %v197 = vmul.f32 %v181, %v195
    %v198 = vlaneseq
    %v199 = vshrl.u32 %v198, 7
    %v200 = vsub.s32 0, %v199
    %v201 = vrot.slane %v135, %v200
    %v202 = vmul.f32 %v196, %v201
    %v203 = vmul.f32 %v197, %v201
    %v204 = vlaneseq
    %v205 = vshrl.u32 %v204, 7
    %v206 = vsub.s32 0, %v205
    %v207 = vrot.slane %v136, %v206
    %v208 = vadd.f32 %v202, %v207
    %v209 = vadd.f32 %v203, %v207
    %v211 = vsel %vm170, %v208, 0
    %v214 = vsel %vm170, %v209, 0
    %216 = vmatprep.subr.mxu0 0.0
    %217 = vmatpush1.msra.mxu0 %v161
    %218 = vmatprep.subr.mxu0 0.0
    %219 = vmatpush1.msra.mxu0 %v162
    %220 = vmatprep.subr.mxu0 0.0
    %221 = vmatpush1.msra.mxu0 %v163
    %222 = vmatprep.subr.mxu0 0.0
    %223 = vmatpush1.msra.mxu0 %v164
    %224 = vmatprep.subr.mxu0 0.0
    %225 = vmatpush1.msra.mxu0 0.0
    %226 = vmatprep.subr.mxu0 0.0
    %227 = vmatpush1.msra.mxu0 0.0
    %228 = vmatprep.subr.mxu0 0.0
    %229 = vmatpush1.msra.mxu0 0.0
    %230 = vmatprep.subr.mxu0 0.0
    %231 = vmatpush1.msra.mxu0 0.0
    %232 = vmatprep.subr.mxu0 0.0
    %233 = vmatpush1.msra.mxu0 0.0
    %234 = vmatprep.subr.mxu0 0.0
    %235 = vmatpush1.msra.mxu0 0.0
    %236 = vmatprep.subr.mxu0 0.0
    %237 = vmatpush1.msra.mxu0 0.0
    %238 = vmatprep.subr.mxu0 0.0
    %239 = vmatpush1.msra.mxu0 0.0
    %240 = vmatprep.subr.mxu0 0.0
    %241 = vmatpush1.msra.mxu0 0.0
    %242 = vmatprep.subr.mxu0 0.0
    %243 = vmatpush1.msra.mxu0 0.0
    %244 = vmatprep.subr.mxu0 0.0
    %245 = vmatpush1.msra.mxu0 0.0
    %246 = vmatprep.subr.mxu0 0.0
    %247 = vmatpush1.msra.mxu0 0.0
    %248 = vmatprep.subr.mxu0 0.0
    %249 = vmatpush1.msra.mxu0 0.0
    %250 = vmatprep.subr.mxu0 0.0
    %251 = vmatpush1.msra.mxu0 0.0
    %252 = vmatprep.subr.mxu0 0.0
    %253 = vmatpush1.msra.mxu0 0.0
    %254 = vmatprep.subr.mxu0 0.0
    %255 = vmatpush1.msra.mxu0 0.0
    %256 = vmatprep.subr.mxu0 0.0
    %257 = vmatpush1.msra.mxu0 0.0
    %258 = vmatprep.subr.mxu0 0.0
    %259 = vmatpush1.msra.mxu0 0.0
    %260 = vmatprep.subr.mxu0 0.0
    %261 = vmatpush1.msra.mxu0 0.0
    %262 = vmatprep.subr.mxu0 0.0
    %263 = vmatpush1.msra.mxu0 0.0
    %264 = vmatprep.subr.mxu0 0.0
    %265 = vmatpush1.msra.mxu0 0.0
    %266 = vmatprep.subr.mxu0 0.0
    %267 = vmatpush1.msra.mxu0 0.0
    %268 = vmatprep.subr.mxu0 0.0
    %269 = vmatpush1.msra.mxu0 0.0
    %270 = vmatprep.subr.mxu0 0.0
    %271 = vmatpush1.msra.mxu0 0.0
    %272 = vmatprep.subr.mxu0 0.0
    %273 = vmatpush1.msra.mxu0 0.0
    %274 = vmatprep.subr.mxu0 0.0
    %275 = vmatpush1.msra.mxu0 0.0
    %276 = vmatprep.subr.mxu0 0.0
    %277 = vmatpush1.msra.mxu0 0.0
    %278 = vmatprep.subr.mxu0 0.0
    %279 = vmatpush1.msra.mxu0 0.0
    %280 = vmatprep.mubr.f32.mxu0 0.0
    %281 = vmatmul.mubr.f32.gmra.mrb[0].mxu0 %v211
    %v282 = vpop.f32.mrb[0].mxu0
    %v283 = vadd.f32 0.0, %v282
    %v284 = vpop.f32.mrb[0].mxu0
    %285 = vmatprep.mubr.f32.mxu0 0.0
    %286 = vmatmul.mubr.f32.gmra.mrb[0].mxu0 %v214
    %v287 = vpop.f32.mrb[0].mxu0
    %v288 = vadd.f32 0.0, %v287
    %v289 = vpop.f32.mrb[0].mxu0
    %290 = vdwg.mxu0
    %293 = vrot.lane.b32.xlu0 %v283, 120
    %v294 = vpop.permute.xlu0 %293
    %295 = vrot.lane.b32.xlu0 %v288, 120
    %v296 = vpop.permute.xlu0 %295
    %297 = vrot.lane.b32.xlu0 %v283, 112
    %v298 = vpop.permute.xlu0 %297
    %299 = vrot.lane.b32.xlu0 %v288, 112
    %v300 = vpop.permute.xlu0 %299
    %301 = vrot.lane.b32.xlu0 %v283, 104
    %v302 = vpop.permute.xlu0 %301
    %303 = vrot.lane.b32.xlu0 %v288, 104
    %v304 = vpop.permute.xlu0 %303
    %305 = vrot.lane.b32.xlu0 %v283, 96
    %v306 = vpop.permute.xlu0 %305
    %307 = vrot.lane.b32.xlu0 %v288, 96
    %v308 = vpop.permute.xlu0 %307
    %vm309 = vcmask 64512
    %v310 = vsel %vm309, %v283, 0
    %v312 = vsel %vm309, %v288, 0
    %v314 = vsel %vm309, %v306, 0
    %v316 = vsel %vm309, %v308, 0
    %318 = vmatprep.subr.mxu0 0.0
    %319 = vmatpush1.xpose.msra.mxu0 %v314
    %320 = vmatprep.subr.mxu0 0.0
    %321 = vmatpush1.xpose.msra.mxu0 %v316
    %322 = vmatprep.subr.mxu0 0.0
    %323 = vmatpush1.xpose.msra.mxu0 0.0
    %324 = vmatprep.subr.mxu0 0.0
    %325 = vmatpush1.xpose.msra.mxu0 0.0
    %326 = vmatprep.subr.mxu0 0.0
    %327 = vmatpush1.xpose.msra.mxu0 0.0
    %328 = vmatprep.subr.mxu0 0.0
    %329 = vmatpush1.xpose.msra.mxu0 0.0
    %330 = vmatprep.subr.mxu0 0.0
    %331 = vmatpush1.xpose.msra.mxu0 0.0
    %332 = vmatprep.subr.mxu0 0.0
    %333 = vmatpush1.xpose.msra.mxu0 0.0
    %334 = vmatprep.subr.mxu0 0.0
    %335 = vmatpush1.xpose.msra.mxu0 0.0
    %336 = vmatprep.subr.mxu0 0.0
    %337 = vmatpush1.xpose.msra.mxu0 0.0
    %338 = vmatprep.subr.mxu0 0.0
    %339 = vmatpush1.xpose.msra.mxu0 0.0
    %340 = vmatprep.subr.mxu0 0.0
    %341 = vmatpush1.xpose.msra.mxu0 0.0
    %342 = vmatprep.subr.mxu0 0.0
    %343 = vmatpush1.xpose.msra.mxu0 0.0
    %344 = vmatprep.subr.mxu0 0.0
    %345 = vmatpush1.xpose.msra.mxu0 0.0
    %346 = vmatprep.subr.mxu0 0.0
    %347 = vmatpush1.xpose.msra.mxu0 0.0
    %348 = vmatprep.subr.mxu0 0.0
    %349 = vmatpush1.xpose.msra.mxu0 0.0
    %350 = vmatprep.subr.mxu0 0.0
    %351 = vmatpush1.xpose.msra.mxu0 0.0
    %352 = vmatprep.subr.mxu0 0.0
    %353 = vmatpush1.xpose.msra.mxu0 0.0
    %354 = vmatprep.subr.mxu0 0.0
    %355 = vmatpush1.xpose.msra.mxu0 0.0
    %356 = vmatprep.subr.mxu0 0.0
    %357 = vmatpush1.xpose.msra.mxu0 0.0
    %358 = vmatprep.subr.mxu0 0.0
    %359 = vmatpush1.xpose.msra.mxu0 0.0
    %360 = vmatprep.subr.mxu0 0.0
    %361 = vmatpush1.xpose.msra.mxu0 0.0
    %362 = vmatprep.subr.mxu0 0.0
    %363 = vmatpush1.xpose.msra.mxu0 0.0
    %364 = vmatprep.subr.mxu0 0.0
    %365 = vmatpush1.xpose.msra.mxu0 0.0
    %366 = vmatprep.subr.mxu0 0.0
    %367 = vmatpush1.xpose.msra.mxu0 0.0
    %368 = vmatprep.subr.mxu0 0.0
    %369 = vmatpush1.xpose.msra.mxu0 0.0
    %370 = vmatprep.subr.mxu0 0.0
    %371 = vmatpush1.xpose.msra.mxu0 0.0
    %372 = vmatprep.subr.mxu0 0.0
    %373 = vmatpush1.xpose.msra.mxu0 0.0
    %374 = vmatprep.subr.mxu0 0.0
    %375 = vmatpush1.xpose.msra.mxu0 0.0
    %376 = vmatprep.subr.mxu0 0.0
    %377 = vmatpush1.xpose.msra.mxu0 0.0
    %378 = vmatprep.subr.mxu0 0.0
    %379 = vmatpush1.xpose.msra.mxu0 0.0
    %380 = vmatprep.subr.mxu0 0.0
    %381 = vmatpush1.xpose.msra.mxu0 0.0
    %382 = vmatprep.mubr.f32.mxu0 0.0
    %383 = vmatmul.mubr.f32.gmra.mrb[0].mxu0 %v310
    %v384 = vpop.f32.mrb[0].mxu0
    %v385 = vadd.f32 %v127, %v384
    %v386 = vpop.f32.mrb[0].mxu0
    %387 = vmatprep.mubr.f32.mxu0 0.0
    %388 = vmatmul.mubr.f32.gmra.mrb[0].mxu0 %v312
    %v389 = vpop.f32.mrb[0].mxu0
    %v390 = vadd.f32 %v128, %v389
    %v391 = vpop.f32.mrb[0].mxu0
    %392 = vdwg.mxu0
    %393 = vrot.lane.b32.xlu0 %v294, 96
    %v394 = vpop.permute.xlu0 %393
    %395 = vrot.lane.b32.xlu0 %v296, 96
    %v396 = vpop.permute.xlu0 %395
    %v397 = vsel %vm309, %v294, 0
    %v399 = vsel %vm309, %v296, 0
    %v401 = vsel %vm309, %v394, 0
    %v403 = vsel %vm309, %v396, 0
    %405 = vmatprep.subr.mxu0 0.0
    %406 = vmatpush1.xpose.msra.mxu0 %v401
    %407 = vmatprep.subr.mxu0 0.0
    %408 = vmatpush1.xpose.msra.mxu0 %v403
    %409 = vmatprep.subr.mxu0 0.0
    %410 = vmatpush1.xpose.msra.mxu0 0.0
    %411 = vmatprep.subr.mxu0 0.0
    %412 = vmatpush1.xpose.msra.mxu0 0.0
    %413 = vmatprep.subr.mxu0 0.0
    %414 = vmatpush1.xpose.msra.mxu0 0.0
    %415 = vmatprep.subr.mxu0 0.0
    %416 = vmatpush1.xpose.msra.mxu0 0.0
    %417 = vmatprep.subr.mxu0 0.0
    %418 = vmatpush1.xpose.msra.mxu0 0.0
    %419 = vmatprep.subr.mxu0 0.0
    %420 = vmatpush1.xpose.msra.mxu0 0.0
    %421 = vmatprep.subr.mxu0 0.0
    %422 = vmatpush1.xpose.msra.mxu0 0.0
    %423 = vmatprep.subr.mxu0 0.0
    %424 = vmatpush1.xpose.msra.mxu0 0.0
    %425 = vmatprep.subr.mxu0 0.0
    %426 = vmatpush1.xpose.msra.mxu0 0.0
    %427 = vmatprep.subr.mxu0 0.0
    %428 = vmatpush1.xpose.msra.mxu0 0.0
    %429 = vmatprep.subr.mxu0 0.0
    %430 = vmatpush1.xpose.msra.mxu0 0.0
    %431 = vmatprep.subr.mxu0 0.0
    %432 = vmatpush1.xpose.msra.mxu0 0.0
    %433 = vmatprep.subr.mxu0 0.0
    %434 = vmatpush1.xpose.msra.mxu0 0.0
    %435 = vmatprep.subr.mxu0 0.0
    %436 = vmatpush1.xpose.msra.mxu0 0.0
    %437 = vmatprep.subr.mxu0 0.0
    %438 = vmatpush1.xpose.msra.mxu0 0.0
    %439 = vmatprep.subr.mxu0 0.0
    %440 = vmatpush1.xpose.msra.mxu0 0.0
    %441 = vmatprep.subr.mxu0 0.0
    %442 = vmatpush1.xpose.msra.mxu0 0.0
    %443 = vmatprep.subr.mxu0 0.0
    %444 = vmatpush1.xpose.msra.mxu0 0.0
    %445 = vmatprep.subr.mxu0 0.0
    %446 = vmatpush1.xpose.msra.mxu0 0.0
    %447 = vmatprep.subr.mxu0 0.0
    %448 = vmatpush1.xpose.msra.mxu0 0.0
    %449 = vmatprep.subr.mxu0 0.0
    %450 = vmatpush1.xpose.msra.mxu0 0.0
    %451 = vmatprep.subr.mxu0 0.0
    %452 = vmatpush1.xpose.msra.mxu0 0.0
    %453 = vmatprep.subr.mxu0 0.0
    %454 = vmatpush1.xpose.msra.mxu0 0.0
    %455 = vmatprep.subr.mxu0 0.0
    %456 = vmatpush1.xpose.msra.mxu0 0.0
    %457 = vmatprep.subr.mxu0 0.0
    %458 = vmatpush1.xpose.msra.mxu0 0.0
    %459 = vmatprep.subr.mxu0 0.0
    %460 = vmatpush1.xpose.msra.mxu0 0.0
    %461 = vmatprep.subr.mxu0 0.0
    %462 = vmatpush1.xpose.msra.mxu0 0.0
    %463 = vmatprep.subr.mxu0 0.0
    %464 = vmatpush1.xpose.msra.mxu0 0.0
    %465 = vmatprep.subr.mxu0 0.0
    %466 = vmatpush1.xpose.msra.mxu0 0.0
    %467 = vmatprep.subr.mxu0 0.0
    %468 = vmatpush1.xpose.msra.mxu0 0.0
    %469 = vmatprep.mubr.f32.mxu0 0.0
    %470 = vmatmul.mubr.f32.gmra.mrb[0].mxu0 %v397
    %v471 = vpop.f32.mrb[0].mxu0
    %v472 = vadd.f32 %v129, %v471
    %v473 = vpop.f32.mrb[0].mxu0
    %474 = vmatprep.mubr.f32.mxu0 0.0
    %475 = vmatmul.mubr.f32.gmra.mrb[0].mxu0 %v399
    %v476 = vpop.f32.mrb[0].mxu0
    %v477 = vadd.f32 %v130, %v476
    %v478 = vpop.f32.mrb[0].mxu0
    %479 = vdwg.mxu0
    %480 = vrot.lane.b32.xlu0 %v298, 96
    %v481 = vpop.permute.xlu0 %480
    %482 = vrot.lane.b32.xlu0 %v300, 96
    %v483 = vpop.permute.xlu0 %482
    %v484 = vsel %vm309, %v298, 0
    %v486 = vsel %vm309, %v300, 0
    %v488 = vsel %vm309, %v481, 0
    %v490 = vsel %vm309, %v483, 0
    %492 = vmatprep.subr.mxu0 0.0
    %493 = vmatpush1.xpose.msra.mxu0 %v488
    %494 = vmatprep.subr.mxu0 0.0
    %495 = vmatpush1.xpose.msra.mxu0 %v490
    %496 = vmatprep.subr.mxu0 0.0
    %497 = vmatpush1.xpose.msra.mxu0 0.0
    %498 = vmatprep.subr.mxu0 0.0
    %499 = vmatpush1.xpose.msra.mxu0 0.0
    %500 = vmatprep.subr.mxu0 0.0
    %501 = vmatpush1.xpose.msra.mxu0 0.0
    %502 = vmatprep.subr.mxu0 0.0
    %503 = vmatpush1.xpose.msra.mxu0 0.0
    %504 = vmatprep.subr.mxu0 0.0
    %505 = vmatpush1.xpose.msra.mxu0 0.0
    %506 = vmatprep.subr.mxu0 0.0
    %507 = vmatpush1.xpose.msra.mxu0 0.0
    %508 = vmatprep.subr.mxu0 0.0
    %509 = vmatpush1.xpose.msra.mxu0 0.0
    %510 = vmatprep.subr.mxu0 0.0
    %511 = vmatpush1.xpose.msra.mxu0 0.0
    %512 = vmatprep.subr.mxu0 0.0
    %513 = vmatpush1.xpose.msra.mxu0 0.0
    %514 = vmatprep.subr.mxu0 0.0
    %515 = vmatpush1.xpose.msra.mxu0 0.0
    %516 = vmatprep.subr.mxu0 0.0
    %517 = vmatpush1.xpose.msra.mxu0 0.0
    %518 = vmatprep.subr.mxu0 0.0
    %519 = vmatpush1.xpose.msra.mxu0 0.0
    %520 = vmatprep.subr.mxu0 0.0
    %521 = vmatpush1.xpose.msra.mxu0 0.0
    %522 = vmatprep.subr.mxu0 0.0
    %523 = vmatpush1.xpose.msra.mxu0 0.0
    %524 = vmatprep.subr.mxu0 0.0
    %525 = vmatpush1.xpose.msra.mxu0 0.0
    %526 = vmatprep.subr.mxu0 0.0
    %527 = vmatpush1.xpose.msra.mxu0 0.0
    %528 = vmatprep.subr.mxu0 0.0
    %529 = vmatpush1.xpose.msra.mxu0 0.0
    %530 = vmatprep.subr.mxu0 0.0
    %531 = vmatpush1.xpose.msra.mxu0 0.0
    %532 = vmatprep.subr.mxu0 0.0
    %533 = vmatpush1.xpose.msra.mxu0 0.0
    %534 = vmatprep.subr.mxu0 0.0
    %535 = vmatpush1.xpose.msra.mxu0 0.0
    %536 = vmatprep.subr.mxu0 0.0
    %537 = vmatpush1.xpose.msra.mxu0 0.0
    %538 = vmatprep.subr.mxu0 0.0
    %539 = vmatpush1.xpose.msra.mxu0 0.0
    %540 = vmatprep.subr.mxu0 0.0
    %541 = vmatpush1.xpose.msra.mxu0 0.0
    %542 = vmatprep.subr.mxu0 0.0
    %543 = vmatpush1.xpose.msra.mxu0 0.0
    %544 = vmatprep.subr.mxu0 0.0
    %545 = vmatpush1.xpose.msra.mxu0 0.0
    %546 = vmatprep.subr.mxu0 0.0
    %547 = vmatpush1.xpose.msra.mxu0 0.0
    %548 = vmatprep.subr.mxu0 0.0
    %549 = vmatpush1.xpose.msra.mxu0 0.0
    %550 = vmatprep.subr.mxu0 0.0
    %551 = vmatpush1.xpose.msra.mxu0 0.0
    %552 = vmatprep.subr.mxu0 0.0
    %553 = vmatpush1.xpose.msra.mxu0 0.0
    %554 = vmatprep.subr.mxu0 0.0
    %555 = vmatpush1.xpose.msra.mxu0 0.0
    %556 = vmatprep.mubr.f32.mxu0 0.0
    %557 = vmatmul.mubr.f32.gmra.mrb[0].mxu0 %v484
    %v558 = vpop.f32.mrb[0].mxu0
    %v559 = vadd.f32 %v131, %v558
    %v560 = vpop.f32.mrb[0].mxu0
    %561 = vmatprep.mubr.f32.mxu0 0.0
    %562 = vmatmul.mubr.f32.gmra.mrb[0].mxu0 %v486
    %v563 = vpop.f32.mrb[0].mxu0
    %v564 = vadd.f32 %v132, %v563
    %v565 = vpop.f32.mrb[0].mxu0
    %566 = vdwg.mxu0
    %567 = vrot.lane.b32.xlu0 %v302, 96
    %v568 = vpop.permute.xlu0 %567
    %569 = vrot.lane.b32.xlu0 %v304, 96
    %v570 = vpop.permute.xlu0 %569
    %v571 = vsel %vm309, %v302, 0
    %v573 = vsel %vm309, %v304, 0
    %v575 = vsel %vm309, %v568, 0
    %v577 = vsel %vm309, %v570, 0
    %579 = vmatprep.subr.mxu0 0.0
    %580 = vmatpush1.xpose.msra.mxu0 %v575
    %581 = vmatprep.subr.mxu0 0.0
    %582 = vmatpush1.xpose.msra.mxu0 %v577
    %583 = vmatprep.subr.mxu0 0.0
    %584 = vmatpush1.xpose.msra.mxu0 0.0
    %585 = vmatprep.subr.mxu0 0.0
    %586 = vmatpush1.xpose.msra.mxu0 0.0
    %587 = vmatprep.subr.mxu0 0.0
    %588 = vmatpush1.xpose.msra.mxu0 0.0
    %589 = vmatprep.subr.mxu0 0.0
    %590 = vmatpush1.xpose.msra.mxu0 0.0
    %591 = vmatprep.subr.mxu0 0.0
    %592 = vmatpush1.xpose.msra.mxu0 0.0
    %593 = vmatprep.subr.mxu0 0.0
    %594 = vmatpush1.xpose.msra.mxu0 0.0
    %595 = vmatprep.subr.mxu0 0.0
    %596 = vmatpush1.xpose.msra.mxu0 0.0
    %597 = vmatprep.subr.mxu0 0.0
    %598 = vmatpush1.xpose.msra.mxu0 0.0
    %599 = vmatprep.subr.mxu0 0.0
    %600 = vmatpush1.xpose.msra.mxu0 0.0
    %601 = vmatprep.subr.mxu0 0.0
    %602 = vmatpush1.xpose.msra.mxu0 0.0
    %603 = vmatprep.subr.mxu0 0.0
    %604 = vmatpush1.xpose.msra.mxu0 0.0
    %605 = vmatprep.subr.mxu0 0.0
    %606 = vmatpush1.xpose.msra.mxu0 0.0
    %607 = vmatprep.subr.mxu0 0.0
    %608 = vmatpush1.xpose.msra.mxu0 0.0
    %609 = vmatprep.subr.mxu0 0.0
    %610 = vmatpush1.xpose.msra.mxu0 0.0
    %611 = vmatprep.subr.mxu0 0.0
    %612 = vmatpush1.xpose.msra.mxu0 0.0
    %613 = vmatprep.subr.mxu0 0.0
    %614 = vmatpush1.xpose.msra.mxu0 0.0
    %615 = vmatprep.subr.mxu0 0.0
    %616 = vmatpush1.xpose.msra.mxu0 0.0
    %617 = vmatprep.subr.mxu0 0.0
    %618 = vmatpush1.xpose.msra.mxu0 0.0
    %619 = vmatprep.subr.mxu0 0.0
    %620 = vmatpush1.xpose.msra.mxu0 0.0
    %621 = vmatprep.subr.mxu0 0.0
    %622 = vmatpush1.xpose.msra.mxu0 0.0
    %623 = vmatprep.subr.mxu0 0.0
    %624 = vmatpush1.xpose.msra.mxu0 0.0
    %625 = vmatprep.subr.mxu0 0.0
    %626 = vmatpush1.xpose.msra.mxu0 0.0
    %627 = vmatprep.subr.mxu0 0.0
    %628 = vmatpush1.xpose.msra.mxu0 0.0
    %629 = vmatprep.subr.mxu0 0.0
    %630 = vmatpush1.xpose.msra.mxu0 0.0
    %631 = vmatprep.subr.mxu0 0.0
    %632 = vmatpush1.xpose.msra.mxu0 0.0
    %633 = vmatprep.subr.mxu0 0.0
    %634 = vmatpush1.xpose.msra.mxu0 0.0
    %635 = vmatprep.subr.mxu0 0.0
    %636 = vmatpush1.xpose.msra.mxu0 0.0
    %637 = vmatprep.subr.mxu0 0.0
    %638 = vmatpush1.xpose.msra.mxu0 0.0
    %639 = vmatprep.subr.mxu0 0.0
    %640 = vmatpush1.xpose.msra.mxu0 0.0
    %641 = vmatprep.subr.mxu0 0.0
    %642 = vmatpush1.xpose.msra.mxu0 0.0
    %643 = vmatprep.mubr.f32.mxu0 0.0
    %644 = vmatmul.mubr.f32.gmra.mrb[0].mxu0 %v571
    %v645 = vpop.f32.mrb[0].mxu0
    %v646 = vadd.f32 %v133, %v645
    %v647 = vpop.f32.mrb[0].mxu0
    %648 = vmatprep.mubr.f32.mxu0 0.0
    %649 = vmatmul.mubr.f32.gmra.mrb[0].mxu0 %v573
    %v650 = vpop.f32.mrb[0].mxu0
    %v651 = vadd.f32 %v134, %v650
    %v652 = vpop.f32.mrb[0].mxu0
    %653 = vdwg.mxu0
    %vm654 = vcmask 130048
    %v655 = vsel %vm654, %v385, -inf
    %656 = vmax.xlane.f32.xlu0 %v655
    %v657 = vpop.xlane.xlu0 %656
    %v658 = vsel %vm654, %v390, -inf
    %659 = vmax.xlane.f32.xlu0 %v658
    %v660 = vpop.xlane.xlu0 %659
    %v661 = vsel %vm654, %v472, -inf
    %662 = vmax.xlane.f32.xlu0 %v661
    %v663 = vpop.xlane.xlu0 %662
    %v664 = vsel %vm654, %v477, -inf
    %665 = vmax.xlane.f32.xlu0 %v664
    %v666 = vpop.xlane.xlu0 %665
    %v667 = vsel %vm654, %v559, -inf
    %668 = vmax.xlane.f32.xlu0 %v667
    %v669 = vpop.xlane.xlu0 %668
    %v670 = vsel %vm654, %v564, -inf
    %671 = vmax.xlane.f32.xlu0 %v670
    %v672 = vpop.xlane.xlu0 %671
    %v673 = vsel %vm654, %v646, -inf
    %674 = vmax.xlane.f32.xlu0 %v673
    %v675 = vpop.xlane.xlu0 %674
    %v676 = vsel %vm654, %v651, -inf
    %677 = vmax.xlane.f32.xlu0 %v676
    %v678 = vpop.xlane.xlu0 %677
    %v679 = vsub.f32 %v385, %v657
    %v680 = vsub.f32 %v390, %v660
    %v681 = vsub.f32 %v472, %v663
    %v682 = vsub.f32 %v477, %v666
    %v683 = vsub.f32 %v559, %v669
    %v684 = vsub.f32 %v564, %v672
    %v685 = vsub.f32 %v646, %v675
    %v686 = vsub.f32 %v651, %v678
    %v687 = vmul.f32 %v679, 1.442695
    %v688 = vpow.pop %v687
    %v689 = vmul.f32 %v680, 1.442695
    %v690 = vpow.pop %v689
    %v691 = vmul.f32 %v681, 1.442695
    %v692 = vpow.pop %v691
    %v693 = vmul.f32 %v682, 1.442695
    %v694 = vpow.pop %v693
    %v695 = vmul.f32 %v683, 1.442695
    %v696 = vpow.pop %v695
    %v697 = vmul.f32 %v684, 1.442695
    %v698 = vpow.pop %v697
    %v699 = vmul.f32 %v685, 1.442695
    %v700 = vpow.pop %v699
    %v701 = vmul.f32 %v686, 1.442695
    %v702 = vpow.pop %v701
    %v703 = vsel %vm654, %v688, 0.0
    %704 = vadd.xlane.f32.xlu0 %v703
    %v705 = vpop.xlane.xlu0 %704
    %v706 = vsel %vm654, %v690, 0.0
    %707 = vadd.xlane.f32.xlu0 %v706
    %v708 = vpop.xlane.xlu0 %707
    %v709 = vsel %vm654, %v692, 0.0
    %710 = vadd.xlane.f32.xlu0 %v709
    %v711 = vpop.xlane.xlu0 %710
    %v712 = vsel %vm654, %v694, 0.0
    %713 = vadd.xlane.f32.xlu0 %v712
    %v714 = vpop.xlane.xlu0 %713
    %v715 = vsel %vm654, %v696, 0.0
    %716 = vadd.xlane.f32.xlu0 %v715
    %v717 = vpop.xlane.xlu0 %716
    %v718 = vsel %vm654, %v698, 0.0
    %719 = vadd.xlane.f32.xlu0 %v718
    %v720 = vpop.xlane.xlu0 %719
    %v721 = vsel %vm654, %v700, 0.0
    %722 = vadd.xlane.f32.xlu0 %v721
    %v723 = vpop.xlane.xlu0 %722
    %v724 = vsel %vm654, %v702, 0.0
    %725 = vadd.xlane.f32.xlu0 %v724
    %v726 = vpop.xlane.xlu0 %725
    %v727 = vrcp.pop %v705
    %v728 = vrcp.pop %v708
    %v729 = vrcp.pop %v711
    %v730 = vrcp.pop %v714
    %v731 = vrcp.pop %v717
    %v732 = vrcp.pop %v720
    %v733 = vrcp.pop %v723
    %v734 = vrcp.pop %v726
    %v735 = vmul.f32 %v688, %v727
    %v736 = vmul.f32 %v690, %v728
    %v737 = vmul.f32 %v692, %v729
    %v738 = vmul.f32 %v694, %v730
    %v739 = vmul.f32 %v696, %v731
    %v740 = vmul.f32 %v698, %v732
    %v741 = vmul.f32 %v700, %v733
    %v742 = vmul.f32 %v702, %v734
    %743 = vrot.lane.b32.xlu0 %v283, 64
    %v744 = vpop.permute.xlu0 %743
    %745 = vrot.lane.b32.xlu0 %v288, 64
    %v746 = vpop.permute.xlu0 %745
    %v750 = vsel %vm654, %v735, 0
    %v753 = vsel %vm654, %v736, 0
    %755 = vmatprep.subr.mxu0 0.0
    %756 = vmatpush1.msra.mxu0 %v744
    %757 = vmatprep.subr.mxu0 0.0
    %758 = vmatpush1.msra.mxu0 %v746
    %759 = vmatprep.subr.mxu0 0.0
    %760 = vmatpush1.msra.mxu0 0.0
    %761 = vmatprep.subr.mxu0 0.0
    %762 = vmatpush1.msra.mxu0 0.0
    %763 = vmatprep.subr.mxu0 0.0
    %764 = vmatpush1.msra.mxu0 0.0
    %765 = vmatprep.subr.mxu0 0.0
    %766 = vmatpush1.msra.mxu0 0.0
    %767 = vmatprep.subr.mxu0 0.0
    %768 = vmatpush1.msra.mxu0 0.0
    %769 = vmatprep.subr.mxu0 0.0
    %770 = vmatpush1.msra.mxu0 0.0
    %771 = vmatprep.subr.mxu0 0.0
    %772 = vmatpush1.msra.mxu0 0.0
    %773 = vmatprep.subr.mxu0 0.0
    %774 = vmatpush1.msra.mxu0 0.0
    %775 = vmatprep.subr.mxu0 0.0
    %776 = vmatpush1.msra.mxu0 0.0
    %777 = vmatprep.subr.mxu0 0.0
    %778 = vmatpush1.msra.mxu0 0.0
    %779 = vmatprep.subr.mxu0 0.0
    %780 = vmatpush1.msra.mxu0 0.0
    %781 = vmatprep.subr.mxu0 0.0
    %782 = vmatpush1.msra.mxu0 0.0
    %783 = vmatprep.subr.mxu0 0.0
    %784 = vmatpush1.msra.mxu0 0.0
    %785 = vmatprep.subr.mxu0 0.0
    %786 = vmatpush1.msra.mxu0 0.0
    %787 = vmatprep.subr.mxu0 0.0
    %788 = vmatpush1.msra.mxu0 0.0
    %789 = vmatprep.subr.mxu0 0.0
    %790 = vmatpush1.msra.mxu0 0.0
    %791 = vmatprep.subr.mxu0 0.0
    %792 = vmatpush1.msra.mxu0 0.0
    %793 = vmatprep.subr.mxu0 0.0
    %794 = vmatpush1.msra.mxu0 0.0
    %795 = vmatprep.subr.mxu0 0.0
    %796 = vmatpush1.msra.mxu0 0.0
    %797 = vmatprep.subr.mxu0 0.0
    %798 = vmatpush1.msra.mxu0 0.0
    %799 = vmatprep.subr.mxu0 0.0
    %800 = vmatpush1.msra.mxu0 0.0
    %801 = vmatprep.subr.mxu0 0.0
    %802 = vmatpush1.msra.mxu0 0.0
    %803 = vmatprep.subr.mxu0 0.0
    %804 = vmatpush1.msra.mxu0 0.0
    %805 = vmatprep.subr.mxu0 0.0
    %806 = vmatpush1.msra.mxu0 0.0
    %807 = vmatprep.subr.mxu0 0.0
    %808 = vmatpush1.msra.mxu0 0.0
    %809 = vmatprep.subr.mxu0 0.0
    %810 = vmatpush1.msra.mxu0 0.0
    %811 = vmatprep.subr.mxu0 0.0
    %812 = vmatpush1.msra.mxu0 0.0
    %813 = vmatprep.subr.mxu0 0.0
    %814 = vmatpush1.msra.mxu0 0.0
    %815 = vmatprep.subr.mxu0 0.0
    %816 = vmatpush1.msra.mxu0 0.0
    %817 = vmatprep.subr.mxu0 0.0
    %818 = vmatpush1.msra.mxu0 0.0
    %819 = vmatprep.mubr.f32.mxu0 0.0
    %820 = vmatmul.mubr.f32.gmra.mrb[0].mxu0 %v750
    %v821 = vpop.f32.mrb[0].mxu0
    %v822 = vadd.f32 0.0, %v821
    %v823 = vpop.f32.mrb[0].mxu0
    %824 = vmatprep.mubr.f32.mxu0 0.0
    %825 = vmatmul.mubr.f32.gmra.mrb[0].mxu0 %v753
    %v826 = vpop.f32.mrb[0].mxu0
    %v827 = vadd.f32 0.0, %v826
    %v828 = vpop.f32.mrb[0].mxu0
    %829 = vdwg.mxu0
    %830 = vrot.lane.b32.xlu0 %v294, 64
    %v831 = vpop.permute.xlu0 %830
    %832 = vrot.lane.b32.xlu0 %v296, 64
    %v833 = vpop.permute.xlu0 %832
    %v837 = vsel %vm654, %v737, 0
    %v840 = vsel %vm654, %v738, 0
    %842 = vmatprep.subr.mxu0 0.0
    %843 = vmatpush1.msra.mxu0 %v831
    %844 = vmatprep.subr.mxu0 0.0
    %845 = vmatpush1.msra.mxu0 %v833
    %846 = vmatprep.subr.mxu0 0.0
    %847 = vmatpush1.msra.mxu0 0.0
    %848 = vmatprep.subr.mxu0 0.0
    %849 = vmatpush1.msra.mxu0 0.0
    %850 = vmatprep.subr.mxu0 0.0
    %851 = vmatpush1.msra.mxu0 0.0
    %852 = vmatprep.subr.mxu0 0.0
    %853 = vmatpush1.msra.mxu0 0.0
    %854 = vmatprep.subr.mxu0 0.0
    %855 = vmatpush1.msra.mxu0 0.0
    %856 = vmatprep.subr.mxu0 0.0
    %857 = vmatpush1.msra.mxu0 0.0
    %858 = vmatprep.subr.mxu0 0.0
    %859 = vmatpush1.msra.mxu0 0.0
    %860 = vmatprep.subr.mxu0 0.0
    %861 = vmatpush1.msra.mxu0 0.0
    %862 = vmatprep.subr.mxu0 0.0
    %863 = vmatpush1.msra.mxu0 0.0
    %864 = vmatprep.subr.mxu0 0.0
    %865 = vmatpush1.msra.mxu0 0.0
    %866 = vmatprep.subr.mxu0 0.0
    %867 = vmatpush1.msra.mxu0 0.0
    %868 = vmatprep.subr.mxu0 0.0
    %869 = vmatpush1.msra.mxu0 0.0
    %870 = vmatprep.subr.mxu0 0.0
    %871 = vmatpush1.msra.mxu0 0.0
    %872 = vmatprep.subr.mxu0 0.0
    %873 = vmatpush1.msra.mxu0 0.0
    %874 = vmatprep.subr.mxu0 0.0
    %875 = vmatpush1.msra.mxu0 0.0
    %876 = vmatprep.subr.mxu0 0.0
    %877 = vmatpush1.msra.mxu0 0.0
    %878 = vmatprep.subr.mxu0 0.0
    %879 = vmatpush1.msra.mxu0 0.0
    %880 = vmatprep.subr.mxu0 0.0
    %881 = vmatpush1.msra.mxu0 0.0
    %882 = vmatprep.subr.mxu0 0.0
    %883 = vmatpush1.msra.mxu0 0.0
    %884 = vmatprep.subr.mxu0 0.0
    %885 = vmatpush1.msra.mxu0 0.0
    %886 = vmatprep.subr.mxu0 0.0
    %887 = vmatpush1.msra.mxu0 0.0
    %888 = vmatprep.subr.mxu0 0.0
    %889 = vmatpush1.msra.mxu0 0.0
    %890 = vmatprep.subr.mxu0 0.0
    %891 = vmatpush1.msra.mxu0 0.0
    %892 = vmatprep.subr.mxu0 0.0
    %893 = vmatpush1.msra.mxu0 0.0
    %894 = vmatprep.subr.mxu0 0.0
    %895 = vmatpush1.msra.mxu0 0.0
    %896 = vmatprep.subr.mxu0 0.0
    %897 = vmatpush1.msra.mxu0 0.0
    %898 = vmatprep.subr.mxu0 0.0
    %899 = vmatpush1.msra.mxu0 0.0
    %900 = vmatprep.subr.mxu0 0.0
    %901 = vmatpush1.msra.mxu0 0.0
    %902 = vmatprep.subr.mxu0 0.0
    %903 = vmatpush1.msra.mxu0 0.0
    %904 = vmatprep.subr.mxu0 0.0
    %905 = vmatpush1.msra.mxu0 0.0
    %906 = vmatprep.mubr.f32.mxu0 0.0
    %907 = vmatmul.mubr.f32.gmra.mrb[0].mxu0 %v837
    %v908 = vpop.f32.mrb[0].mxu0
    %v909 = vadd.f32 0.0, %v908
    %v910 = vpop.f32.mrb[0].mxu0
    %911 = vmatprep.mubr.f32.mxu0 0.0
    %912 = vmatmul.mubr.f32.gmra.mrb[0].mxu0 %v840
    %v913 = vpop.f32.mrb[0].mxu0
    %v914 = vadd.f32 0.0, %v913
    %v915 = vpop.f32.mrb[0].mxu0
    %916 = vdwg.mxu0
    %917 = vrot.lane.b32.xlu0 %v298, 64
    %v918 = vpop.permute.xlu0 %917
    %919 = vrot.lane.b32.xlu0 %v300, 64
    %v920 = vpop.permute.xlu0 %919
    %v924 = vsel %vm654, %v739, 0
    %v927 = vsel %vm654, %v740, 0
    %929 = vmatprep.subr.mxu0 0.0
    %930 = vmatpush1.msra.mxu0 %v918
    %931 = vmatprep.subr.mxu0 0.0
    %932 = vmatpush1.msra.mxu0 %v920
    %933 = vmatprep.subr.mxu0 0.0
    %934 = vmatpush1.msra.mxu0 0.0
    %935 = vmatprep.subr.mxu0 0.0
    %936 = vmatpush1.msra.mxu0 0.0
    %937 = vmatprep.subr.mxu0 0.0
    %938 = vmatpush1.msra.mxu0 0.0
    %939 = vmatprep.subr.mxu0 0.0
    %940 = vmatpush1.msra.mxu0 0.0
    %941 = vmatprep.subr.mxu0 0.0
    %942 = vmatpush1.msra.mxu0 0.0
    %943 = vmatprep.subr.mxu0 0.0
    %944 = vmatpush1.msra.mxu0 0.0
    %945 = vmatprep.subr.mxu0 0.0
    %946 = vmatpush1.msra.mxu0 0.0
    %947 = vmatprep.subr.mxu0 0.0
    %948 = vmatpush1.msra.mxu0 0.0
    %949 = vmatprep.subr.mxu0 0.0
    %950 = vmatpush1.msra.mxu0 0.0
    %951 = vmatprep.subr.mxu0 0.0
    %952 = vmatpush1.msra.mxu0 0.0
    %953 = vmatprep.subr.mxu0 0.0
    %954 = vmatpush1.msra.mxu0 0.0
    %955 = vmatprep.subr.mxu0 0.0
    %956 = vmatpush1.msra.mxu0 0.0
    %957 = vmatprep.subr.mxu0 0.0
    %958 = vmatpush1.msra.mxu0 0.0
    %959 = vmatprep.subr.mxu0 0.0
    %960 = vmatpush1.msra.mxu0 0.0
    %961 = vmatprep.subr.mxu0 0.0
    %962 = vmatpush1.msra.mxu0 0.0
    %963 = vmatprep.subr.mxu0 0.0
    %964 = vmatpush1.msra.mxu0 0.0
    %965 = vmatprep.subr.mxu0 0.0
    %966 = vmatpush1.msra.mxu0 0.0
    %967 = vmatprep.subr.mxu0 0.0
    %968 = vmatpush1.msra.mxu0 0.0
    %969 = vmatprep.subr.mxu0 0.0
    %970 = vmatpush1.msra.mxu0 0.0
    %971 = vmatprep.subr.mxu0 0.0
    %972 = vmatpush1.msra.mxu0 0.0
    %973 = vmatprep.subr.mxu0 0.0
    %974 = vmatpush1.msra.mxu0 0.0
    %975 = vmatprep.subr.mxu0 0.0
    %976 = vmatpush1.msra.mxu0 0.0
    %977 = vmatprep.subr.mxu0 0.0
    %978 = vmatpush1.msra.mxu0 0.0
    %979 = vmatprep.subr.mxu0 0.0
    %980 = vmatpush1.msra.mxu0 0.0
    %981 = vmatprep.subr.mxu0 0.0
    %982 = vmatpush1.msra.mxu0 0.0
    %983 = vmatprep.subr.mxu0 0.0
    %984 = vmatpush1.msra.mxu0 0.0
    %985 = vmatprep.subr.mxu0 0.0
    %986 = vmatpush1.msra.mxu0 0.0
    %987 = vmatprep.subr.mxu0 0.0
    %988 = vmatpush1.msra.mxu0 0.0
    %989 = vmatprep.subr.mxu0 0.0
    %990 = vmatpush1.msra.mxu0 0.0
    %991 = vmatprep.subr.mxu0 0.0
    %992 = vmatpush1.msra.mxu0 0.0
    %993 = vmatprep.mubr.f32.mxu0 0.0
    %994 = vmatmul.mubr.f32.gmra.mrb[0].mxu0 %v924
    %v995 = vpop.f32.mrb[0].mxu0
    %v996 = vadd.f32 0.0, %v995
    %v997 = vpop.f32.mrb[0].mxu0
    %998 = vmatprep.mubr.f32.mxu0 0.0
    %999 = vmatmul.mubr.f32.gmra.mrb[0].mxu0 %v927
    %v1000 = vpop.f32.mrb[0].mxu0
    %v1001 = vadd.f32 0.0, %v1000
    %v1002 = vpop.f32.mrb[0].mxu0
    %1003 = vdwg.mxu0
    %1004 = vrot.lane.b32.xlu0 %v302, 64
    %v1005 = vpop.permute.xlu0 %1004
    %1006 = vrot.lane.b32.xlu0 %v304, 64
    %v1007 = vpop.permute.xlu0 %1006
    %v1011 = vsel %vm654, %v741, 0
    %v1014 = vsel %vm654, %v742, 0
    %1016 = vmatprep.subr.mxu0 0.0
    %1017 = vmatpush1.msra.mxu0 %v1005
    %1018 = vmatprep.subr.mxu0 0.0
    %1019 = vmatpush1.msra.mxu0 %v1007
    %1020 = vmatprep.subr.mxu0 0.0
    %1021 = vmatpush1.msra.mxu0 0.0
    %1022 = vmatprep.subr.mxu0 0.0
    %1023 = vmatpush1.msra.mxu0 0.0
    %1024 = vmatprep.subr.mxu0 0.0
    %1025 = vmatpush1.msra.mxu0 0.0
    %1026 = vmatprep.subr.mxu0 0.0
    %1027 = vmatpush1.msra.mxu0 0.0
    %1028 = vmatprep.subr.mxu0 0.0
    %1029 = vmatpush1.msra.mxu0 0.0
    %1030 = vmatprep.subr.mxu0 0.0
    %1031 = vmatpush1.msra.mxu0 0.0
    %1032 = vmatprep.subr.mxu0 0.0
    %1033 = vmatpush1.msra.mxu0 0.0
    %1034 = vmatprep.subr.mxu0 0.0
    %1035 = vmatpush1.msra.mxu0 0.0
    %1036 = vmatprep.subr.mxu0 0.0
    %1037 = vmatpush1.msra.mxu0 0.0
    %1038 = vmatprep.subr.mxu0 0.0
    %1039 = vmatpush1.msra.mxu0 0.0
    %1040 = vmatprep.subr.mxu0 0.0
    %1041 = vmatpush1.msra.mxu0 0.0
    %1042 = vmatprep.subr.mxu0 0.0
    %1043 = vmatpush1.msra.mxu0 0.0
    %1044 = vmatprep.subr.mxu0 0.0
    %1045 = vmatpush1.msra.mxu0 0.0
    %1046 = vmatprep.subr.mxu0 0.0
    %1047 = vmatpush1.msra.mxu0 0.0
    %1048 = vmatprep.subr.mxu0 0.0
    %1049 = vmatpush1.msra.mxu0 0.0
    %1050 = vmatprep.subr.mxu0 0.0
    %1051 = vmatpush1.msra.mxu0 0.0
    %1052 = vmatprep.subr.mxu0 0.0
    %1053 = vmatpush1.msra.mxu0 0.0
    %1054 = vmatprep.subr.mxu0 0.0
    %1055 = vmatpush1.msra.mxu0 0.0
    %1056 = vmatprep.subr.mxu0 0.0
    %1057 = vmatpush1.msra.mxu0 0.0
    %1058 = vmatprep.subr.mxu0 0.0
    %1059 = vmatpush1.msra.mxu0 0.0
    %1060 = vmatprep.subr.mxu0 0.0
    %1061 = vmatpush1.msra.mxu0 0.0
    %1062 = vmatprep.subr.mxu0 0.0
    %1063 = vmatpush1.msra.mxu0 0.0
    %1064 = vmatprep.subr.mxu0 0.0
    %1065 = vmatpush1.msra.mxu0 0.0
    %1066 = vmatprep.subr.mxu0 0.0
    %1067 = vmatpush1.msra.mxu0 0.0
    %1068 = vmatprep.subr.mxu0 0.0
    %1069 = vmatpush1.msra.mxu0 0.0
    %1070 = vmatprep.subr.mxu0 0.0
    %1071 = vmatpush1.msra.mxu0 0.0
    %1072 = vmatprep.subr.mxu0 0.0
    %1073 = vmatpush1.msra.mxu0 0.0
    %1074 = vmatprep.subr.mxu0 0.0
    %1075 = vmatpush1.msra.mxu0 0.0
    %1076 = vmatprep.subr.mxu0 0.0
    %1077 = vmatpush1.msra.mxu0 0.0
    %1078 = vmatprep.subr.mxu0 0.0
    %1079 = vmatpush1.msra.mxu0 0.0
    %1080 = vmatprep.mubr.f32.mxu0 0.0
    %1081 = vmatmul.mubr.f32.gmra.mrb[0].mxu0 %v1011
    %v1082 = vpop.f32.mrb[0].mxu0
    %v1083 = vadd.f32 0.0, %v1082
    %v1084 = vpop.f32.mrb[0].mxu0
    %1085 = vmatprep.mubr.f32.mxu0 0.0
    %1086 = vmatmul.mubr.f32.gmra.mrb[0].mxu0 %v1014
    %v1087 = vpop.f32.mrb[0].mxu0
    %v1088 = vadd.f32 0.0, %v1087
    %v1089 = vpop.f32.mrb[0].mxu0
    %1090 = vdwg.mxu0
    %1093 = vrot.lane.b32.xlu0 %v909, 8
    %v1094 = vpop.permute.xlu0 %1093
    %1095 = vrot.lane.b32.xlu0 %v914, 8
    %v1096 = vpop.permute.xlu0 %1095
    %1101 = vrot.lane.b32.xlu0 %v996, 16
    %v1102 = vpop.permute.xlu0 %1101
    %1103 = vrot.lane.b32.xlu0 %v1001, 16
    %v1104 = vpop.permute.xlu0 %1103
    %1109 = vrot.lane.b32.xlu0 %v1083, 24
    %v1110 = vpop.permute.xlu0 %1109
    %1111 = vrot.lane.b32.xlu0 %v1088, 24
    %v1112 = vpop.permute.xlu0 %1111
    %v1115 = vsel %vm309, %v822, %v1094
    %v1116 = vsel %vm309, %v827, %v1096
    %v1117 = vsel %vm654, %v1115, %v1102
    %v1118 = vsel %vm654, %v1116, %v1104
    %vm1119 = vcmask 195584
    %v1120 = vsel %vm1119, %v1117, %v1110
    %v1121 = vsel %vm1119, %v1118, %v1112
    %v1123 = vsel %vm170, %v1120, 0
    %v1126 = vsel %vm170, %v1121, 0
    %1128 = vmatprep.subr.mxu0 0.0
    %1129 = vmatpush1.msra.mxu0 %v137
    %1130 = vmatprep.subr.mxu0 0.0
    %1131 = vmatpush1.msra.mxu0 %v138
    %1132 = vmatprep.subr.mxu0 0.0
    %1133 = vmatpush1.msra.mxu0 %v139
    %1134 = vmatprep.subr.mxu0 0.0
    %1135 = vmatpush1.msra.mxu0 %v140
    %1136 = vmatprep.subr.mxu0 0.0
    %1137 = vmatpush1.msra.mxu0 0.0
    %1138 = vmatprep.subr.mxu0 0.0
    %1139 = vmatpush1.msra.mxu0 0.0
    %1140 = vmatprep.subr.mxu0 0.0
    %1141 = vmatpush1.msra.mxu0 0.0
    %1142 = vmatprep.subr.mxu0 0.0
    %1143 = vmatpush1.msra.mxu0 0.0
    %1144 = vmatprep.subr.mxu0 0.0
    %1145 = vmatpush1.msra.mxu0 0.0
    %1146 = vmatprep.subr.mxu0 0.0
    %1147 = vmatpush1.msra.mxu0 0.0
    %1148 = vmatprep.subr.mxu0 0.0
    %1149 = vmatpush1.msra.mxu0 0.0
    %1150 = vmatprep.subr.mxu0 0.0
    %1151 = vmatpush1.msra.mxu0 0.0
    %1152 = vmatprep.subr.mxu0 0.0
    %1153 = vmatpush1.msra.mxu0 0.0
    %1154 = vmatprep.subr.mxu0 0.0
    %1155 = vmatpush1.msra.mxu0 0.0
    %1156 = vmatprep.subr.mxu0 0.0
    %1157 = vmatpush1.msra.mxu0 0.0
    %1158 = vmatprep.subr.mxu0 0.0
    %1159 = vmatpush1.msra.mxu0 0.0
    %1160 = vmatprep.subr.mxu0 0.0
    %1161 = vmatpush1.msra.mxu0 0.0
    %1162 = vmatprep.subr.mxu0 0.0
    %1163 = vmatpush1.msra.mxu0 0.0
    %1164 = vmatprep.subr.mxu0 0.0
    %1165 = vmatpush1.msra.mxu0 0.0
    %1166 = vmatprep.subr.mxu0 0.0
    %1167 = vmatpush1.msra.mxu0 0.0
    %1168 = vmatprep.subr.mxu0 0.0
    %1169 = vmatpush1.msra.mxu0 0.0
    %1170 = vmatprep.subr.mxu0 0.0
    %1171 = vmatpush1.msra.mxu0 0.0
    %1172 = vmatprep.subr.mxu0 0.0
    %1173 = vmatpush1.msra.mxu0 0.0
    %1174 = vmatprep.subr.mxu0 0.0
    %1175 = vmatpush1.msra.mxu0 0.0
    %1176 = vmatprep.subr.mxu0 0.0
    %1177 = vmatpush1.msra.mxu0 0.0
    %1178 = vmatprep.subr.mxu0 0.0
    %1179 = vmatpush1.msra.mxu0 0.0
    %1180 = vmatprep.subr.mxu0 0.0
    %1181 = vmatpush1.msra.mxu0 0.0
    %1182 = vmatprep.subr.mxu0 0.0
    %1183 = vmatpush1.msra.mxu0 0.0
    %1184 = vmatprep.subr.mxu0 0.0
    %1185 = vmatpush1.msra.mxu0 0.0
    %1186 = vmatprep.subr.mxu0 0.0
    %1187 = vmatpush1.msra.mxu0 0.0
    %1188 = vmatprep.subr.mxu0 0.0
    %1189 = vmatpush1.msra.mxu0 0.0
    %1190 = vmatprep.subr.mxu0 0.0
    %1191 = vmatpush1.msra.mxu0 0.0
    %1192 = vmatprep.mubr.f32.mxu0 0.0
    %1193 = vmatmul.mubr.f32.gmra.mrb[0].mxu0 %v1123
    %v1194 = vpop.f32.mrb[0].mxu0
    %v1195 = vadd.f32 0.0, %v1194
    %v1196 = vpop.f32.mrb[0].mxu0
    %1197 = vmatprep.mubr.f32.mxu0 0.0
    %1198 = vmatmul.mubr.f32.gmra.mrb[0].mxu0 %v1126
    %v1199 = vpop.f32.mrb[0].mxu0
    %v1200 = vadd.f32 0.0, %v1199
    %v1201 = vpop.f32.mrb[0].mxu0
    %1202 = vdwg.mxu0
    %v1203 = vadd.f32 %v119, %v1195
    %v1204 = vadd.f32 %v124, %v1200
    %v1205 = vlaneseq
    %v1206 = vshrl.u32 %v1205, 7
    %v1207 = vsub.s32 0, %v1206
    %v1208 = vrot.slane %v141, %v1207
    %v1209 = vadd.f32 %v1203, %v1208
    %v1210 = vadd.f32 %v1204, %v1208
    %v1211 = vsel %vm170, %v1209, 0.0
    %1212 = vadd.xlane.f32.xlu0 %v1211
    %v1213 = vpop.xlane.xlu0 %1212
    %v1214 = vsel %vm170, %v1210, 0.0
    %1215 = vadd.xlane.f32.xlu0 %v1214
    %v1216 = vpop.xlane.xlu0 %1215
    %v1217 = vmul.f32 %v1213, %v177
    %v1218 = vmul.f32 %v1216, %v177
    %v1219 = vsub.f32 %v1209, %v1217
    %v1220 = vsub.f32 %v1210, %v1218
    %v1221 = vmul.f32 %v1219, %v1219
    %v1222 = vmul.f32 %v1220, %v1220
    %v1223 = vsel %vm170, %v1221, 0.0
    %1224 = vadd.xlane.f32.xlu0 %v1223
    %v1225 = vpop.xlane.xlu0 %1224
    %v1226 = vsel %vm170, %v1222, 0.0
    %1227 = vadd.xlane.f32.xlu0 %v1226
    %v1228 = vpop.xlane.xlu0 %1227
    %v1229 = vmul.f32 %v1225, %v177
    %v1230 = vmul.f32 %v1228, %v177
    %v1231 = vadd.f32 %v1229, 1e-05
    %v1232 = vadd.f32 %v1230, 1e-05
    %v1233 = vrsqrt.pop %v1231
    %v1234 = vrsqrt.pop %v1232
    %v1235 = vmul.f32 %v1219, %v1233
    %v1236 = vmul.f32 %v1220, %v1234
    %v1237 = vlaneseq
    %v1238 = vshrl.u32 %v1237, 7
    %v1239 = vsub.s32 0, %v1238
    %v1240 = vrot.slane %v142, %v1239
    %v1241 = vmul.f32 %v1235, %v1240
    %v1242 = vmul.f32 %v1236, %v1240
    %v1243 = vlaneseq
    %v1244 = vshrl.u32 %v1243, 7
    %v1245 = vsub.s32 0, %v1244
    %v1246 = vrot.slane %v143, %v1245
    %v1247 = vadd.f32 %v1241, %v1246
    %v1248 = vadd.f32 %v1242, %v1246
    %v1249 = vlaneseq
    %v1250 = vshrl.u32 %v1249, 7
    %v1251 = vsub.s32 0, %v1250
    %v1252 = vrot.slane %v169, %v1251
    %v1254 = vsel %vm170, %v1247, 0
    %v1257 = vsel %vm170, %v1248, 0
    %1259 = vmatprep.subr.mxu0 0.0
    %1260 = vmatpush1.msra.mxu0 %v165
    %1261 = vmatprep.subr.mxu0 0.0
    %1262 = vmatpush1.msra.mxu0 %v166
    %1263 = vmatprep.subr.mxu0 0.0
    %1264 = vmatpush1.msra.mxu0 %v167
    %1265 = vmatprep.subr.mxu0 0.0
    %1266 = vmatpush1.msra.mxu0 %v168
    %1267 = vmatprep.subr.mxu0 0.0
    %1268 = vmatpush1.msra.mxu0 0.0
    %1269 = vmatprep.subr.mxu0 0.0
    %1270 = vmatpush1.msra.mxu0 0.0
    %1271 = vmatprep.subr.mxu0 0.0
    %1272 = vmatpush1.msra.mxu0 0.0
    %1273 = vmatprep.subr.mxu0 0.0
    %1274 = vmatpush1.msra.mxu0 0.0
    %1275 = vmatprep.subr.mxu0 0.0
    %1276 = vmatpush1.msra.mxu0 0.0
    %1277 = vmatprep.subr.mxu0 0.0
    %1278 = vmatpush1.msra.mxu0 0.0
    %1279 = vmatprep.subr.mxu0 0.0
    %1280 = vmatpush1.msra.mxu0 0.0
    %1281 = vmatprep.subr.mxu0 0.0
    %1282 = vmatpush1.msra.mxu0 0.0
    %1283 = vmatprep.subr.mxu0 0.0
    %1284 = vmatpush1.msra.mxu0 0.0
    %1285 = vmatprep.subr.mxu0 0.0
    %1286 = vmatpush1.msra.mxu0 0.0
    %1287 = vmatprep.subr.mxu0 0.0
    %1288 = vmatpush1.msra.mxu0 0.0
    %1289 = vmatprep.subr.mxu0 0.0
    %1290 = vmatpush1.msra.mxu0 0.0
    %1291 = vmatprep.subr.mxu0 0.0
    %1292 = vmatpush1.msra.mxu0 0.0
    %1293 = vmatprep.subr.mxu0 0.0
    %1294 = vmatpush1.msra.mxu0 0.0
    %1295 = vmatprep.subr.mxu0 0.0
    %1296 = vmatpush1.msra.mxu0 0.0
    %1297 = vmatprep.subr.mxu0 0.0
    %1298 = vmatpush1.msra.mxu0 0.0
    %1299 = vmatprep.subr.mxu0 0.0
    %1300 = vmatpush1.msra.mxu0 0.0
    %1301 = vmatprep.subr.mxu0 0.0
    %1302 = vmatpush1.msra.mxu0 0.0
    %1303 = vmatprep.subr.mxu0 0.0
    %1304 = vmatpush1.msra.mxu0 0.0
    %1305 = vmatprep.subr.mxu0 0.0
    %1306 = vmatpush1.msra.mxu0 0.0
    %1307 = vmatprep.subr.mxu0 0.0
    %1308 = vmatpush1.msra.mxu0 0.0
    %1309 = vmatprep.subr.mxu0 0.0
    %1310 = vmatpush1.msra.mxu0 0.0
    %1311 = vmatprep.subr.mxu0 0.0
    %1312 = vmatpush1.msra.mxu0 0.0
    %1313 = vmatprep.subr.mxu0 0.0
    %1314 = vmatpush1.msra.mxu0 0.0
    %1315 = vmatprep.subr.mxu0 0.0
    %1316 = vmatpush1.msra.mxu0 0.0
    %1317 = vmatprep.subr.mxu0 0.0
    %1318 = vmatpush1.msra.mxu0 0.0
    %1319 = vmatprep.subr.mxu0 0.0
    %1320 = vmatpush1.msra.mxu0 0.0
    %1321 = vmatprep.subr.mxu0 0.0
    %1322 = vmatpush1.msra.mxu0 0.0
    %1323 = vmatprep.mubr.f32.mxu0 0.0
    %1324 = vmatmul.mubr.f32.gmra.mrb[0].mxu0 %v1254
    %v1325 = vpop.f32.mrb[0].mxu0
    %v1326 = vadd.f32 %v1252, %v1325
    %v1327 = vpop.f32.mrb[0].mxu0
    %1328 = vmatprep.mubr.f32.mxu0 0.0
    %1329 = vmatmul.mubr.f32.gmra.mrb[0].mxu0 %v1257
    %v1330 = vpop.f32.mrb[0].mxu0
    %v1331 = vadd.f32 %v1252, %v1330
    %v1332 = vpop.f32.mrb[0].mxu0
    %1333 = vdwg.mxu0
    %v1334 = vmax.f32 %v1326, 0.0
    %v1335 = vmax.f32 %v1331, 0.0
    %1336 = vmatprep.subr.mxu0 0.0
    %1337 = vmatpush1.msra.mxu0 %v144
    %1338 = vmatprep.subr.mxu0 0.0
    %1339 = vmatpush1.msra.mxu0 %v145
    %1340 = vmatprep.subr.mxu0 0.0
    %1341 = vmatpush1.msra.mxu0 %v146
    %1342 = vmatprep.subr.mxu0 0.0
    %1343 = vmatpush1.msra.mxu0 %v147
    %1344 = vmatprep.subr.mxu0 0.0
    %1345 = vmatpush1.msra.mxu0 %v148
    %1346 = vmatprep.subr.mxu0 0.0
    %1347 = vmatpush1.msra.mxu0 %v149
    %1348 = vmatprep.subr.mxu0 0.0
    %1349 = vmatpush1.msra.mxu0 %v150
    %1350 = vmatprep.subr.mxu0 0.0
    %1351 = vmatpush1.msra.mxu0 %v151
    %1352 = vmatprep.subr.mxu0 0.0
    %1353 = vmatpush1.msra.mxu0 %v152
    %1354 = vmatprep.subr.mxu0 0.0
    %1355 = vmatpush1.msra.mxu0 %v153
    %1356 = vmatprep.subr.mxu0 0.0
    %1357 = vmatpush1.msra.mxu0 %v154
    %1358 = vmatprep.subr.mxu0 0.0
    %1359 = vmatpush1.msra.mxu0 %v155
    %1360 = vmatprep.subr.mxu0 0.0
    %1361 = vmatpush1.msra.mxu0 %v156
    %1362 = vmatprep.subr.mxu0 0.0
    %1363 = vmatpush1.msra.mxu0 %v157
    %1364 = vmatprep.subr.mxu0 0.0
    %1365 = vmatpush1.msra.mxu0 %v158
    %1366 = vmatprep.subr.mxu0 0.0
    %1367 = vmatpush1.msra.mxu0 %v159
    %1368 = vmatprep.subr.mxu0 0.0
    %1369 = vmatpush1.msra.mxu0 0.0
    %1370 = vmatprep.subr.mxu0 0.0
    %1371 = vmatpush1.msra.mxu0 0.0
    %1372 = vmatprep.subr.mxu0 0.0
    %1373 = vmatpush1.msra.mxu0 0.0
    %1374 = vmatprep.subr.mxu0 0.0
    %1375 = vmatpush1.msra.mxu0 0.0
    %1376 = vmatprep.subr.mxu0 0.0
    %1377 = vmatpush1.msra.mxu0 0.0
    %1378 = vmatprep.subr.mxu0 0.0
    %1379 = vmatpush1.msra.mxu0 0.0
    %1380 = vmatprep.subr.mxu0 0.0
    %1381 = vmatpush1.msra.mxu0 0.0
    %1382 = vmatprep.subr.mxu0 0.0
    %1383 = vmatpush1.msra.mxu0 0.0
    %1384 = vmatprep.subr.mxu0 0.0
    %1385 = vmatpush1.msra.mxu0 0.0
    %1386 = vmatprep.subr.mxu0 0.0
    %1387 = vmatpush1.msra.mxu0 0.0
    %1388 = vmatprep.subr.mxu0 0.0
    %1389 = vmatpush1.msra.mxu0 0.0
    %1390 = vmatprep.subr.mxu0 0.0
    %1391 = vmatpush1.msra.mxu0 0.0
    %1392 = vmatprep.subr.mxu0 0.0
    %1393 = vmatpush1.msra.mxu0 0.0
    %1394 = vmatprep.subr.mxu0 0.0
    %1395 = vmatpush1.msra.mxu0 0.0
    %1396 = vmatprep.subr.mxu0 0.0
    %1397 = vmatpush1.msra.mxu0 0.0
    %1398 = vmatprep.subr.mxu0 0.0
    %1399 = vmatpush1.msra.mxu0 0.0
    %1400 = vmatprep.mubr.f32.mxu0 0.0
    %1401 = vmatmul.mubr.f32.gmra.mrb[0].mxu0 %v1334
    %v1402 = vpop.f32.mrb[0].mxu0
    %v1403 = vadd.f32 0.0, %v1402
    %v1404 = vpop.f32.mrb[0].mxu0
    %1405 = vmatprep.mubr.f32.mxu0 0.0
    %1406 = vmatmul.mubr.f32.gmra.mrb[0].mxu0 %v1335
    %v1407 = vpop.f32.mrb[0].mxu0
    %v1408 = vadd.f32 0.0, %v1407
    %v1409 = vpop.f32.mrb[0].mxu0
    %1410 = vdwg.mxu0
    %v1411 = vadd.f32 %v1209, %v1403
    %v1412 = vadd.f32 %v1210, %v1408
    %v1413 = vlaneseq
    %v1414 = vshrl.u32 %v1413, 7
    %v1415 = vsub.s32 0, %v1414
    %v1416 = vrot.slane %v160, %v1415
    %v1417 = vadd.f32 %v1411, %v1416
    %v1418 = vadd.f32 %v1412, %v1416
    %v1419 = vld [vmem:[%s1 + $0x136] sm:$0x1]
    %v1420 = vld [vmem:[%s1 + $0x137] sm:$0x1]
    %v1421 = vld [vmem:[%s1 + $0x138] sm:$0xff]
    %v1422 = vld [vmem:[%s1 + $0x140] sm:$0xff]
    %v1423 = vld [vmem:[%s1 + $0x148] sm:$0xff]
    %v1424 = vld [vmem:[%s1 + $0x150] sm:$0xff]
    %v1425 = vld [vmem:[%s1 + $0x158] sm:$0x1]
    %v1426 = vld [vmem:[%s1 + $0x159] sm:$0x1]
    %v1427 = vld [vmem:[%s1 + $0x15a] sm:$0x1]
    %v1428 = vld [vmem:[%s1 + $0x15b] sm:$0xff]
    %v1429 = vld [vmem:[%s1 + $0x163] sm:$0xff]
    %v1430 = vld [vmem:[%s1 + $0x16b] sm:$0xff]
    %v1431 = vld [vmem:[%s1 + $0x173] sm:$0xff]
    %v1432 = vld [vmem:[%s1 + $0x17b] sm:$0xff]
    %v1433 = vld [vmem:[%s1 + $0x183] sm:$0xff]
    %v1434 = vld [vmem:[%s1 + $0x18b] sm:$0xff]
    %v1435 = vld [vmem:[%s1 + $0x193] sm:$0xff]
    %v1436 = vld [vmem:[%s1 + $0x19b] sm:$0xff]
    %v1437 = vld [vmem:[%s1 + $0x1a3] sm:$0xff]
    %v1438 = vld [vmem:[%s1 + $0x1ab] sm:$0xff]
    %v1439 = vld [vmem:[%s1 + $0x1b3] sm:$0xff]
    %v1440 = vld [vmem:[%s1 + $0x1bb] sm:$0xff]
    %v1441 = vld [vmem:[%s1 + $0x1c3] sm:$0xff]
    %v1442 = vld [vmem:[%s1 + $0x1cb] sm:$0xff]
    %v1443 = vld [vmem:[%s1 + $0x1d3] sm:$0xff]
    %v1444 = vld [vmem:[%s1 + $0x1db] sm:$0x1]
    %v1445 = vld [vmem:[%s2 + $0x41] sm:$0xff]
    %v1446 = vld [vmem:[%s2 + $0x49] sm:$0xff]
    %v1447 = vld [vmem:[%s2 + $0x51] sm:$0xff]
    %v1448 = vld [vmem:[%s2 + $0x59] sm:$0xff]
    %v1449 = vld [vmem:[%s2 + $0x61] sm:$0xff]
    %v1450 = vld [vmem:[%s2 + $0x69] sm:$0xff]
    %v1451 = vld [vmem:[%s2 + $0x71] sm:$0xff]
    %v1452 = vld [vmem:[%s2 + $0x79] sm:$0xff]
    %v1453 = vld [vmem:[%s2 + $0x81] sm:$0x1]
    %v1454 = vsel %vm170, %v1417, 0.0
    %1455 = vadd.xlane.f32.xlu0 %v1454
    %v1456 = vpop.xlane.xlu0 %1455
    %v1457 = vsel %vm170, %v1418, 0.0
    %1458 = vadd.xlane.f32.xlu0 %v1457
    %v1459 = vpop.xlane.xlu0 %1458
    %v1460 = vmul.f32 %v1456, %v177
    %v1461 = vmul.f32 %v1459, %v177
    %v1462 = vsub.f32 %v1417, %v1460
    %v1463 = vsub.f32 %v1418, %v1461
    %v1464 = vmul.f32 %v1462, %v1462
    %v1465 = vmul.f32 %v1463, %v1463
    %v1466 = vsel %vm170, %v1464, 0.0
    %1467 = vadd.xlane.f32.xlu0 %v1466
    %v1468 = vpop.xlane.xlu0 %1467
    %v1469 = vsel %vm170, %v1465, 0.0
    %1470 = vadd.xlane.f32.xlu0 %v1469
    %v1471 = vpop.xlane.xlu0 %1470
    %v1472 = vmul.f32 %v1468, %v177
    %v1473 = vmul.f32 %v1471, %v177
    %v1474 = vadd.f32 %v1472, 1e-05
    %v1475 = vadd.f32 %v1473, 1e-05
    %v1476 = vrsqrt.pop %v1474
    %v1477 = vrsqrt.pop %v1475
    %v1478 = vmul.f32 %v1462, %v1476
    %v1479 = vmul.f32 %v1463, %v1477
    %v1480 = vlaneseq
    %v1481 = vshrl.u32 %v1480, 7
    %v1482 = vsub.s32 0, %v1481
    %v1483 = vrot.slane %v1419, %v1482
    %v1484 = vmul.f32 %v1478, %v1483
    %v1485 = vmul.f32 %v1479, %v1483
    %v1486 = vlaneseq
    %v1487 = vshrl.u32 %v1486, 7
    %v1488 = vsub.s32 0, %v1487
    %v1489 = vrot.slane %v1420, %v1488
    %v1490 = vadd.f32 %v1484, %v1489
    %v1491 = vadd.f32 %v1485, %v1489
    %v1493 = vsel %vm170, %v1490, 0
    %v1496 = vsel %vm170, %v1491, 0
    %1498 = vmatprep.subr.mxu0 0.0
    %1499 = vmatpush1.msra.mxu0 %v1445
    %1500 = vmatprep.subr.mxu0 0.0
    %1501 = vmatpush1.msra.mxu0 %v1446
    %1502 = vmatprep.subr.mxu0 0.0
    %1503 = vmatpush1.msra.mxu0 %v1447
    %1504 = vmatprep.subr.mxu0 0.0
    %1505 = vmatpush1.msra.mxu0 %v1448
    %1506 = vmatprep.subr.mxu0 0.0
    %1507 = vmatpush1.msra.mxu0 0.0
    %1508 = vmatprep.subr.mxu0 0.0
    %1509 = vmatpush1.msra.mxu0 0.0
    %1510 = vmatprep.subr.mxu0 0.0
    %1511 = vmatpush1.msra.mxu0 0.0
    %1512 = vmatprep.subr.mxu0 0.0
    %1513 = vmatpush1.msra.mxu0 0.0
    %1514 = vmatprep.subr.mxu0 0.0
    %1515 = vmatpush1.msra.mxu0 0.0
    %1516 = vmatprep.subr.mxu0 0.0
    %1517 = vmatpush1.msra.mxu0 0.0
    %1518 = vmatprep.subr.mxu0 0.0
    %1519 = vmatpush1.msra.mxu0 0.0
    %1520 = vmatprep.subr.mxu0 0.0
    %1521 = vmatpush1.msra.mxu0 0.0
    %1522 = vmatprep.subr.mxu0 0.0
    %1523 = vmatpush1.msra.mxu0 0.0
    %1524 = vmatprep.subr.mxu0 0.0
    %1525 = vmatpush1.msra.mxu0 0.0
    %1526 = vmatprep.subr.mxu0 0.0
    %1527 = vmatpush1.msra.mxu0 0.0
    %1528 = vmatprep.subr.mxu0 0.0
    %1529 = vmatpush1.msra.mxu0 0.0
    %1530 = vmatprep.subr.mxu0 0.0
    %1531 = vmatpush1.msra.mxu0 0.0
    %1532 = vmatprep.subr.mxu0 0.0
    %1533 = vmatpush1.msra.mxu0 0.0
    %1534 = vmatprep.subr.mxu0 0.0
    %1535 = vmatpush1.msra.mxu0 0.0
    %1536 = vmatprep.subr.mxu0 0.0
    %1537 = vmatpush1.msra.mxu0 0.0
    %1538 = vmatprep.subr.mxu0 0.0
    %1539 = vmatpush1.msra.mxu0 0.0
    %1540 = vmatprep.subr.mxu0 0.0
    %1541 = vmatpush1.msra.mxu0 0.0
    %1542 = vmatprep.subr.mxu0 0.0
    %1543 = vmatpush1.msra.mxu0 0.0
    %1544 = vmatprep.subr.mxu0 0.0
    %1545 = vmatpush1.msra.mxu0 0.0
    %1546 = vmatprep.subr.mxu0 0.0
    %1547 = vmatpush1.msra.mxu0 0.0
    %1548 = vmatprep.subr.mxu0 0.0
    %1549 = vmatpush1.msra.mxu0 0.0
    %1550 = vmatprep.subr.mxu0 0.0
    %1551 = vmatpush1.msra.mxu0 0.0
    %1552 = vmatprep.subr.mxu0 0.0
    %1553 = vmatpush1.msra.mxu0 0.0
    %1554 = vmatprep.subr.mxu0 0.0
    %1555 = vmatpush1.msra.mxu0 0.0
    %1556 = vmatprep.subr.mxu0 0.0
    %1557 = vmatpush1.msra.mxu0 0.0
    %1558 = vmatprep.subr.mxu0 0.0
    %1559 = vmatpush1.msra.mxu0 0.0
    %1560 = vmatprep.subr.mxu0 0.0
    %1561 = vmatpush1.msra.mxu0 0.0
    %1562 = vmatprep.mubr.f32.mxu0 0.0
    %1563 = vmatmul.mubr.f32.gmra.mrb[0].mxu0 %v1493
    %v1564 = vpop.f32.mrb[0].mxu0
    %v1565 = vadd.f32 0.0, %v1564
    %v1566 = vpop.f32.mrb[0].mxu0
    %1567 = vmatprep.mubr.f32.mxu0 0.0
    %1568 = vmatmul.mubr.f32.gmra.mrb[0].mxu0 %v1496
    %v1569 = vpop.f32.mrb[0].mxu0
    %v1570 = vadd.f32 0.0, %v1569
    %v1571 = vpop.f32.mrb[0].mxu0
    %1572 = vdwg.mxu0
    %1575 = vrot.lane.b32.xlu0 %v1565, 120
    %v1576 = vpop.permute.xlu0 %1575
    %1577 = vrot.lane.b32.xlu0 %v1570, 120
    %v1578 = vpop.permute.xlu0 %1577
    %1579 = vrot.lane.b32.xlu0 %v1565, 112
    %v1580 = vpop.permute.xlu0 %1579
    %1581 = vrot.lane.b32.xlu0 %v1570, 112
    %v1582 = vpop.permute.xlu0 %1581
    %1583 = vrot.lane.b32.xlu0 %v1565, 104
    %v1584 = vpop.permute.xlu0 %1583
    %1585 = vrot.lane.b32.xlu0 %v1570, 104
    %v1586 = vpop.permute.xlu0 %1585
    %1587 = vrot.lane.b32.xlu0 %v1565, 96
    %v1588 = vpop.permute.xlu0 %1587
    %1589 = vrot.lane.b32.xlu0 %v1570, 96
    %v1590 = vpop.permute.xlu0 %1589
    %v1591 = vsel %vm309, %v1565, 0
    %v1593 = vsel %vm309, %v1570, 0
    %v1595 = vsel %vm309, %v1588, 0
    %v1597 = vsel %vm309, %v1590, 0
    %1599 = vmatprep.subr.mxu0 0.0
    %1600 = vmatpush1.xpose.msra.mxu0 %v1595
    %1601 = vmatprep.subr.mxu0 0.0
    %1602 = vmatpush1.xpose.msra.mxu0 %v1597
    %1603 = vmatprep.subr.mxu0 0.0
    %1604 = vmatpush1.xpose.msra.mxu0 0.0
    %1605 = vmatprep.subr.mxu0 0.0
    %1606 = vmatpush1.xpose.msra.mxu0 0.0
    %1607 = vmatprep.subr.mxu0 0.0
    %1608 = vmatpush1.xpose.msra.mxu0 0.0
    %1609 = vmatprep.subr.mxu0 0.0
    %1610 = vmatpush1.xpose.msra.mxu0 0.0
    %1611 = vmatprep.subr.mxu0 0.0
    %1612 = vmatpush1.xpose.msra.mxu0 0.0
    %1613 = vmatprep.subr.mxu0 0.0
    %1614 = vmatpush1.xpose.msra.mxu0 0.0
    %1615 = vmatprep.subr.mxu0 0.0
    %1616 = vmatpush1.xpose.msra.mxu0 0.0
    %1617 = vmatprep.subr.mxu0 0.0
    %1618 = vmatpush1.xpose.msra.mxu0 0.0
    %1619 = vmatprep.subr.mxu0 0.0
    %1620 = vmatpush1.xpose.msra.mxu0 0.0
    %1621 = vmatprep.subr.mxu0 0.0
    %1622 = vmatpush1.xpose.msra.mxu0 0.0
    %1623 = vmatprep.subr.mxu0 0.0
    %1624 = vmatpush1.xpose.msra.mxu0 0.0
    %1625 = vmatprep.subr.mxu0 0.0
    %1626 = vmatpush1.xpose.msra.mxu0 0.0
    %1627 = vmatprep.subr.mxu0 0.0
    %1628 = vmatpush1.xpose.msra.mxu0 0.0
    %1629 = vmatprep.subr.mxu0 0.0
    %1630 = vmatpush1.xpose.msra.mxu0 0.0
    %1631 = vmatprep.subr.mxu0 0.0
    %1632 = vmatpush1.xpose.msra.mxu0 0.0
    %1633 = vmatprep.subr.mxu0 0.0
    %1634 = vmatpush1.xpose.msra.mxu0 0.0
    %1635 = vmatprep.subr.mxu0 0.0
    %1636 = vmatpush1.xpose.msra.mxu0 0.0
    %1637 = vmatprep.subr.mxu0 0.0
    %1638 = vmatpush1.xpose.msra.mxu0 0.0
    %1639 = vmatprep.subr.mxu0 0.0
    %1640 = vmatpush1.xpose.msra.mxu0 0.0
    %1641 = vmatprep.subr.mxu0 0.0
    %1642 = vmatpush1.xpose.msra.mxu0 0.0
    %1643 = vmatprep.subr.mxu0 0.0
    %1644 = vmatpush1.xpose.msra.mxu0 0.0
    %1645 = vmatprep.subr.mxu0 0.0
    %1646 = vmatpush1.xpose.msra.mxu0 0.0
    %1647 = vmatprep.subr.mxu0 0.0
    %1648 = vmatpush1.xpose.msra.mxu0 0.0
    %1649 = vmatprep.subr.mxu0 0.0
    %1650 = vmatpush1.xpose.msra.mxu0 0.0
    %1651 = vmatprep.subr.mxu0 0.0
    %1652 = vmatpush1.xpose.msra.mxu0 0.0
    %1653 = vmatprep.subr.mxu0 0.0
    %1654 = vmatpush1.xpose.msra.mxu0 0.0
    %1655 = vmatprep.subr.mxu0 0.0
    %1656 = vmatpush1.xpose.msra.mxu0 0.0
    %1657 = vmatprep.subr.mxu0 0.0
    %1658 = vmatpush1.xpose.msra.mxu0 0.0
    %1659 = vmatprep.subr.mxu0 0.0
    %1660 = vmatpush1.xpose.msra.mxu0 0.0
    %1661 = vmatprep.subr.mxu0 0.0
    %1662 = vmatpush1.xpose.msra.mxu0 0.0
    %1663 = vmatprep.mubr.f32.mxu0 0.0
    %1664 = vmatmul.mubr.f32.gmra.mrb[0].mxu0 %v1591
    %v1665 = vpop.f32.mrb[0].mxu0
    %v1666 = vadd.f32 %v127, %v1665
    %v1667 = vpop.f32.mrb[0].mxu0
    %1668 = vmatprep.mubr.f32.mxu0 0.0
    %1669 = vmatmul.mubr.f32.gmra.mrb[0].mxu0 %v1593
    %v1670 = vpop.f32.mrb[0].mxu0
    %v1671 = vadd.f32 %v128, %v1670
    %v1672 = vpop.f32.mrb[0].mxu0
    %1673 = vdwg.mxu0
    %1674 = vrot.lane.b32.xlu0 %v1576, 96
    %v1675 = vpop.permute.xlu0 %1674
    %1676 = vrot.lane.b32.xlu0 %v1578, 96
    %v1677 = vpop.permute.xlu0 %1676
    %v1678 = vsel %vm309, %v1576, 0
    %v1680 = vsel %vm309, %v1578, 0
    %v1682 = vsel %vm309, %v1675, 0
    %v1684 = vsel %vm309, %v1677, 0
    %1686 = vmatprep.subr.mxu0 0.0
    %1687 = vmatpush1.xpose.msra.mxu0 %v1682
    %1688 = vmatprep.subr.mxu0 0.0
    %1689 = vmatpush1.xpose.msra.mxu0 %v1684
    %1690 = vmatprep.subr.mxu0 0.0
    %1691 = vmatpush1.xpose.msra.mxu0 0.0
    %1692 = vmatprep.subr.mxu0 0.0
    %1693 = vmatpush1.xpose.msra.mxu0 0.0
    %1694 = vmatprep.subr.mxu0 0.0
    %1695 = vmatpush1.xpose.msra.mxu0 0.0
    %1696 = vmatprep.subr.mxu0 0.0
    %1697 = vmatpush1.xpose.msra.mxu0 0.0
    %1698 = vmatprep.subr.mxu0 0.0
    %1699 = vmatpush1.xpose.msra.mxu0 0.0
    %1700 = vmatprep.subr.mxu0 0.0
    %1701 = vmatpush1.xpose.msra.mxu0 0.0
    %1702 = vmatprep.subr.mxu0 0.0
    %1703 = vmatpush1.xpose.msra.mxu0 0.0
    %1704 = vmatprep.subr.mxu0 0.0
    %1705 = vmatpush1.xpose.msra.mxu0 0.0
    %1706 = vmatprep.subr.mxu0 0.0
    %1707 = vmatpush1.xpose.msra.mxu0 0.0
    %1708 = vmatprep.subr.mxu0 0.0
    %1709 = vmatpush1.xpose.msra.mxu0 0.0
    %1710 = vmatprep.subr.mxu0 0.0
    %1711 = vmatpush1.xpose.msra.mxu0 0.0
    %1712 = vmatprep.subr.mxu0 0.0
    %1713 = vmatpush1.xpose.msra.mxu0 0.0
    %1714 = vmatprep.subr.mxu0 0.0
    %1715 = vmatpush1.xpose.msra.mxu0 0.0
    %1716 = vmatprep.subr.mxu0 0.0
    %1717 = vmatpush1.xpose.msra.mxu0 0.0
    %1718 = vmatprep.subr.mxu0 0.0
    %1719 = vmatpush1.xpose.msra.mxu0 0.0
    %1720 = vmatprep.subr.mxu0 0.0
    %1721 = vmatpush1.xpose.msra.mxu0 0.0
    %1722 = vmatprep.subr.mxu0 0.0
    %1723 = vmatpush1.xpose.msra.mxu0 0.0
    %1724 = vmatprep.subr.mxu0 0.0
    %1725 = vmatpush1.xpose.msra.mxu0 0.0
    %1726 = vmatprep.subr.mxu0 0.0
    %1727 = vmatpush1.xpose.msra.mxu0 0.0
    %1728 = vmatprep.subr.mxu0 0.0
    %1729 = vmatpush1.xpose.msra.mxu0 0.0
    %1730 = vmatprep.subr.mxu0 0.0
    %1731 = vmatpush1.xpose.msra.mxu0 0.0
    %1732 = vmatprep.subr.mxu0 0.0
    %1733 = vmatpush1.xpose.msra.mxu0 0.0
    %1734 = vmatprep.subr.mxu0 0.0
    %1735 = vmatpush1.xpose.msra.mxu0 0.0
    %1736 = vmatprep.subr.mxu0 0.0
    %1737 = vmatpush1.xpose.msra.mxu0 0.0
    %1738 = vmatprep.subr.mxu0 0.0
    %1739 = vmatpush1.xpose.msra.mxu0 0.0
    %1740 = vmatprep.subr.mxu0 0.0
    %1741 = vmatpush1.xpose.msra.mxu0 0.0
    %1742 = vmatprep.subr.mxu0 0.0
    %1743 = vmatpush1.xpose.msra.mxu0 0.0
    %1744 = vmatprep.subr.mxu0 0.0
    %1745 = vmatpush1.xpose.msra.mxu0 0.0
    %1746 = vmatprep.subr.mxu0 0.0
    %1747 = vmatpush1.xpose.msra.mxu0 0.0
    %1748 = vmatprep.subr.mxu0 0.0
    %1749 = vmatpush1.xpose.msra.mxu0 0.0
    %1750 = vmatprep.mubr.f32.mxu0 0.0
    %1751 = vmatmul.mubr.f32.gmra.mrb[0].mxu0 %v1678
    %v1752 = vpop.f32.mrb[0].mxu0
    %v1753 = vadd.f32 %v129, %v1752
    %v1754 = vpop.f32.mrb[0].mxu0
    %1755 = vmatprep.mubr.f32.mxu0 0.0
    %1756 = vmatmul.mubr.f32.gmra.mrb[0].mxu0 %v1680
    %v1757 = vpop.f32.mrb[0].mxu0
    %v1758 = vadd.f32 %v130, %v1757
    %v1759 = vpop.f32.mrb[0].mxu0
    %1760 = vdwg.mxu0
    %1761 = vrot.lane.b32.xlu0 %v1580, 96
    %v1762 = vpop.permute.xlu0 %1761
    %1763 = vrot.lane.b32.xlu0 %v1582, 96
    %v1764 = vpop.permute.xlu0 %1763
    %v1765 = vsel %vm309, %v1580, 0
    %v1767 = vsel %vm309, %v1582, 0
    %v1769 = vsel %vm309, %v1762, 0
    %v1771 = vsel %vm309, %v1764, 0
    %1773 = vmatprep.subr.mxu0 0.0
    %1774 = vmatpush1.xpose.msra.mxu0 %v1769
    %1775 = vmatprep.subr.mxu0 0.0
    %1776 = vmatpush1.xpose.msra.mxu0 %v1771
    %1777 = vmatprep.subr.mxu0 0.0
    %1778 = vmatpush1.xpose.msra.mxu0 0.0
    %1779 = vmatprep.subr.mxu0 0.0
    %1780 = vmatpush1.xpose.msra.mxu0 0.0
    %1781 = vmatprep.subr.mxu0 0.0
    %1782 = vmatpush1.xpose.msra.mxu0 0.0
    %1783 = vmatprep.subr.mxu0 0.0
    %1784 = vmatpush1.xpose.msra.mxu0 0.0
    %1785 = vmatprep.subr.mxu0 0.0
    %1786 = vmatpush1.xpose.msra.mxu0 0.0
    %1787 = vmatprep.subr.mxu0 0.0
    %1788 = vmatpush1.xpose.msra.mxu0 0.0
    %1789 = vmatprep.subr.mxu0 0.0
    %1790 = vmatpush1.xpose.msra.mxu0 0.0
    %1791 = vmatprep.subr.mxu0 0.0
    %1792 = vmatpush1.xpose.msra.mxu0 0.0
    %1793 = vmatprep.subr.mxu0 0.0
    %1794 = vmatpush1.xpose.msra.mxu0 0.0
    %1795 = vmatprep.subr.mxu0 0.0
    %1796 = vmatpush1.xpose.msra.mxu0 0.0
    %1797 = vmatprep.subr.mxu0 0.0
    %1798 = vmatpush1.xpose.msra.mxu0 0.0
    %1799 = vmatprep.subr.mxu0 0.0
    %1800 = vmatpush1.xpose.msra.mxu0 0.0
    %1801 = vmatprep.subr.mxu0 0.0
    %1802 = vmatpush1.xpose.msra.mxu0 0.0
    %1803 = vmatprep.subr.mxu0 0.0
    %1804 = vmatpush1.xpose.msra.mxu0 0.0
    %1805 = vmatprep.subr.mxu0 0.0
    %1806 = vmatpush1.xpose.msra.mxu0 0.0
    %1807 = vmatprep.subr.mxu0 0.0
    %1808 = vmatpush1.xpose.msra.mxu0 0.0
    %1809 = vmatprep.subr.mxu0 0.0
    %1810 = vmatpush1.xpose.msra.mxu0 0.0
    %1811 = vmatprep.subr.mxu0 0.0
    %1812 = vmatpush1.xpose.msra.mxu0 0.0
    %1813 = vmatprep.subr.mxu0 0.0
    %1814 = vmatpush1.xpose.msra.mxu0 0.0
    %1815 = vmatprep.subr.mxu0 0.0
    %1816 = vmatpush1.xpose.msra.mxu0 0.0
    %1817 = vmatprep.subr.mxu0 0.0
    %1818 = vmatpush1.xpose.msra.mxu0 0.0
    %1819 = vmatprep.subr.mxu0 0.0
    %1820 = vmatpush1.xpose.msra.mxu0 0.0
    %1821 = vmatprep.subr.mxu0 0.0
    %1822 = vmatpush1.xpose.msra.mxu0 0.0
    %1823 = vmatprep.subr.mxu0 0.0
    %1824 = vmatpush1.xpose.msra.mxu0 0.0
    %1825 = vmatprep.subr.mxu0 0.0
    %1826 = vmatpush1.xpose.msra.mxu0 0.0
    %1827 = vmatprep.subr.mxu0 0.0
    %1828 = vmatpush1.xpose.msra.mxu0 0.0
    %1829 = vmatprep.subr.mxu0 0.0
    %1830 = vmatpush1.xpose.msra.mxu0 0.0
    %1831 = vmatprep.subr.mxu0 0.0
    %1832 = vmatpush1.xpose.msra.mxu0 0.0
    %1833 = vmatprep.subr.mxu0 0.0
    %1834 = vmatpush1.xpose.msra.mxu0 0.0
    %1835 = vmatprep.subr.mxu0 0.0
    %1836 = vmatpush1.xpose.msra.mxu0 0.0
    %1837 = vmatprep.mubr.f32.mxu0 0.0
    %1838 = vmatmul.mubr.f32.gmra.mrb[0].mxu0 %v1765
    %v1839 = vpop.f32.mrb[0].mxu0
    %v1840 = vadd.f32 %v131, %v1839
    %v1841 = vpop.f32.mrb[0].mxu0
    %1842 = vmatprep.mubr.f32.mxu0 0.0
    %1843 = vmatmul.mubr.f32.gmra.mrb[0].mxu0 %v1767
    %v1844 = vpop.f32.mrb[0].mxu0
    %v1845 = vadd.f32 %v132, %v1844
    %v1846 = vpop.f32.mrb[0].mxu0
    %1847 = vdwg.mxu0
    %1848 = vrot.lane.b32.xlu0 %v1584, 96
    %v1849 = vpop.permute.xlu0 %1848
    %1850 = vrot.lane.b32.xlu0 %v1586, 96
    %v1851 = vpop.permute.xlu0 %1850
    %v1852 = vsel %vm309, %v1584, 0
    %v1854 = vsel %vm309, %v1586, 0
    %v1856 = vsel %vm309, %v1849, 0
    %v1858 = vsel %vm309, %v1851, 0
    %1860 = vmatprep.subr.mxu0 0.0
    %1861 = vmatpush1.xpose.msra.mxu0 %v1856
    %1862 = vmatprep.subr.mxu0 0.0
    %1863 = vmatpush1.xpose.msra.mxu0 %v1858
    %1864 = vmatprep.subr.mxu0 0.0
    %1865 = vmatpush1.xpose.msra.mxu0 0.0
    %1866 = vmatprep.subr.mxu0 0.0
    %1867 = vmatpush1.xpose.msra.mxu0 0.0
    %1868 = vmatprep.subr.mxu0 0.0
    %1869 = vmatpush1.xpose.msra.mxu0 0.0
    %1870 = vmatprep.subr.mxu0 0.0
    %1871 = vmatpush1.xpose.msra.mxu0 0.0
    %1872 = vmatprep.subr.mxu0 0.0
    %1873 = vmatpush1.xpose.msra.mxu0 0.0
    %1874 = vmatprep.subr.mxu0 0.0
    %1875 = vmatpush1.xpose.msra.mxu0 0.0
    %1876 = vmatprep.subr.mxu0 0.0
    %1877 = vmatpush1.xpose.msra.mxu0 0.0
    %1878 = vmatprep.subr.mxu0 0.0
    %1879 = vmatpush1.xpose.msra.mxu0 0.0
    %1880 = vmatprep.subr.mxu0 0.0
    %1881 = vmatpush1.xpose.msra.mxu0 0.0
    %1882 = vmatprep.subr.mxu0 0.0
    %1883 = vmatpush1.xpose.msra.mxu0 0.0
    %1884 = vmatprep.subr.mxu0 0.0
    %1885 = vmatpush1.xpose.msra.mxu0 0.0
    %1886 = vmatprep.subr.mxu0 0.0
    %1887 = vmatpush1.xpose.msra.mxu0 0.0
    %1888 = vmatprep.subr.mxu0 0.0
    %1889 = vmatpush1.xpose.msra.mxu0 0.0
    %1890 = vmatprep.subr.mxu0 0.0
    %1891 = vmatpush1.xpose.msra.mxu0 0.0
    %1892 = vmatprep.subr.mxu0 0.0
    %1893 = vmatpush1.xpose.msra.mxu0 0.0
    %1894 = vmatprep.subr.mxu0 0.0
    %1895 = vmatpush1.xpose.msra.mxu0 0.0
    %1896 = vmatprep.subr.mxu0 0.0
    %1897 = vmatpush1.xpose.msra.mxu0 0.0
    %1898 = vmatprep.subr.mxu0 0.0
    %1899 = vmatpush1.xpose.msra.mxu0 0.0
    %1900 = vmatprep.subr.mxu0 0.0
    %1901 = vmatpush1.xpose.msra.mxu0 0.0
    %1902 = vmatprep.subr.mxu0 0.0
    %1903 = vmatpush1.xpose.msra.mxu0 0.0
    %1904 = vmatprep.subr.mxu0 0.0
    %1905 = vmatpush1.xpose.msra.mxu0 0.0
    %1906 = vmatprep.subr.mxu0 0.0
    %1907 = vmatpush1.xpose.msra.mxu0 0.0
    %1908 = vmatprep.subr.mxu0 0.0
    %1909 = vmatpush1.xpose.msra.mxu0 0.0
    %1910 = vmatprep.subr.mxu0 0.0
    %1911 = vmatpush1.xpose.msra.mxu0 0.0
    %1912 = vmatprep.subr.mxu0 0.0
    %1913 = vmatpush1.xpose.msra.mxu0 0.0
    %1914 = vmatprep.subr.mxu0 0.0
    %1915 = vmatpush1.xpose.msra.mxu0 0.0
    %1916 = vmatprep.subr.mxu0 0.0
    %1917 = vmatpush1.xpose.msra.mxu0 0.0
    %1918 = vmatprep.subr.mxu0 0.0
    %1919 = vmatpush1.xpose.msra.mxu0 0.0
    %1920 = vmatprep.subr.mxu0 0.0
    %1921 = vmatpush1.xpose.msra.mxu0 0.0
    %1922 = vmatprep.subr.mxu0 0.0
    %1923 = vmatpush1.xpose.msra.mxu0 0.0
    %1924 = vmatprep.mubr.f32.mxu0 0.0
    %1925 = vmatmul.mubr.f32.gmra.mrb[0].mxu0 %v1852
    %v1926 = vpop.f32.mrb[0].mxu0
    %v1927 = vadd.f32 %v133, %v1926
    %v1928 = vpop.f32.mrb[0].mxu0
    %1929 = vmatprep.mubr.f32.mxu0 0.0
    %1930 = vmatmul.mubr.f32.gmra.mrb[0].mxu0 %v1854
    %v1931 = vpop.f32.mrb[0].mxu0
    %v1932 = vadd.f32 %v134, %v1931
    %v1933 = vpop.f32.mrb[0].mxu0
    %1934 = vdwg.mxu0
    %v1935 = vsel %vm654, %v1666, -inf
    %1936 = vmax.xlane.f32.xlu0 %v1935
    %v1937 = vpop.xlane.xlu0 %1936
    %v1938 = vsel %vm654, %v1671, -inf
    %1939 = vmax.xlane.f32.xlu0 %v1938
    %v1940 = vpop.xlane.xlu0 %1939
    %v1941 = vsel %vm654, %v1753, -inf
    %1942 = vmax.xlane.f32.xlu0 %v1941
    %v1943 = vpop.xlane.xlu0 %1942
    %v1944 = vsel %vm654, %v1758, -inf
    %1945 = vmax.xlane.f32.xlu0 %v1944
    %v1946 = vpop.xlane.xlu0 %1945
    %v1947 = vsel %vm654, %v1840, -inf
    %1948 = vmax.xlane.f32.xlu0 %v1947
    %v1949 = vpop.xlane.xlu0 %1948
    %v1950 = vsel %vm654, %v1845, -inf
    %1951 = vmax.xlane.f32.xlu0 %v1950
    %v1952 = vpop.xlane.xlu0 %1951
    %v1953 = vsel %vm654, %v1927, -inf
    %1954 = vmax.xlane.f32.xlu0 %v1953
    %v1955 = vpop.xlane.xlu0 %1954
    %v1956 = vsel %vm654, %v1932, -inf
    %1957 = vmax.xlane.f32.xlu0 %v1956
    %v1958 = vpop.xlane.xlu0 %1957
    %v1959 = vsub.f32 %v1666, %v1937
    %v1960 = vsub.f32 %v1671, %v1940
    %v1961 = vsub.f32 %v1753, %v1943
    %v1962 = vsub.f32 %v1758, %v1946
    %v1963 = vsub.f32 %v1840, %v1949
    %v1964 = vsub.f32 %v1845, %v1952
    %v1965 = vsub.f32 %v1927, %v1955
    %v1966 = vsub.f32 %v1932, %v1958
    %v1967 = vmul.f32 %v1959, 1.442695
    %v1968 = vpow.pop %v1967
    %v1969 = vmul.f32 %v1960, 1.442695
    %v1970 = vpow.pop %v1969
    %v1971 = vmul.f32 %v1961, 1.442695
    %v1972 = vpow.pop %v1971
    %v1973 = vmul.f32 %v1962, 1.442695
    %v1974 = vpow.pop %v1973
    %v1975 = vmul.f32 %v1963, 1.442695
    %v1976 = vpow.pop %v1975
    %v1977 = vmul.f32 %v1964, 1.442695
    %v1978 = vpow.pop %v1977
    %v1979 = vmul.f32 %v1965, 1.442695
    %v1980 = vpow.pop %v1979
    %v1981 = vmul.f32 %v1966, 1.442695
    %v1982 = vpow.pop %v1981
    %v1983 = vsel %vm654, %v1968, 0.0
    %1984 = vadd.xlane.f32.xlu0 %v1983
    %v1985 = vpop.xlane.xlu0 %1984
    %v1986 = vsel %vm654, %v1970, 0.0
    %1987 = vadd.xlane.f32.xlu0 %v1986
    %v1988 = vpop.xlane.xlu0 %1987
    %v1989 = vsel %vm654, %v1972, 0.0
    %1990 = vadd.xlane.f32.xlu0 %v1989
    %v1991 = vpop.xlane.xlu0 %1990
    %v1992 = vsel %vm654, %v1974, 0.0
    %1993 = vadd.xlane.f32.xlu0 %v1992
    %v1994 = vpop.xlane.xlu0 %1993
    %v1995 = vsel %vm654, %v1976, 0.0
    %1996 = vadd.xlane.f32.xlu0 %v1995
    %v1997 = vpop.xlane.xlu0 %1996
    %v1998 = vsel %vm654, %v1978, 0.0
    %1999 = vadd.xlane.f32.xlu0 %v1998
    %v2000 = vpop.xlane.xlu0 %1999
    %v2001 = vsel %vm654, %v1980, 0.0
    %2002 = vadd.xlane.f32.xlu0 %v2001
    %v2003 = vpop.xlane.xlu0 %2002
    %v2004 = vsel %vm654, %v1982, 0.0
    %2005 = vadd.xlane.f32.xlu0 %v2004
    %v2006 = vpop.xlane.xlu0 %2005
    %v2007 = vrcp.pop %v1985
    %v2008 = vrcp.pop %v1988
    %v2009 = vrcp.pop %v1991
    %v2010 = vrcp.pop %v1994
    %v2011 = vrcp.pop %v1997
    %v2012 = vrcp.pop %v2000
    %v2013 = vrcp.pop %v2003
    %v2014 = vrcp.pop %v2006
    %v2015 = vmul.f32 %v1968, %v2007
    %v2016 = vmul.f32 %v1970, %v2008
    %v2017 = vmul.f32 %v1972, %v2009
    %v2018 = vmul.f32 %v1974, %v2010
    %v2019 = vmul.f32 %v1976, %v2011
    %v2020 = vmul.f32 %v1978, %v2012
    %v2021 = vmul.f32 %v1980, %v2013
    %v2022 = vmul.f32 %v1982, %v2014
    %2023 = vrot.lane.b32.xlu0 %v1565, 64
    %v2024 = vpop.permute.xlu0 %2023
    %2025 = vrot.lane.b32.xlu0 %v1570, 64
    %v2026 = vpop.permute.xlu0 %2025
    %v2030 = vsel %vm654, %v2015, 0
    %v2033 = vsel %vm654, %v2016, 0
    %2035 = vmatprep.subr.mxu0 0.0
    %2036 = vmatpush1.msra.mxu0 %v2024
    %2037 = vmatprep.subr.mxu0 0.0
    %2038 = vmatpush1.msra.mxu0 %v2026
    %2039 = vmatprep.subr.mxu0 0.0
    %2040 = vmatpush1.msra.mxu0 0.0
    %2041 = vmatprep.subr.mxu0 0.0
    %2042 = vmatpush1.msra.mxu0 0.0
    %2043 = vmatprep.subr.mxu0 0.0
    %2044 = vmatpush1.msra.mxu0 0.0
    %2045 = vmatprep.subr.mxu0 0.0
    %2046 = vmatpush1.msra.mxu0 0.0
    %2047 = vmatprep.subr.mxu0 0.0
    %2048 = vmatpush1.msra.mxu0 0.0
    %2049 = vmatprep.subr.mxu0 0.0
    %2050 = vmatpush1.msra.mxu0 0.0
    %2051 = vmatprep.subr.mxu0 0.0
    %2052 = vmatpush1.msra.mxu0 0.0
    %2053 = vmatprep.subr.mxu0 0.0
    %2054 = vmatpush1.msra.mxu0 0.0
    %2055 = vmatprep.subr.mxu0 0.0
    %2056 = vmatpush1.msra.mxu0 0.0
    %2057 = vmatprep.subr.mxu0 0.0
    %2058 = vmatpush1.msra.mxu0 0.0
    %2059 = vmatprep.subr.mxu0 0.0
    %2060 = vmatpush1.msra.mxu0 0.0
    %2061 = vmatprep.subr.mxu0 0.0
    %2062 = vmatpush1.msra.mxu0 0.0
    %2063 = vmatprep.subr.mxu0 0.0
    %2064 = vmatpush1.msra.mxu0 0.0
    %2065 = vmatprep.subr.mxu0 0.0
    %2066 = vmatpush1.msra.mxu0 0.0
    %2067 = vmatprep.subr.mxu0 0.0
    %2068 = vmatpush1.msra.mxu0 0.0
    %2069 = vmatprep.subr.mxu0 0.0
    %2070 = vmatpush1.msra.mxu0 0.0
    %2071 = vmatprep.subr.mxu0 0.0
    %2072 = vmatpush1.msra.mxu0 0.0
    %2073 = vmatprep.subr.mxu0 0.0
    %2074 = vmatpush1.msra.mxu0 0.0
    %2075 = vmatprep.subr.mxu0 0.0
    %2076 = vmatpush1.msra.mxu0 0.0
    %2077 = vmatprep.subr.mxu0 0.0
    %2078 = vmatpush1.msra.mxu0 0.0
    %2079 = vmatprep.subr.mxu0 0.0
    %2080 = vmatpush1.msra.mxu0 0.0
    %2081 = vmatprep.subr.mxu0 0.0
    %2082 = vmatpush1.msra.mxu0 0.0
    %2083 = vmatprep.subr.mxu0 0.0
    %2084 = vmatpush1.msra.mxu0 0.0
    %2085 = vmatprep.subr.mxu0 0.0
    %2086 = vmatpush1.msra.mxu0 0.0
    %2087 = vmatprep.subr.mxu0 0.0
    %2088 = vmatpush1.msra.mxu0 0.0
    %2089 = vmatprep.subr.mxu0 0.0
    %2090 = vmatpush1.msra.mxu0 0.0
    %2091 = vmatprep.subr.mxu0 0.0
    %2092 = vmatpush1.msra.mxu0 0.0
    %2093 = vmatprep.subr.mxu0 0.0
    %2094 = vmatpush1.msra.mxu0 0.0
    %2095 = vmatprep.subr.mxu0 0.0
    %2096 = vmatpush1.msra.mxu0 0.0
    %2097 = vmatprep.subr.mxu0 0.0
    %2098 = vmatpush1.msra.mxu0 0.0
    %2099 = vmatprep.mubr.f32.mxu0 0.0
    %2100 = vmatmul.mubr.f32.gmra.mrb[0].mxu0 %v2030
    %v2101 = vpop.f32.mrb[0].mxu0
    %v2102 = vadd.f32 0.0, %v2101
    %v2103 = vpop.f32.mrb[0].mxu0
    %2104 = vmatprep.mubr.f32.mxu0 0.0
    %2105 = vmatmul.mubr.f32.gmra.mrb[0].mxu0 %v2033
    %v2106 = vpop.f32.mrb[0].mxu0
    %v2107 = vadd.f32 0.0, %v2106
    %v2108 = vpop.f32.mrb[0].mxu0
    %2109 = vdwg.mxu0
    %2110 = vrot.lane.b32.xlu0 %v1576, 64
    %v2111 = vpop.permute.xlu0 %2110
    %2112 = vrot.lane.b32.xlu0 %v1578, 64
    %v2113 = vpop.permute.xlu0 %2112
    %v2117 = vsel %vm654, %v2017, 0
    %v2120 = vsel %vm654, %v2018, 0
    %2122 = vmatprep.subr.mxu0 0.0
    %2123 = vmatpush1.msra.mxu0 %v2111
    %2124 = vmatprep.subr.mxu0 0.0
    %2125 = vmatpush1.msra.mxu0 %v2113
    %2126 = vmatprep.subr.mxu0 0.0
    %2127 = vmatpush1.msra.mxu0 0.0
    %2128 = vmatprep.subr.mxu0 0.0
    %2129 = vmatpush1.msra.mxu0 0.0
    %2130 = vmatprep.subr.mxu0 0.0
    %2131 = vmatpush1.msra.mxu0 0.0
    %2132 = vmatprep.subr.mxu0 0.0
    %2133 = vmatpush1.msra.mxu0 0.0
    %2134 = vmatprep.subr.mxu0 0.0
    %2135 = vmatpush1.msra.mxu0 0.0
    %2136 = vmatprep.subr.mxu0 0.0
    %2137 = vmatpush1.msra.mxu0 0.0
    %2138 = vmatprep.subr.mxu0 0.0
    %2139 = vmatpush1.msra.mxu0 0.0
    %2140 = vmatprep.subr.mxu0 0.0
    %2141 = vmatpush1.msra.mxu0 0.0
    %2142 = vmatprep.subr.mxu0 0.0
    %2143 = vmatpush1.msra.mxu0 0.0
    %2144 = vmatprep.subr.mxu0 0.0
    %2145 = vmatpush1.msra.mxu0 0.0
    %2146 = vmatprep.subr.mxu0 0.0
    %2147 = vmatpush1.msra.mxu0 0.0
    %2148 = vmatprep.subr.mxu0 0.0
    %2149 = vmatpush1.msra.mxu0 0.0
    %2150 = vmatprep.subr.mxu0 0.0
    %2151 = vmatpush1.msra.mxu0 0.0
    %2152 = vmatprep.subr.mxu0 0.0
    %2153 = vmatpush1.msra.mxu0 0.0
    %2154 = vmatprep.subr.mxu0 0.0
    %2155 = vmatpush1.msra.mxu0 0.0
    %2156 = vmatprep.subr.mxu0 0.0
    %2157 = vmatpush1.msra.mxu0 0.0
    %2158 = vmatprep.subr.mxu0 0.0
    %2159 = vmatpush1.msra.mxu0 0.0
    %2160 = vmatprep.subr.mxu0 0.0
    %2161 = vmatpush1.msra.mxu0 0.0
    %2162 = vmatprep.subr.mxu0 0.0
    %2163 = vmatpush1.msra.mxu0 0.0
    %2164 = vmatprep.subr.mxu0 0.0
    %2165 = vmatpush1.msra.mxu0 0.0
    %2166 = vmatprep.subr.mxu0 0.0
    %2167 = vmatpush1.msra.mxu0 0.0
    %2168 = vmatprep.subr.mxu0 0.0
    %2169 = vmatpush1.msra.mxu0 0.0
    %2170 = vmatprep.subr.mxu0 0.0
    %2171 = vmatpush1.msra.mxu0 0.0
    %2172 = vmatprep.subr.mxu0 0.0
    %2173 = vmatpush1.msra.mxu0 0.0
    %2174 = vmatprep.subr.mxu0 0.0
    %2175 = vmatpush1.msra.mxu0 0.0
    %2176 = vmatprep.subr.mxu0 0.0
    %2177 = vmatpush1.msra.mxu0 0.0
    %2178 = vmatprep.subr.mxu0 0.0
    %2179 = vmatpush1.msra.mxu0 0.0
    %2180 = vmatprep.subr.mxu0 0.0
    %2181 = vmatpush1.msra.mxu0 0.0
    %2182 = vmatprep.subr.mxu0 0.0
    %2183 = vmatpush1.msra.mxu0 0.0
    %2184 = vmatprep.subr.mxu0 0.0
    %2185 = vmatpush1.msra.mxu0 0.0
    %2186 = vmatprep.mubr.f32.mxu0 0.0
    %2187 = vmatmul.mubr.f32.gmra.mrb[0].mxu0 %v2117
    %v2188 = vpop.f32.mrb[0].mxu0
    %v2189 = vadd.f32 0.0, %v2188
    %v2190 = vpop.f32.mrb[0].mxu0
    %2191 = vmatprep.mubr.f32.mxu0 0.0
    %2192 = vmatmul.mubr.f32.gmra.mrb[0].mxu0 %v2120
    %v2193 = vpop.f32.mrb[0].mxu0
    %v2194 = vadd.f32 0.0, %v2193
    %v2195 = vpop.f32.mrb[0].mxu0
    %2196 = vdwg.mxu0
    %2197 = vrot.lane.b32.xlu0 %v1580, 64
    %v2198 = vpop.permute.xlu0 %2197
    %2199 = vrot.lane.b32.xlu0 %v1582, 64
    %v2200 = vpop.permute.xlu0 %2199
    %v2204 = vsel %vm654, %v2019, 0
    %v2207 = vsel %vm654, %v2020, 0
    %2209 = vmatprep.subr.mxu0 0.0
    %2210 = vmatpush1.msra.mxu0 %v2198
    %2211 = vmatprep.subr.mxu0 0.0
    %2212 = vmatpush1.msra.mxu0 %v2200
    %2213 = vmatprep.subr.mxu0 0.0
    %2214 = vmatpush1.msra.mxu0 0.0
    %2215 = vmatprep.subr.mxu0 0.0
    %2216 = vmatpush1.msra.mxu0 0.0
    %2217 = vmatprep.subr.mxu0 0.0
    %2218 = vmatpush1.msra.mxu0 0.0
    %2219 = vmatprep.subr.mxu0 0.0
    %2220 = vmatpush1.msra.mxu0 0.0
    %2221 = vmatprep.subr.mxu0 0.0
    %2222 = vmatpush1.msra.mxu0 0.0
    %2223 = vmatprep.subr.mxu0 0.0
    %2224 = vmatpush1.msra.mxu0 0.0
    %2225 = vmatprep.subr.mxu0 0.0
    %2226 = vmatpush1.msra.mxu0 0.0
    %2227 = vmatprep.subr.mxu0 0.0
    %2228 = vmatpush1.msra.mxu0 0.0
    %2229 = vmatprep.subr.mxu0 0.0
    %2230 = vmatpush1.msra.mxu0 0.0
    %2231 = vmatprep.subr.mxu0 0.0
    %2232 = vmatpush1.msra.mxu0 0.0
    %2233 = vmatprep.subr.mxu0 0.0
    %2234 = vmatpush1.msra.mxu0 0.0
    %2235 = vmatprep.subr.mxu0 0.0
    %2236 = vmatpush1.msra.mxu0 0.0
    %2237 = vmatprep.subr.mxu0 0.0
    %2238 = vmatpush1.msra.mxu0 0.0
    %2239 = vmatprep.subr.mxu0 0.0
    %2240 = vmatpush1.msra.mxu0 0.0
    %2241 = vmatprep.subr.mxu0 0.0
    %2242 = vmatpush1.msra.mxu0 0.0
    %2243 = vmatprep.subr.mxu0 0.0
    %2244 = vmatpush1.msra.mxu0 0.0
    %2245 = vmatprep.subr.mxu0 0.0
    %2246 = vmatpush1.msra.mxu0 0.0
    %2247 = vmatprep.subr.mxu0 0.0
    %2248 = vmatpush1.msra.mxu0 0.0
    %2249 = vmatprep.subr.mxu0 0.0
    %2250 = vmatpush1.msra.mxu0 0.0
    %2251 = vmatprep.subr.mxu0 0.0
    %2252 = vmatpush1.msra.mxu0 0.0
    %2253 = vmatprep.subr.mxu0 0.0
    %2254 = vmatpush1.msra.mxu0 0.0
    %2255 = vmatprep.subr.mxu0 0.0
    %2256 = vmatpush1.msra.mxu0 0.0
    %2257 = vmatprep.subr.mxu0 0.0
    %2258 = vmatpush1.msra.mxu0 0.0
    %2259 = vmatprep.subr.mxu0 0.0
    %2260 = vmatpush1.msra.mxu0 0.0
    %2261 = vmatprep.subr.mxu0 0.0
    %2262 = vmatpush1.msra.mxu0 0.0
    %2263 = vmatprep.subr.mxu0 0.0
    %2264 = vmatpush1.msra.mxu0 0.0
    %2265 = vmatprep.subr.mxu0 0.0
    %2266 = vmatpush1.msra.mxu0 0.0
    %2267 = vmatprep.subr.mxu0 0.0
    %2268 = vmatpush1.msra.mxu0 0.0
    %2269 = vmatprep.subr.mxu0 0.0
    %2270 = vmatpush1.msra.mxu0 0.0
    %2271 = vmatprep.subr.mxu0 0.0
    %2272 = vmatpush1.msra.mxu0 0.0
    %2273 = vmatprep.mubr.f32.mxu0 0.0
    %2274 = vmatmul.mubr.f32.gmra.mrb[0].mxu0 %v2204
    %v2275 = vpop.f32.mrb[0].mxu0
    %v2276 = vadd.f32 0.0, %v2275
    %v2277 = vpop.f32.mrb[0].mxu0
    %2278 = vmatprep.mubr.f32.mxu0 0.0
    %2279 = vmatmul.mubr.f32.gmra.mrb[0].mxu0 %v2207
    %v2280 = vpop.f32.mrb[0].mxu0
    %v2281 = vadd.f32 0.0, %v2280
    %v2282 = vpop.f32.mrb[0].mxu0
    %2283 = vdwg.mxu0
    %2284 = vrot.lane.b32.xlu0 %v1584, 64
    %v2285 = vpop.permute.xlu0 %2284
    %2286 = vrot.lane.b32.xlu0 %v1586, 64
    %v2287 = vpop.permute.xlu0 %2286
    %v2291 = vsel %vm654, %v2021, 0
    %v2294 = vsel %vm654, %v2022, 0
    %2296 = vmatprep.subr.mxu0 0.0
    %2297 = vmatpush1.msra.mxu0 %v2285
    %2298 = vmatprep.subr.mxu0 0.0
    %2299 = vmatpush1.msra.mxu0 %v2287
    %2300 = vmatprep.subr.mxu0 0.0
    %2301 = vmatpush1.msra.mxu0 0.0
    %2302 = vmatprep.subr.mxu0 0.0
    %2303 = vmatpush1.msra.mxu0 0.0
    %2304 = vmatprep.subr.mxu0 0.0
    %2305 = vmatpush1.msra.mxu0 0.0
    %2306 = vmatprep.subr.mxu0 0.0
    %2307 = vmatpush1.msra.mxu0 0.0
    %2308 = vmatprep.subr.mxu0 0.0
    %2309 = vmatpush1.msra.mxu0 0.0
    %2310 = vmatprep.subr.mxu0 0.0
    %2311 = vmatpush1.msra.mxu0 0.0
    %2312 = vmatprep.subr.mxu0 0.0
    %2313 = vmatpush1.msra.mxu0 0.0
    %2314 = vmatprep.subr.mxu0 0.0
    %2315 = vmatpush1.msra.mxu0 0.0
    %2316 = vmatprep.subr.mxu0 0.0
    %2317 = vmatpush1.msra.mxu0 0.0
    %2318 = vmatprep.subr.mxu0 0.0
    %2319 = vmatpush1.msra.mxu0 0.0
    %2320 = vmatprep.subr.mxu0 0.0
    %2321 = vmatpush1.msra.mxu0 0.0
    %2322 = vmatprep.subr.mxu0 0.0
    %2323 = vmatpush1.msra.mxu0 0.0
    %2324 = vmatprep.subr.mxu0 0.0
    %2325 = vmatpush1.msra.mxu0 0.0
    %2326 = vmatprep.subr.mxu0 0.0
    %2327 = vmatpush1.msra.mxu0 0.0
    %2328 = vmatprep.subr.mxu0 0.0
    %2329 = vmatpush1.msra.mxu0 0.0
    %2330 = vmatprep.subr.mxu0 0.0
    %2331 = vmatpush1.msra.mxu0 0.0
    %2332 = vmatprep.subr.mxu0 0.0
    %2333 = vmatpush1.msra.mxu0 0.0
    %2334 = vmatprep.subr.mxu0 0.0
    %2335 = vmatpush1.msra.mxu0 0.0
    %2336 = vmatprep.subr.mxu0 0.0
    %2337 = vmatpush1.msra.mxu0 0.0
    %2338 = vmatprep.subr.mxu0 0.0
    %2339 = vmatpush1.msra.mxu0 0.0
    %2340 = vmatprep.subr.mxu0 0.0
    %2341 = vmatpush1.msra.mxu0 0.0
    %2342 = vmatprep.subr.mxu0 0.0
    %2343 = vmatpush1.msra.mxu0 0.0
    %2344 = vmatprep.subr.mxu0 0.0
    %2345 = vmatpush1.msra.mxu0 0.0
    %2346 = vmatprep.subr.mxu0 0.0
    %2347 = vmatpush1.msra.mxu0 0.0
    %2348 = vmatprep.subr.mxu0 0.0
    %2349 = vmatpush1.msra.mxu0 0.0
    %2350 = vmatprep.subr.mxu0 0.0
    %2351 = vmatpush1.msra.mxu0 0.0
    %2352 = vmatprep.subr.mxu0 0.0
    %2353 = vmatpush1.msra.mxu0 0.0
    %2354 = vmatprep.subr.mxu0 0.0
    %2355 = vmatpush1.msra.mxu0 0.0
    %2356 = vmatprep.subr.mxu0 0.0
    %2357 = vmatpush1.msra.mxu0 0.0
    %2358 = vmatprep.subr.mxu0 0.0
    %2359 = vmatpush1.msra.mxu0 0.0
    %2360 = vmatprep.mubr.f32.mxu0 0.0
    %2361 = vmatmul.mubr.f32.gmra.mrb[0].mxu0 %v2291
    %v2362 = vpop.f32.mrb[0].mxu0
    %v2363 = vadd.f32 0.0, %v2362
    %v2364 = vpop.f32.mrb[0].mxu0
    %2365 = vmatprep.mubr.f32.mxu0 0.0
    %2366 = vmatmul.mubr.f32.gmra.mrb[0].mxu0 %v2294
    %v2367 = vpop.f32.mrb[0].mxu0
    %v2368 = vadd.f32 0.0, %v2367
    %v2369 = vpop.f32.mrb[0].mxu0
    %2370 = vdwg.mxu0
    %2373 = vrot.lane.b32.xlu0 %v2189, 8
    %v2374 = vpop.permute.xlu0 %2373
    %2375 = vrot.lane.b32.xlu0 %v2194, 8
    %v2376 = vpop.permute.xlu0 %2375
    %2381 = vrot.lane.b32.xlu0 %v2276, 16
    %v2382 = vpop.permute.xlu0 %2381
    %2383 = vrot.lane.b32.xlu0 %v2281, 16
    %v2384 = vpop.permute.xlu0 %2383
    %2389 = vrot.lane.b32.xlu0 %v2363, 24
    %v2390 = vpop.permute.xlu0 %2389
    %2391 = vrot.lane.b32.xlu0 %v2368, 24
    %v2392 = vpop.permute.xlu0 %2391
    %v2395 = vsel %vm309, %v2102, %v2374
    %v2396 = vsel %vm309, %v2107, %v2376
    %v2397 = vsel %vm654, %v2395, %v2382
    %v2398 = vsel %vm654, %v2396, %v2384
    %v2399 = vsel %vm1119, %v2397, %v2390
    %v2400 = vsel %vm1119, %v2398, %v2392
    %v2402 = vsel %vm170, %v2399, 0
    %v2405 = vsel %vm170, %v2400, 0
    %2407 = vmatprep.subr.mxu0 0.0
    %2408 = vmatpush1.msra.mxu0 %v1421
    %2409 = vmatprep.subr.mxu0 0.0
    %2410 = vmatpush1.msra.mxu0 %v1422
    %2411 = vmatprep.subr.mxu0 0.0
    %2412 = vmatpush1.msra.mxu0 %v1423
    %2413 = vmatprep.subr.mxu0 0.0
    %2414 = vmatpush1.msra.mxu0 %v1424
    %2415 = vmatprep.subr.mxu0 0.0
    %2416 = vmatpush1.msra.mxu0 0.0
    %2417 = vmatprep.subr.mxu0 0.0
    %2418 = vmatpush1.msra.mxu0 0.0
    %2419 = vmatprep.subr.mxu0 0.0
    %2420 = vmatpush1.msra.mxu0 0.0
    %2421 = vmatprep.subr.mxu0 0.0
    %2422 = vmatpush1.msra.mxu0 0.0
    %2423 = vmatprep.subr.mxu0 0.0
    %2424 = vmatpush1.msra.mxu0 0.0
    %2425 = vmatprep.subr.mxu0 0.0
    %2426 = vmatpush1.msra.mxu0 0.0
    %2427 = vmatprep.subr.mxu0 0.0
    %2428 = vmatpush1.msra.mxu0 0.0
    %2429 = vmatprep.subr.mxu0 0.0
    %2430 = vmatpush1.msra.mxu0 0.0
    %2431 = vmatprep.subr.mxu0 0.0
    %2432 = vmatpush1.msra.mxu0 0.0
    %2433 = vmatprep.subr.mxu0 0.0
    %2434 = vmatpush1.msra.mxu0 0.0
    %2435 = vmatprep.subr.mxu0 0.0
    %2436 = vmatpush1.msra.mxu0 0.0
    %2437 = vmatprep.subr.mxu0 0.0
    %2438 = vmatpush1.msra.mxu0 0.0
    %2439 = vmatprep.subr.mxu0 0.0
    %2440 = vmatpush1.msra.mxu0 0.0
    %2441 = vmatprep.subr.mxu0 0.0
    %2442 = vmatpush1.msra.mxu0 0.0
    %2443 = vmatprep.subr.mxu0 0.0
    %2444 = vmatpush1.msra.mxu0 0.0
    %2445 = vmatprep.subr.mxu0 0.0
    %2446 = vmatpush1.msra.mxu0 0.0
    %2447 = vmatprep.subr.mxu0 0.0
    %2448 = vmatpush1.msra.mxu0 0.0
    %2449 = vmatprep.subr.mxu0 0.0
    %2450 = vmatpush1.msra.mxu0 0.0
    %2451 = vmatprep.subr.mxu0 0.0
    %2452 = vmatpush1.msra.mxu0 0.0
    %2453 = vmatprep.subr.mxu0 0.0
    %2454 = vmatpush1.msra.mxu0 0.0
    %2455 = vmatprep.subr.mxu0 0.0
    %2456 = vmatpush1.msra.mxu0 0.0
    %2457 = vmatprep.subr.mxu0 0.0
    %2458 = vmatpush1.msra.mxu0 0.0
    %2459 = vmatprep.subr.mxu0 0.0
    %2460 = vmatpush1.msra.mxu0 0.0
    %2461 = vmatprep.subr.mxu0 0.0
    %2462 = vmatpush1.msra.mxu0 0.0
    %2463 = vmatprep.subr.mxu0 0.0
    %2464 = vmatpush1.msra.mxu0 0.0
    %2465 = vmatprep.subr.mxu0 0.0
    %2466 = vmatpush1.msra.mxu0 0.0
    %2467 = vmatprep.subr.mxu0 0.0
    %2468 = vmatpush1.msra.mxu0 0.0
    %2469 = vmatprep.subr.mxu0 0.0
    %2470 = vmatpush1.msra.mxu0 0.0
    %2471 = vmatprep.mubr.f32.mxu0 0.0
    %2472 = vmatmul.mubr.f32.gmra.mrb[0].mxu0 %v2402
    %v2473 = vpop.f32.mrb[0].mxu0
    %v2474 = vadd.f32 0.0, %v2473
    %v2475 = vpop.f32.mrb[0].mxu0
    %2476 = vmatprep.mubr.f32.mxu0 0.0
    %2477 = vmatmul.mubr.f32.gmra.mrb[0].mxu0 %v2405
    %v2478 = vpop.f32.mrb[0].mxu0
    %v2479 = vadd.f32 0.0, %v2478
    %v2480 = vpop.f32.mrb[0].mxu0
    %2481 = vdwg.mxu0
    %v2482 = vadd.f32 %v1417, %v2474
    %v2483 = vadd.f32 %v1418, %v2479
    %v2484 = vlaneseq
    %v2485 = vshrl.u32 %v2484, 7
    %v2486 = vsub.s32 0, %v2485
    %v2487 = vrot.slane %v1425, %v2486
    %v2488 = vadd.f32 %v2482, %v2487
    %v2489 = vadd.f32 %v2483, %v2487
    %v2490 = vsel %vm170, %v2488, 0.0
    %2491 = vadd.xlane.f32.xlu0 %v2490
    %v2492 = vpop.xlane.xlu0 %2491
    %v2493 = vsel %vm170, %v2489, 0.0
    %2494 = vadd.xlane.f32.xlu0 %v2493
    %v2495 = vpop.xlane.xlu0 %2494
    %v2496 = vmul.f32 %v2492, %v177
    %v2497 = vmul.f32 %v2495, %v177
    %v2498 = vsub.f32 %v2488, %v2496
    %v2499 = vsub.f32 %v2489, %v2497
    %v2500 = vmul.f32 %v2498, %v2498
    %v2501 = vmul.f32 %v2499, %v2499
    %v2502 = vsel %vm170, %v2500, 0.0
    %2503 = vadd.xlane.f32.xlu0 %v2502
    %v2504 = vpop.xlane.xlu0 %2503
    %v2505 = vsel %vm170, %v2501, 0.0
    %2506 = vadd.xlane.f32.xlu0 %v2505
    %v2507 = vpop.xlane.xlu0 %2506
    %v2508 = vmul.f32 %v2504, %v177
    %v2509 = vmul.f32 %v2507, %v177
    %v2510 = vadd.f32 %v2508, 1e-05
    %v2511 = vadd.f32 %v2509, 1e-05
    %v2512 = vrsqrt.pop %v2510
    %v2513 = vrsqrt.pop %v2511
    %v2514 = vmul.f32 %v2498, %v2512
    %v2515 = vmul.f32 %v2499, %v2513
    %v2516 = vlaneseq
    %v2517 = vshrl.u32 %v2516, 7
    %v2518 = vsub.s32 0, %v2517
    %v2519 = vrot.slane %v1426, %v2518
    %v2520 = vmul.f32 %v2514, %v2519
    %v2521 = vmul.f32 %v2515, %v2519
    %v2522 = vlaneseq
    %v2523 = vshrl.u32 %v2522, 7
    %v2524 = vsub.s32 0, %v2523
    %v2525 = vrot.slane %v1427, %v2524
    %v2526 = vadd.f32 %v2520, %v2525
    %v2527 = vadd.f32 %v2521, %v2525
    %v2528 = vlaneseq
    %v2529 = vshrl.u32 %v2528, 7
    %v2530 = vsub.s32 0, %v2529
    %v2531 = vrot.slane %v1453, %v2530
    %v2533 = vsel %vm170, %v2526, 0
    %v2536 = vsel %vm170, %v2527, 0
    %2538 = vmatprep.subr.mxu0 0.0
    %2539 = vmatpush1.msra.mxu0 %v1449
    %2540 = vmatprep.subr.mxu0 0.0
    %2541 = vmatpush1.msra.mxu0 %v1450
    %2542 = vmatprep.subr.mxu0 0.0
    %2543 = vmatpush1.msra.mxu0 %v1451
    %2544 = vmatprep.subr.mxu0 0.0
    %2545 = vmatpush1.msra.mxu0 %v1452
    %2546 = vmatprep.subr.mxu0 0.0
    %2547 = vmatpush1.msra.mxu0 0.0
    %2548 = vmatprep.subr.mxu0 0.0
    %2549 = vmatpush1.msra.mxu0 0.0
    %2550 = vmatprep.subr.mxu0 0.0
    %2551 = vmatpush1.msra.mxu0 0.0
    %2552 = vmatprep.subr.mxu0 0.0
    %2553 = vmatpush1.msra.mxu0 0.0
    %2554 = vmatprep.subr.mxu0 0.0
    %2555 = vmatpush1.msra.mxu0 0.0
    %2556 = vmatprep.subr.mxu0 0.0
    %2557 = vmatpush1.msra.mxu0 0.0
    %2558 = vmatprep.subr.mxu0 0.0
    %2559 = vmatpush1.msra.mxu0 0.0
    %2560 = vmatprep.subr.mxu0 0.0
    %2561 = vmatpush1.msra.mxu0 0.0
    %2562 = vmatprep.subr.mxu0 0.0
    %2563 = vmatpush1.msra.mxu0 0.0
    %2564 = vmatprep.subr.mxu0 0.0
    %2565 = vmatpush1.msra.mxu0 0.0
    %2566 = vmatprep.subr.mxu0 0.0
    %2567 = vmatpush1.msra.mxu0 0.0
    %2568 = vmatprep.subr.mxu0 0.0
    %2569 = vmatpush1.msra.mxu0 0.0
    %2570 = vmatprep.subr.mxu0 0.0
    %2571 = vmatpush1.msra.mxu0 0.0
    %2572 = vmatprep.subr.mxu0 0.0
    %2573 = vmatpush1.msra.mxu0 0.0
    %2574 = vmatprep.subr.mxu0 0.0
    %2575 = vmatpush1.msra.mxu0 0.0
    %2576 = vmatprep.subr.mxu0 0.0
    %2577 = vmatpush1.msra.mxu0 0.0
    %2578 = vmatprep.subr.mxu0 0.0
    %2579 = vmatpush1.msra.mxu0 0.0
    %2580 = vmatprep.subr.mxu0 0.0
    %2581 = vmatpush1.msra.mxu0 0.0
    %2582 = vmatprep.subr.mxu0 0.0
    %2583 = vmatpush1.msra.mxu0 0.0
    %2584 = vmatprep.subr.mxu0 0.0
    %2585 = vmatpush1.msra.mxu0 0.0
    %2586 = vmatprep.subr.mxu0 0.0
    %2587 = vmatpush1.msra.mxu0 0.0
    %2588 = vmatprep.subr.mxu0 0.0
    %2589 = vmatpush1.msra.mxu0 0.0
    %2590 = vmatprep.subr.mxu0 0.0
    %2591 = vmatpush1.msra.mxu0 0.0
    %2592 = vmatprep.subr.mxu0 0.0
    %2593 = vmatpush1.msra.mxu0 0.0
    %2594 = vmatprep.subr.mxu0 0.0
    %2595 = vmatpush1.msra.mxu0 0.0
    %2596 = vmatprep.subr.mxu0 0.0
    %2597 = vmatpush1.msra.mxu0 0.0
    %2598 = vmatprep.subr.mxu0 0.0
    %2599 = vmatpush1.msra.mxu0 0.0
    %2600 = vmatprep.subr.mxu0 0.0
    %2601 = vmatpush1.msra.mxu0 0.0
    %2602 = vmatprep.mubr.f32.mxu0 0.0
    %2603 = vmatmul.mubr.f32.gmra.mrb[0].mxu0 %v2533
    %v2604 = vpop.f32.mrb[0].mxu0
    %v2605 = vadd.f32 %v2531, %v2604
    %v2606 = vpop.f32.mrb[0].mxu0
    %2607 = vmatprep.mubr.f32.mxu0 0.0
    %2608 = vmatmul.mubr.f32.gmra.mrb[0].mxu0 %v2536
    %v2609 = vpop.f32.mrb[0].mxu0
    %v2610 = vadd.f32 %v2531, %v2609
    %v2611 = vpop.f32.mrb[0].mxu0
    %2612 = vdwg.mxu0
    %v2613 = vmax.f32 %v2605, 0.0
    %v2614 = vmax.f32 %v2610, 0.0
    %2615 = vmatprep.subr.mxu0 0.0
    %2616 = vmatpush1.msra.mxu0 %v1428
    %2617 = vmatprep.subr.mxu0 0.0
    %2618 = vmatpush1.msra.mxu0 %v1429
    %2619 = vmatprep.subr.mxu0 0.0
    %2620 = vmatpush1.msra.mxu0 %v1430
    %2621 = vmatprep.subr.mxu0 0.0
    %2622 = vmatpush1.msra.mxu0 %v1431
    %2623 = vmatprep.subr.mxu0 0.0
    %2624 = vmatpush1.msra.mxu0 %v1432
    %2625 = vmatprep.subr.mxu0 0.0
    %2626 = vmatpush1.msra.mxu0 %v1433
    %2627 = vmatprep.subr.mxu0 0.0
    %2628 = vmatpush1.msra.mxu0 %v1434
    %2629 = vmatprep.subr.mxu0 0.0
    %2630 = vmatpush1.msra.mxu0 %v1435
    %2631 = vmatprep.subr.mxu0 0.0
    %2632 = vmatpush1.msra.mxu0 %v1436
    %2633 = vmatprep.subr.mxu0 0.0
    %2634 = vmatpush1.msra.mxu0 %v1437
    %2635 = vmatprep.subr.mxu0 0.0
    %2636 = vmatpush1.msra.mxu0 %v1438
    %2637 = vmatprep.subr.mxu0 0.0
    %2638 = vmatpush1.msra.mxu0 %v1439
    %2639 = vmatprep.subr.mxu0 0.0
    %2640 = vmatpush1.msra.mxu0 %v1440
    %2641 = vmatprep.subr.mxu0 0.0
    %2642 = vmatpush1.msra.mxu0 %v1441
    %2643 = vmatprep.subr.mxu0 0.0
    %2644 = vmatpush1.msra.mxu0 %v1442
    %2645 = vmatprep.subr.mxu0 0.0
    %2646 = vmatpush1.msra.mxu0 %v1443
    %2647 = vmatprep.subr.mxu0 0.0
    %2648 = vmatpush1.msra.mxu0 0.0
    %2649 = vmatprep.subr.mxu0 0.0
    %2650 = vmatpush1.msra.mxu0 0.0
    %2651 = vmatprep.subr.mxu0 0.0
    %2652 = vmatpush1.msra.mxu0 0.0
    %2653 = vmatprep.subr.mxu0 0.0
    %2654 = vmatpush1.msra.mxu0 0.0
    %2655 = vmatprep.subr.mxu0 0.0
    %2656 = vmatpush1.msra.mxu0 0.0
    %2657 = vmatprep.subr.mxu0 0.0
    %2658 = vmatpush1.msra.mxu0 0.0
    %2659 = vmatprep.subr.mxu0 0.0
    %2660 = vmatpush1.msra.mxu0 0.0
    %2661 = vmatprep.subr.mxu0 0.0
    %2662 = vmatpush1.msra.mxu0 0.0
    %2663 = vmatprep.subr.mxu0 0.0
    %2664 = vmatpush1.msra.mxu0 0.0
    %2665 = vmatprep.subr.mxu0 0.0
    %2666 = vmatpush1.msra.mxu0 0.0
    %2667 = vmatprep.subr.mxu0 0.0
    %2668 = vmatpush1.msra.mxu0 0.0
    %2669 = vmatprep.subr.mxu0 0.0
    %2670 = vmatpush1.msra.mxu0 0.0
    %2671 = vmatprep.subr.mxu0 0.0
    %2672 = vmatpush1.msra.mxu0 0.0
    %2673 = vmatprep.subr.mxu0 0.0
    %2674 = vmatpush1.msra.mxu0 0.0
    %2675 = vmatprep.subr.mxu0 0.0
    %2676 = vmatpush1.msra.mxu0 0.0
    %2677 = vmatprep.subr.mxu0 0.0
    %2678 = vmatpush1.msra.mxu0 0.0
    %2679 = vmatprep.mubr.f32.mxu0 0.0
    %2680 = vmatmul.mubr.f32.gmra.mrb[0].mxu0 %v2613
    %v2681 = vpop.f32.mrb[0].mxu0
    %v2682 = vadd.f32 0.0, %v2681
    %v2683 = vpop.f32.mrb[0].mxu0
    %2684 = vmatprep.mubr.f32.mxu0 0.0
    %2685 = vmatmul.mubr.f32.gmra.mrb[0].mxu0 %v2614
    %v2686 = vpop.f32.mrb[0].mxu0
    %v2687 = vadd.f32 0.0, %v2686
    %v2688 = vpop.f32.mrb[0].mxu0
    %2689 = vdwg.mxu0
    %v2690 = vadd.f32 %v2488, %v2682
    %v2691 = vadd.f32 %v2489, %v2687
    %v2692 = vlaneseq
    %v2693 = vshrl.u32 %v2692, 7
    %v2694 = vsub.s32 0, %v2693
    %v2695 = vrot.slane %v1444, %v2694
    %v2696 = vadd.f32 %v2690, %v2695
    %v2697 = vadd.f32 %v2691, %v2695
    %v2698 = vld [vmem:[%s1 + $0x1dc] sm:$0x1]
    %v2699 = vld [vmem:[%s1 + $0x1dd] sm:$0x1]
    %v2700 = vld [vmem:[%s2 + $0x82] sm:$0xff]
    %v2701 = vld [vmem:[%s2 + $0x8a] sm:$0xff]
    %v2702 = vld [vmem:[%s2 + $0x92] sm:$0xff]
    %v2703 = vld [vmem:[%s2 + $0x9a] sm:$0xff]
    %v2704 = vld [vmem:[%s2 + $0xa2] sm:$0x1]
    %v2705 = vsel %vm170, %v2696, 0.0
    %2706 = vadd.xlane.f32.xlu0 %v2705
    %v2707 = vpop.xlane.xlu0 %2706
    %v2708 = vsel %vm170, %v2697, 0.0
    %2709 = vadd.xlane.f32.xlu0 %v2708
    %v2710 = vpop.xlane.xlu0 %2709
    %v2711 = vmul.f32 %v2707, %v177
    %v2712 = vmul.f32 %v2710, %v177
    %v2713 = vsub.f32 %v2696, %v2711
    %v2714 = vsub.f32 %v2697, %v2712
    %v2715 = vmul.f32 %v2713, %v2713
    %v2716 = vmul.f32 %v2714, %v2714
    %v2717 = vsel %vm170, %v2715, 0.0
    %2718 = vadd.xlane.f32.xlu0 %v2717
    %v2719 = vpop.xlane.xlu0 %2718
    %v2720 = vsel %vm170, %v2716, 0.0
    %2721 = vadd.xlane.f32.xlu0 %v2720
    %v2722 = vpop.xlane.xlu0 %2721
    %v2723 = vmul.f32 %v2719, %v177
    %v2724 = vmul.f32 %v2722, %v177
    %v2725 = vadd.f32 %v2723, 1e-05
    %v2726 = vadd.f32 %v2724, 1e-05
    %v2727 = vrsqrt.pop %v2725
    %v2728 = vrsqrt.pop %v2726
    %v2729 = vmul.f32 %v2713, %v2727
    %v2730 = vmul.f32 %v2714, %v2728
    %v2731 = vlaneseq
    %v2732 = vshrl.u32 %v2731, 7
    %v2733 = vsub.s32 0, %v2732
    %v2734 = vrot.slane %v2698, %v2733
    %v2735 = vmul.f32 %v2729, %v2734
    %v2736 = vmul.f32 %v2730, %v2734
    %v2737 = vlaneseq
    %v2738 = vshrl.u32 %v2737, 7
    %v2739 = vsub.s32 0, %v2738
    %v2740 = vrot.slane %v2699, %v2739
    %v2741 = vadd.f32 %v2735, %v2740
    %v2742 = vadd.f32 %v2736, %v2740
    %v2743 = vlaneseq
    %v2744 = vshrl.u32 %v2743, 7
    %v2745 = vsub.s32 0, %v2744
    %v2746 = vrot.slane %v2704, %v2745
    %v2748 = vsel %vm170, %v2741, 0
    %v2751 = vsel %vm170, %v2742, 0
    %2753 = vmatprep.subr.mxu0 0.0
    %2754 = vmatpush1.msra.mxu0 %v2700
    %2755 = vmatprep.subr.mxu0 0.0
    %2756 = vmatpush1.msra.mxu0 %v2701
    %2757 = vmatprep.subr.mxu0 0.0
    %2758 = vmatpush1.msra.mxu0 %v2702
    %2759 = vmatprep.subr.mxu0 0.0
    %2760 = vmatpush1.msra.mxu0 %v2703
    %2761 = vmatprep.subr.mxu0 0.0
    %2762 = vmatpush1.msra.mxu0 0.0
    %2763 = vmatprep.subr.mxu0 0.0
    %2764 = vmatpush1.msra.mxu0 0.0
    %2765 = vmatprep.subr.mxu0 0.0
    %2766 = vmatpush1.msra.mxu0 0.0
    %2767 = vmatprep.subr.mxu0 0.0
    %2768 = vmatpush1.msra.mxu0 0.0
    %2769 = vmatprep.subr.mxu0 0.0
    %2770 = vmatpush1.msra.mxu0 0.0
    %2771 = vmatprep.subr.mxu0 0.0
    %2772 = vmatpush1.msra.mxu0 0.0
    %2773 = vmatprep.subr.mxu0 0.0
    %2774 = vmatpush1.msra.mxu0 0.0
    %2775 = vmatprep.subr.mxu0 0.0
    %2776 = vmatpush1.msra.mxu0 0.0
    %2777 = vmatprep.subr.mxu0 0.0
    %2778 = vmatpush1.msra.mxu0 0.0
    %2779 = vmatprep.subr.mxu0 0.0
    %2780 = vmatpush1.msra.mxu0 0.0
    %2781 = vmatprep.subr.mxu0 0.0
    %2782 = vmatpush1.msra.mxu0 0.0
    %2783 = vmatprep.subr.mxu0 0.0
    %2784 = vmatpush1.msra.mxu0 0.0
    %2785 = vmatprep.subr.mxu0 0.0
    %2786 = vmatpush1.msra.mxu0 0.0
    %2787 = vmatprep.subr.mxu0 0.0
    %2788 = vmatpush1.msra.mxu0 0.0
    %2789 = vmatprep.subr.mxu0 0.0
    %2790 = vmatpush1.msra.mxu0 0.0
    %2791 = vmatprep.subr.mxu0 0.0
    %2792 = vmatpush1.msra.mxu0 0.0
    %2793 = vmatprep.subr.mxu0 0.0
    %2794 = vmatpush1.msra.mxu0 0.0
    %2795 = vmatprep.subr.mxu0 0.0
    %2796 = vmatpush1.msra.mxu0 0.0
    %2797 = vmatprep.subr.mxu0 0.0
    %2798 = vmatpush1.msra.mxu0 0.0
    %2799 = vmatprep.subr.mxu0 0.0
    %2800 = vmatpush1.msra.mxu0 0.0
    %2801 = vmatprep.subr.mxu0 0.0
    %2802 = vmatpush1.msra.mxu0 0.0
    %2803 = vmatprep.subr.mxu0 0.0
    %2804 = vmatpush1.msra.mxu0 0.0
    %2805 = vmatprep.subr.mxu0 0.0
    %2806 = vmatpush1.msra.mxu0 0.0
    %2807 = vmatprep.subr.mxu0 0.0
    %2808 = vmatpush1.msra.mxu0 0.0
    %2809 = vmatprep.subr.mxu0 0.0
    %2810 = vmatpush1.msra.mxu0 0.0
    %2811 = vmatprep.subr.mxu0 0.0
    %2812 = vmatpush1.msra.mxu0 0.0
    %2813 = vmatprep.subr.mxu0 0.0
    %2814 = vmatpush1.msra.mxu0 0.0
    %2815 = vmatprep.subr.mxu0 0.0
    %2816 = vmatpush1.msra.mxu0 0.0
    %2817 = vmatprep.mubr.f32.mxu0 0.0
    %2818 = vmatmul.mubr.f32.gmra.mrb[0].mxu0 %v2748
    %v2819 = vpop.f32.mrb[0].mxu0
    %v2820 = vadd.f32 %v2746, %v2819
    %v2821 = vpop.f32.mrb[0].mxu0
    %2822 = vmatprep.mubr.f32.mxu0 0.0
    %2823 = vmatmul.mubr.f32.gmra.mrb[0].mxu0 %v2751
    %v2824 = vpop.f32.mrb[0].mxu0
    %v2825 = vadd.f32 %v2746, %v2824
    %v2826 = vpop.f32.mrb[0].mxu0
    %2827 = vdwg.mxu0
    %2828 = vst [vmem:[#allocation2] sm:$0xff] %v2820
    %2829 = vst [vmem:[#allocation2 + $0x8] sm:$0xff] %v2825
    // Predicated region
    $region18: #{wml_text_one_forward.1} parent=1 // pred_check
      _
    $region19: #{wml_text_one_forward.1} parent=1 // pred_check_branch
      %2831 = sbr.rel (0) target = $region21
    $region20: #{wml_text_one_forward.1} parent=1 // pred_region
      %s2833 = ssub.s32 256, 256
      %2834 = vsyncadd [#allocation3], %s2833
      %s2835 = sshll.u32 [#allocation2], 4
      %s2836 = int_to_ptr.vmem [resolvable:$true] %s2835
      %2841 = dma.vmem_to_hbm [thread:$0]  %s2836, 256, %s4, [#allocation3], 128, 128, 8
    $region21: #{wml_text_one_forward.1} parent=1 // pred_fallthru
      _
    // Predicated region
    $region22: #{wml_text_one_forward.1} parent=1 // pred_check
      _
    $region23: #{wml_text_one_forward.1} parent=1 // pred_check_branch
      %2843 = sbr.rel (0) target = $region25
    $region24: #{wml_text_one_forward.1} parent=1 // pred_region
      %2844 = dma.done [#allocation3], 256
    $region25: #{wml_text_one_forward.1} parent=1 // pred_fallthru
      _
    %2845 = vsyncpa [#allocation3], 1

</llo_original>
